<compile_context>
chip_gen: v7x
topology: tpu7x:2x2x1
jax: 0.10.0
libtpu: 0.0.40
codegen_flags: <defaults>
</compile_context>

<pallas_src>
import numpy as np
import jax
import jax.numpy as jnp
from jax.experimental import pallas as pl
from jax.experimental.pallas import tpu as pltpu

NUM_CHANNELS = 4        # stands in for args.num_channels
OUTPUT_CHANNELS = 6     # decoder output_channels

_COUT_PAD = 8           # last-layer channel pad: 48 * 8 = 384 lanes (multiple of 128)
_BT = 8                 # batch tile (one sublane group), folded into matmul M


# ------------------------------ fused decoder kernel ------------------------------

def _decoder_kernel(x_ref, wf_ref, bf_ref,
                    w2_ref, b2_ref, w3_ref, b3_ref, w4_ref, b4_ref,
                    o_ref):
    f32 = jnp.float32
    bf16 = jnp.bfloat16
    bt = x_ref.shape[0]

    def deconv(a, h_in, w_ref, b_ref, relu):
        """a: (h_in*bt, Win*Cin) f32 slab, h-major / batch-minor.
        Returns (2*h_in*bt, Wout*Cout) slab in the same layout."""
        k = a.shape[1]
        # rows h (top taps) and rows h+1 (bottom taps); the shift by bt rows stays
        # inside each batch element, bottom edge is one zero block.
        x_top = a
        x_bot = jnp.concatenate([a[bt:], jnp.zeros((bt, k), f32)], axis=0)
        xt = x_top.astype(bf16)
        xb = x_bot.astype(bf16)
        b = b_ref[...]                                                    # (1, N)
        even = jnp.dot(xt, w_ref[0], preferred_element_type=f32) + b
        odd = (jnp.dot(xt, w_ref[1], preferred_element_type=f32)
               + jnp.dot(xb, w_ref[2], preferred_element_type=f32) + b)
        if relu:
            even = jnp.maximum(even, 0.0)
            odd = jnp.maximum(odd, 0.0)
        n = even.shape[1]
        # Row interleave OUT[2h]=even[h], OUT[2h+1]=odd[h]: aligned sublane concat
        # (bt = 8 = one sublane group) + trivial reshapes — no MXU work.
        ev = even.reshape(h_in, bt, n)
        od = odd.reshape(h_in, bt, n)
        return jnp.concatenate([ev, od], axis=1).reshape(2 * h_in * bt, n)

    # ---- fused fc_dec + view + ConvTranspose2d #1 (pre-ReLU), composed host-side ----
    x = x_ref[...].astype(bf16)                                           # (bt, 16)
    rows = [jnp.dot(x, wf_ref[h], preferred_element_type=f32) + bf_ref[h]
            for h in range(6)]
    a = jnp.maximum(jnp.concatenate(rows, axis=0), 0.0)                   # (6*bt, 96)

    a = deconv(a, 6, w2_ref, b2_ref, relu=True)                           # (12*bt, 96)
    a = deconv(a, 12, w3_ref, b3_ref, relu=True)                          # (24*bt, 96)
    a = deconv(a, 24, w4_ref, b4_ref, relu=False)                         # (48*bt, 384)

    o_ref[...] = a.reshape(48, bt, a.shape[1])


def _full_spec(arr):
    nd = arr.ndim
    return pl.BlockSpec(arr.shape, lambda i, _nd=nd: (0,) * _nd)


def decoder_forward(x, prep, bt=_BT):
    """x: (B, num_channels*4) -> (B, 48, 48, OUTPUT_CHANNELS) (matches PyTorch NHWC)."""
    assert bt % 8 == 0
    B = x.shape[0]
    c4 = NUM_CHANNELS * 4
    n_out = 48 * _COUT_PAD                                                # 384 lanes

    b_pad = ((B + bt - 1) // bt) * bt
    if b_pad != B:
        x = jnp.pad(x, ((0, b_pad - B), (0, 0)))
    n_blocks = b_pad // bt

    weights = [prep["wf"], prep["bf"], prep["w2"], prep["b2"],
               prep["w3"], prep["b3"], prep["w4"], prep["b4"]]

    in_specs = ([pl.BlockSpec((bt, c4), lambda i: (i, 0))]
                + [_full_spec(a) for a in weights])

    out = pl.pallas_call(
        _decoder_kernel,
        out_shape=jax.ShapeDtypeStruct((48, b_pad, n_out), jnp.float32),
        grid=(n_blocks,),
        in_specs=in_specs,
        out_specs=pl.BlockSpec((48, bt, n_out), lambda i: (0, i, 0)),
        compiler_params=pltpu.CompilerParams(dimension_semantics=("parallel",)),
    )(x, *weights)

    # (48, B, 48*Cpad) -> (B, 48, 48, Cpad) -> drop pad channels.  Pure layout plumbing.
    out = jnp.transpose(out, (1, 0, 2)).reshape(b_pad, 48, 48, _COUT_PAD)
    return out[:B, :, :, :OUTPUT_CHANNELS]


# ----------------------- host-side (one-off) weight repacking -----------------------

def _phase_weight(w_c, w_a, w_b, win):
    """Block-Toeplitz matrix mapping one input row (Win*Cin) -> one output row (2*Win*Cout).

       out[2j , co] = sum_ci in[j, ci]  * w_c[ci, co]
       out[2j+1,co] = sum_ci in[j, ci]  * w_a[ci, co] + in[j+1, ci] * w_b[ci, co]
    """
    cin, cout = w_c.shape
    w = np.zeros((win * cin, 2 * win * cout), np.float32)
    for j in range(win):
        w[j * cin:(j + 1) * cin, (2 * j) * cout:(2 * j + 1) * cout] = w_c
        w[j * cin:(j + 1) * cin, (2 * j + 1) * cout:(2 * j + 2) * cout] = w_a
        if j + 1 < win:
            w[(j + 1) * cin:(j + 2) * cin, (2 * j + 1) * cout:(2 * j + 2) * cout] = w_b
    return w


def _phases(wt, win):
    """wt: (Cin, Cout, 3, 3) torch ConvTranspose2d weight -> (W_even, W_odd_top, W_odd_bot)."""
    wf = np.flip(wt, (2, 3)).transpose(2, 3, 0, 1)      # correlation taps (kh, kw, Cin, Cout)
    w_even = _phase_weight(wf[1, 1], wf[1, 0], wf[1, 2], win)
    w_odd_top = _phase_weight(wf[0, 1], wf[0, 0], wf[0, 2], win)
    w_odd_bot = _phase_weight(wf[2, 1], wf[2, 0], wf[2, 2], win)
    return w_even, w_odd_top, w_odd_bot


def prepare_params(params):
    """Repack PyTorch-layout weights into the fused kernel's operands (runs once, host-side)."""
    c4 = NUM_CHANNELS * 4
    prep = {}

    # ---- fused fc_dec + deconv1 (both linear -> compose exactly in f32 numpy) ----
    w1 = np.asarray(params["w1"], np.float32)
    b1 = np.asarray(params["b1"], np.float32)
    e1, ot1, ob1 = _phases(w1, 3)                        # each (3*16=48, 2*3*16=96)
    m1 = np.zeros((3 * 3 * c4, 6 * 6 * c4), np.float32)  # (144, 576): seed rows -> 6x6 act
    for h in range(3):
        m1[h * 48:(h + 1) * 48, (2 * h) * 96:(2 * h + 1) * 96] += e1
        m1[h * 48:(h + 1) * 48, (2 * h + 1) * 96:(2 * h + 2) * 96] += ot1
        if h + 1 < 3:
            m1[(h + 1) * 48:(h + 2) * 48, (2 * h + 1) * 96:(2 * h + 2) * 96] += ob1

    fc_w = np.asarray(params["fc_w"], np.float32)        # (16, 144), outputs in (c, i, j) order
    fc_b = np.asarray(params["fc_b"], np.float32)
    fw_seed = fc_w.reshape(c4, c4, 3, 3).transpose(0, 2, 3, 1).reshape(c4, 3 * 3 * c4)
    fb_seed = fc_b.reshape(c4, 3, 3).transpose(1, 2, 0).reshape(3 * 3 * c4)

    wf_full = fw_seed @ m1                               # (16, 576), h-major (h, w, c)
    bias_f = fb_seed @ m1 + np.tile(np.tile(b1, 6), 6)   # (576,)
    prep["wf"] = jnp.asarray(wf_full.reshape(c4, 6, 96).transpose(1, 0, 2), jnp.bfloat16)
    prep["bf"] = jnp.asarray(bias_f.reshape(6, 1, 96), jnp.float32)

    # ---- deconv layers 2..4 as stacked phase matrices (layer 4 channel-padded 6->8) ----
    layer_defs = [("2", params["w2"], params["b2"], 6, None),
                  ("3", params["w3"], params["b3"], 12, None),
                  ("4", params["w4"], params["b4"], 24, _COUT_PAD)]
    for name, wt, bv, win, cpad in layer_defs:
        wt = np.asarray(wt, np.float32)
        bv = np.asarray(bv, np.float32)
        if cpad is not None and cpad != wt.shape[1]:
            wpad = np.zeros((wt.shape[0], cpad, 3, 3), np.float32)
            wpad[:, :wt.shape[1]] = wt
            bpad = np.zeros((cpad,), np.float32)
            bpad[:bv.shape[0]] = bv
            wt, bv = wpad, bpad
        e, ot, ob = _phases(wt, win)
        prep[f"w{name}"] = jnp.asarray(np.stack([e, ot, ob]), jnp.bfloat16)     # (3, K, N)
        prep[f"b{name}"] = jnp.asarray(np.tile(bv, 2 * win)[None, :], jnp.float32)
    return prep


# --------------------------- pure-JAX reference (check) ---------------------------

def _ref_deconv(x_nchw, w_torch, b, relu):
    w_flip = jnp.flip(w_torch, axis=(2, 3))
    w_oihw = jnp.transpose(w_flip, (1, 0, 2, 3))
    out = jax.lax.conv_general_dilated(
        x_nchw, w_oihw,
        window_strides=(1, 1),
        padding=((1, 2), (1, 2)),
        lhs_dilation=(2, 2),
        dimension_numbers=("NCHW", "OIHW", "NCHW"),
        precision=jax.lax.Precision.HIGHEST)
    out = out + b.reshape(1, -1, 1, 1)
    if relu:
        out = jnp.maximum(out, 0.0)
    return out


def ref_forward(x, params):
    c4 = NUM_CHANNELS * 4
    h = jnp.dot(x, params["fc_w"], precision=jax.lax.Precision.HIGHEST) + params["fc_b"]
    h = h.reshape(-1, c4, 3, 3)
    h = _ref_deconv(h, params["w1"], params["b1"], True)
    h = _ref_deconv(h, params["w2"], params["b2"], True)
    h = _ref_deconv(h, params["w3"], params["b3"], True)
    h = _ref_deconv(h, params["w4"], params["b4"], False)
    return jnp.transpose(h, (0, 2, 3, 1))


# ----------------------------------- main ------------------------------------

def init_params(key):
    c = NUM_CHANNELS
    ks = jax.random.split(key, 10)

    def w(k, shape, scale=0.1):
        return (scale * jax.random.normal(k, shape)).astype(jnp.float32)

    # Deterministic synthetic init (module uses orthogonal/zeros; shapes match).
    return {
        "fc_w": w(ks[0], (4 * c, 4 * c * 9)),
        "fc_b": w(ks[1], (4 * c * 9,), 0.01),
        "w1": w(ks[2], (4 * c, 4 * c, 3, 3)),
        "b1": w(ks[3], (4 * c,), 0.01),
        "w2": w(ks[4], (4 * c, 2 * c, 3, 3)),
        "b2": w(ks[5], (2 * c,), 0.01),
        "w3": w(ks[6], (2 * c, c, 3, 3)),
        "b3": w(ks[7], (c,), 0.01),
        "w4": w(ks[8], (c, OUTPUT_CHANNELS, 3, 3)),
        "b4": w(ks[9], (OUTPUT_CHANNELS,), 0.01),
    }


if __name__ == "__main__":
    key = jax.random.PRNGKey(0)
    pkey, xkey = jax.random.split(key)
    params = init_params(pkey)
    prep = prepare_params(params)

    B = 2
    x = jax.random.normal(xkey, (B, NUM_CHANNELS * 4), jnp.float32)   # (2, 16)

    fwd = jax.jit(decoder_forward)
    out = jax.block_until_ready(fwd(x, prep))
    ref = jax.block_until_ready(ref_forward(x, params))

    assert out.shape == (B, 48, 48, OUTPUT_CHANNELS), out.shape
    # Kernel feeds the MXU bf16 operands (f32 accumulate); the reference is f32/HIGHEST
    # -> allow 2e-2 abs/rel (real indexing/weight-packing bugs are O(0.1+)).
    if not np.allclose(np.asarray(out), np.asarray(ref), rtol=2e-2, atol=2e-2):
        err = float(np.max(np.abs(np.asarray(out) - np.asarray(ref))))
        raise AssertionError(f"Pallas decoder mismatch vs reference, max abs err {err}")

    print("KERNEL_OK")
</pallas_src>

<mosaic_0001>
module attributes {stable_mosaic.version = 11 : i64} {
  func.func @_decoder_kernel(%arg0: i32, %arg1: memref<8x16xf32, #tpu.memory_space<vmem>>, %arg2: memref<6x16x96xbf16, #tpu.memory_space<vmem>>, %arg3: memref<6x1x96xf32, #tpu.memory_space<vmem>>, %arg4: memref<3x96x96xbf16, #tpu.memory_space<vmem>>, %arg5: memref<1x96xf32, #tpu.memory_space<vmem>>, %arg6: memref<3x96x96xbf16, #tpu.memory_space<vmem>>, %arg7: memref<1x96xf32, #tpu.memory_space<vmem>>, %arg8: memref<3x96x384xbf16, #tpu.memory_space<vmem>>, %arg9: memref<1x384xf32, #tpu.memory_space<vmem>>, %arg10: memref<48x8x384xf32, #tpu.memory_space<vmem>>) attributes {dimension_semantics = [#tpu.dimension_semantics<parallel>], iteration_bounds = array<i64: 1>, scalar_prefetch = 0 : i64, scratch_operands = 0 : i64, tpu.core_type = #tpu.core_type<tc>, window_params = [{transform_indices = @transform_0, window_bounds = array<i64: 8, 16>}, {pipeline_mode = #tpu.pipeline_mode<synchronous>, transform_indices = @transform_1, window_bounds = array<i64: 6, 16, 96>}, {pipeline_mode = #tpu.pipeline_mode<synchronous>, transform_indices = @transform_2, window_bounds = array<i64: 6, 1, 96>}, {pipeline_mode = #tpu.pipeline_mode<synchronous>, transform_indices = @transform_3, window_bounds = array<i64: 3, 96, 96>}, {pipeline_mode = #tpu.pipeline_mode<synchronous>, transform_indices = @transform_4, window_bounds = array<i64: 1, 96>}, {pipeline_mode = #tpu.pipeline_mode<synchronous>, transform_indices = @transform_5, window_bounds = array<i64: 3, 96, 96>}, {pipeline_mode = #tpu.pipeline_mode<synchronous>, transform_indices = @transform_6, window_bounds = array<i64: 1, 96>}, {pipeline_mode = #tpu.pipeline_mode<synchronous>, transform_indices = @transform_7, window_bounds = array<i64: 3, 96, 384>}, {pipeline_mode = #tpu.pipeline_mode<synchronous>, transform_indices = @transform_8, window_bounds = array<i64: 1, 384>}, {transform_indices = @transform_9, window_bounds = array<i64: 48, 8, 384>}]} {
    %c0 = arith.constant 0 : index
    %c0_0 = arith.constant 0 : index
    %0 = vector.load %arg1[%c0, %c0_0] : memref<8x16xf32, #tpu.memory_space<vmem>>, vector<8x16xf32>
    %1 = arith.truncf %0 : vector<8x16xf32> to vector<8x16xbf16>
    %c0_1 = arith.constant 0 : index
    %c0_2 = arith.constant 0 : index
    %c0_3 = arith.constant 0 : index
    %2 = vector.load %arg2[%c0_1, %c0_2, %c0_3] : memref<6x16x96xbf16, #tpu.memory_space<vmem>>, vector<1x16x96xbf16>
    %3 = vector.shape_cast %2 : vector<1x16x96xbf16> to vector<16x96xbf16>
    %cst = arith.constant dense<0.000000e+00> : vector<8x96xf32>
    %4 = tpu.matmul %1, %3, %cst {dimension_numbers = #tpu.dot_dimension_numbers<[1], [0], [0], [1], [0, 0, 1, 1], [], []>} : vector<8x16xbf16>, vector<16x96xbf16>, vector<8x96xf32> -> vector<8x96xf32>
    %c0_4 = arith.constant 0 : index
    %c0_5 = arith.constant 0 : index
    %c0_6 = arith.constant 0 : index
    %5 = vector.load %arg3[%c0_4, %c0_5, %c0_6] : memref<6x1x96xf32, #tpu.memory_space<vmem>>, vector<1x1x96xf32>
    %6 = vector.shape_cast %5 : vector<1x1x96xf32> to vector<1x96xf32>
    %7 = vector.broadcast %6 : vector<1x96xf32> to vector<8x96xf32>
    %8 = arith.addf %4, %7 : vector<8x96xf32>
    %c1 = arith.constant 1 : index
    %c0_7 = arith.constant 0 : index
    %c0_8 = arith.constant 0 : index
    %9 = vector.load %arg2[%c1, %c0_7, %c0_8] : memref<6x16x96xbf16, #tpu.memory_space<vmem>>, vector<1x16x96xbf16>
    %10 = vector.shape_cast %9 : vector<1x16x96xbf16> to vector<16x96xbf16>
    %cst_9 = arith.constant dense<0.000000e+00> : vector<8x96xf32>
    %11 = tpu.matmul %1, %10, %cst_9 {dimension_numbers = #tpu.dot_dimension_numbers<[1], [0], [0], [1], [0, 0, 1, 1], [], []>} : vector<8x16xbf16>, vector<16x96xbf16>, vector<8x96xf32> -> vector<8x96xf32>
    %c1_10 = arith.constant 1 : index
    %c0_11 = arith.constant 0 : index
    %c0_12 = arith.constant 0 : index
    %12 = vector.load %arg3[%c1_10, %c0_11, %c0_12] : memref<6x1x96xf32, #tpu.memory_space<vmem>>, vector<1x1x96xf32>
    %13 = vector.shape_cast %12 : vector<1x1x96xf32> to vector<1x96xf32>
    %14 = vector.broadcast %13 : vector<1x96xf32> to vector<8x96xf32>
    %15 = arith.addf %11, %14 : vector<8x96xf32>
    %c2 = arith.constant 2 : index
    %c0_13 = arith.constant 0 : index
    %c0_14 = arith.constant 0 : index
    %16 = vector.load %arg2[%c2, %c0_13, %c0_14] : memref<6x16x96xbf16, #tpu.memory_space<vmem>>, vector<1x16x96xbf16>
    %17 = vector.shape_cast %16 : vector<1x16x96xbf16> to vector<16x96xbf16>
    %cst_15 = arith.constant dense<0.000000e+00> : vector<8x96xf32>
    %18 = tpu.matmul %1, %17, %cst_15 {dimension_numbers = #tpu.dot_dimension_numbers<[1], [0], [0], [1], [0, 0, 1, 1], [], []>} : vector<8x16xbf16>, vector<16x96xbf16>, vector<8x96xf32> -> vector<8x96xf32>
    %c2_16 = arith.constant 2 : index
    %c0_17 = arith.constant 0 : index
    %c0_18 = arith.constant 0 : index
    %19 = vector.load %arg3[%c2_16, %c0_17, %c0_18] : memref<6x1x96xf32, #tpu.memory_space<vmem>>, vector<1x1x96xf32>
    %20 = vector.shape_cast %19 : vector<1x1x96xf32> to vector<1x96xf32>
    %21 = vector.broadcast %20 : vector<1x96xf32> to vector<8x96xf32>
    %22 = arith.addf %18, %21 : vector<8x96xf32>
    %c3 = arith.constant 3 : index
    %c0_19 = arith.constant 0 : index
    %c0_20 = arith.constant 0 : index
    %23 = vector.load %arg2[%c3, %c0_19, %c0_20] : memref<6x16x96xbf16, #tpu.memory_space<vmem>>, vector<1x16x96xbf16>
    %24 = vector.shape_cast %23 : vector<1x16x96xbf16> to vector<16x96xbf16>
    %cst_21 = arith.constant dense<0.000000e+00> : vector<8x96xf32>
    %25 = tpu.matmul %1, %24, %cst_21 {dimension_numbers = #tpu.dot_dimension_numbers<[1], [0], [0], [1], [0, 0, 1, 1], [], []>} : vector<8x16xbf16>, vector<16x96xbf16>, vector<8x96xf32> -> vector<8x96xf32>
    %c3_22 = arith.constant 3 : index
    %c0_23 = arith.constant 0 : index
    %c0_24 = arith.constant 0 : index
    %26 = vector.load %arg3[%c3_22, %c0_23, %c0_24] : memref<6x1x96xf32, #tpu.memory_space<vmem>>, vector<1x1x96xf32>
    %27 = vector.shape_cast %26 : vector<1x1x96xf32> to vector<1x96xf32>
    %28 = vector.broadcast %27 : vector<1x96xf32> to vector<8x96xf32>
    %29 = arith.addf %25, %28 : vector<8x96xf32>
    %c4 = arith.constant 4 : index
    %c0_25 = arith.constant 0 : index
    %c0_26 = arith.constant 0 : index
    %30 = vector.load %arg2[%c4, %c0_25, %c0_26] : memref<6x16x96xbf16, #tpu.memory_space<vmem>>, vector<1x16x96xbf16>
    %31 = vector.shape_cast %30 : vector<1x16x96xbf16> to vector<16x96xbf16>
    %cst_27 = arith.constant dense<0.000000e+00> : vector<8x96xf32>
    %32 = tpu.matmul %1, %31, %cst_27 {dimension_numbers = #tpu.dot_dimension_numbers<[1], [0], [0], [1], [0, 0, 1, 1], [], []>} : vector<8x16xbf16>, vector<16x96xbf16>, vector<8x96xf32> -> vector<8x96xf32>
    %c4_28 = arith.constant 4 : index
    %c0_29 = arith.constant 0 : index
    %c0_30 = arith.constant 0 : index
    %33 = vector.load %arg3[%c4_28, %c0_29, %c0_30] : memref<6x1x96xf32, #tpu.memory_space<vmem>>, vector<1x1x96xf32>
    %34 = vector.shape_cast %33 : vector<1x1x96xf32> to vector<1x96xf32>
    %35 = vector.broadcast %34 : vector<1x96xf32> to vector<8x96xf32>
    %36 = arith.addf %32, %35 : vector<8x96xf32>
    %c5 = arith.constant 5 : index
    %c0_31 = arith.constant 0 : index
    %c0_32 = arith.constant 0 : index
    %37 = vector.load %arg2[%c5, %c0_31, %c0_32] : memref<6x16x96xbf16, #tpu.memory_space<vmem>>, vector<1x16x96xbf16>
    %38 = vector.shape_cast %37 : vector<1x16x96xbf16> to vector<16x96xbf16>
    %cst_33 = arith.constant dense<0.000000e+00> : vector<8x96xf32>
    %39 = tpu.matmul %1, %38, %cst_33 {dimension_numbers = #tpu.dot_dimension_numbers<[1], [0], [0], [1], [0, 0, 1, 1], [], []>} : vector<8x16xbf16>, vector<16x96xbf16>, vector<8x96xf32> -> vector<8x96xf32>
    %c5_34 = arith.constant 5 : index
    %c0_35 = arith.constant 0 : index
    %c0_36 = arith.constant 0 : index
    %40 = vector.load %arg3[%c5_34, %c0_35, %c0_36] : memref<6x1x96xf32, #tpu.memory_space<vmem>>, vector<1x1x96xf32>
    %41 = vector.shape_cast %40 : vector<1x1x96xf32> to vector<1x96xf32>
    %42 = vector.broadcast %41 : vector<1x96xf32> to vector<8x96xf32>
    %43 = arith.addf %39, %42 : vector<8x96xf32>
    %44 = tpu.concatenate %8, %15, %22, %29, %36, %43 in 0 : vector<8x96xf32>, vector<8x96xf32>, vector<8x96xf32>, vector<8x96xf32>, vector<8x96xf32>, vector<8x96xf32> -> vector<48x96xf32>
    %cst_37 = arith.constant 0.000000e+00 : f32
    %45 = vector.broadcast %cst_37 : f32 to vector<48x96xf32>
    %46 = arith.maximumf %44, %45 : vector<48x96xf32>
    %47 = vector.extract_strided_slice %46 {offsets = [8, 0], sizes = [40, 96], strides = [1, 1]} : vector<48x96xf32> to vector<40x96xf32>
    %cst_38 = arith.constant 0.000000e+00 : f32
    %48 = vector.broadcast %cst_38 : f32 to vector<8x96xf32>
    %49 = tpu.concatenate %47, %48 in 0 : vector<40x96xf32>, vector<8x96xf32> -> vector<48x96xf32>
    %50 = arith.truncf %46 : vector<48x96xf32> to vector<48x96xbf16>
    %51 = arith.truncf %49 : vector<48x96xf32> to vector<48x96xbf16>
    %c0_39 = arith.constant 0 : index
    %c0_40 = arith.constant 0 : index
    %52 = vector.load %arg5[%c0_39, %c0_40] : memref<1x96xf32, #tpu.memory_space<vmem>>, vector<1x96xf32>
    %c0_41 = arith.constant 0 : index
    %c0_42 = arith.constant 0 : index
    %c0_43 = arith.constant 0 : index
    %53 = vector.load %arg4[%c0_41, %c0_42, %c0_43] : memref<3x96x96xbf16, #tpu.memory_space<vmem>>, vector<1x96x96xbf16>
    %54 = vector.shape_cast %53 : vector<1x96x96xbf16> to vector<96x96xbf16>
    %cst_44 = arith.constant dense<0.000000e+00> : vector<48x96xf32>
    %55 = tpu.matmul %50, %54, %cst_44 {dimension_numbers = #tpu.dot_dimension_numbers<[1], [0], [0], [1], [0, 0, 1, 1], [], []>} : vector<48x96xbf16>, vector<96x96xbf16>, vector<48x96xf32> -> vector<48x96xf32>
    %56 = vector.broadcast %52 : vector<1x96xf32> to vector<48x96xf32>
    %57 = arith.addf %55, %56 : vector<48x96xf32>
    %c1_45 = arith.constant 1 : index
    %c0_46 = arith.constant 0 : index
    %c0_47 = arith.constant 0 : index
    %58 = vector.load %arg4[%c1_45, %c0_46, %c0_47] : memref<3x96x96xbf16, #tpu.memory_space<vmem>>, vector<1x96x96xbf16>
    %59 = vector.shape_cast %58 : vector<1x96x96xbf16> to vector<96x96xbf16>
    %cst_48 = arith.constant dense<0.000000e+00> : vector<48x96xf32>
    %60 = tpu.matmul %50, %59, %cst_48 {dimension_numbers = #tpu.dot_dimension_numbers<[1], [0], [0], [1], [0, 0, 1, 1], [], []>} : vector<48x96xbf16>, vector<96x96xbf16>, vector<48x96xf32> -> vector<48x96xf32>
    %c2_49 = arith.constant 2 : index
    %c0_50 = arith.constant 0 : index
    %c0_51 = arith.constant 0 : index
    %61 = vector.load %arg4[%c2_49, %c0_50, %c0_51] : memref<3x96x96xbf16, #tpu.memory_space<vmem>>, vector<1x96x96xbf16>
    %62 = vector.shape_cast %61 : vector<1x96x96xbf16> to vector<96x96xbf16>
    %cst_52 = arith.constant dense<0.000000e+00> : vector<48x96xf32>
    %63 = tpu.matmul %51, %62, %cst_52 {dimension_numbers = #tpu.dot_dimension_numbers<[1], [0], [0], [1], [0, 0, 1, 1], [], []>} : vector<48x96xbf16>, vector<96x96xbf16>, vector<48x96xf32> -> vector<48x96xf32>
    %64 = arith.addf %60, %63 : vector<48x96xf32>
    %65 = vector.broadcast %52 : vector<1x96xf32> to vector<48x96xf32>
    %66 = arith.addf %64, %65 : vector<48x96xf32>
    %cst_53 = arith.constant 0.000000e+00 : f32
    %67 = vector.broadcast %cst_53 : f32 to vector<48x96xf32>
    %68 = arith.maximumf %57, %67 : vector<48x96xf32>
    %cst_54 = arith.constant 0.000000e+00 : f32
    %69 = vector.broadcast %cst_54 : f32 to vector<48x96xf32>
    %70 = arith.maximumf %66, %69 : vector<48x96xf32>
    %71 = vector.shape_cast %68 : vector<48x96xf32> to vector<6x8x96xf32>
    %72 = vector.shape_cast %70 : vector<48x96xf32> to vector<6x8x96xf32>
    %73 = tpu.concatenate %71, %72 in 1 : vector<6x8x96xf32>, vector<6x8x96xf32> -> vector<6x16x96xf32>
    %74 = vector.shape_cast %73 : vector<6x16x96xf32> to vector<96x96xf32>
    %75 = vector.extract_strided_slice %74 {offsets = [8, 0], sizes = [88, 96], strides = [1, 1]} : vector<96x96xf32> to vector<88x96xf32>
    %cst_55 = arith.constant 0.000000e+00 : f32
    %76 = vector.broadcast %cst_55 : f32 to vector<8x96xf32>
    %77 = tpu.concatenate %75, %76 in 0 : vector<88x96xf32>, vector<8x96xf32> -> vector<96x96xf32>
    %78 = arith.truncf %74 : vector<96x96xf32> to vector<96x96xbf16>
    %79 = arith.truncf %77 : vector<96x96xf32> to vector<96x96xbf16>
    %c0_56 = arith.constant 0 : index
    %c0_57 = arith.constant 0 : index
    %80 = vector.load %arg7[%c0_56, %c0_57] : memref<1x96xf32, #tpu.memory_space<vmem>>, vector<1x96xf32>
    %c0_58 = arith.constant 0 : index
    %c0_59 = arith.constant 0 : index
    %c0_60 = arith.constant 0 : index
    %81 = vector.load %arg6[%c0_58, %c0_59, %c0_60] : memref<3x96x96xbf16, #tpu.memory_space<vmem>>, vector<1x96x96xbf16>
    %82 = vector.shape_cast %81 : vector<1x96x96xbf16> to vector<96x96xbf16>
    %cst_61 = arith.constant dense<0.000000e+00> : vector<96x96xf32>
    %83 = tpu.matmul %78, %82, %cst_61 {dimension_numbers = #tpu.dot_dimension_numbers<[1], [0], [0], [1], [0, 0, 1, 1], [], []>} : vector<96x96xbf16>, vector<96x96xbf16>, vector<96x96xf32> -> vector<96x96xf32>
    %84 = vector.broadcast %80 : vector<1x96xf32> to vector<96x96xf32>
    %85 = arith.addf %83, %84 : vector<96x96xf32>
    %c1_62 = arith.constant 1 : index
    %c0_63 = arith.constant 0 : index
    %c0_64 = arith.constant 0 : index
    %86 = vector.load %arg6[%c1_62, %c0_63, %c0_64] : memref<3x96x96xbf16, #tpu.memory_space<vmem>>, vector<1x96x96xbf16>
    %87 = vector.shape_cast %86 : vector<1x96x96xbf16> to vector<96x96xbf16>
    %cst_65 = arith.constant dense<0.000000e+00> : vector<96x96xf32>
    %88 = tpu.matmul %78, %87, %cst_65 {dimension_numbers = #tpu.dot_dimension_numbers<[1], [0], [0], [1], [0, 0, 1, 1], [], []>} : vector<96x96xbf16>, vector<96x96xbf16>, vector<96x96xf32> -> vector<96x96xf32>
    %c2_66 = arith.constant 2 : index
    %c0_67 = arith.constant 0 : index
    %c0_68 = arith.constant 0 : index
    %89 = vector.load %arg6[%c2_66, %c0_67, %c0_68] : memref<3x96x96xbf16, #tpu.memory_space<vmem>>, vector<1x96x96xbf16>
    %90 = vector.shape_cast %89 : vector<1x96x96xbf16> to vector<96x96xbf16>
    %cst_69 = arith.constant dense<0.000000e+00> : vector<96x96xf32>
    %91 = tpu.matmul %79, %90, %cst_69 {dimension_numbers = #tpu.dot_dimension_numbers<[1], [0], [0], [1], [0, 0, 1, 1], [], []>} : vector<96x96xbf16>, vector<96x96xbf16>, vector<96x96xf32> -> vector<96x96xf32>
    %92 = arith.addf %88, %91 : vector<96x96xf32>
    %93 = vector.broadcast %80 : vector<1x96xf32> to vector<96x96xf32>
    %94 = arith.addf %92, %93 : vector<96x96xf32>
    %cst_70 = arith.constant 0.000000e+00 : f32
    %95 = vector.broadcast %cst_70 : f32 to vector<96x96xf32>
    %96 = arith.maximumf %85, %95 : vector<96x96xf32>
    %cst_71 = arith.constant 0.000000e+00 : f32
    %97 = vector.broadcast %cst_71 : f32 to vector<96x96xf32>
    %98 = arith.maximumf %94, %97 : vector<96x96xf32>
    %99 = vector.shape_cast %96 : vector<96x96xf32> to vector<12x8x96xf32>
    %100 = vector.shape_cast %98 : vector<96x96xf32> to vector<12x8x96xf32>
    %101 = tpu.concatenate %99, %100 in 1 : vector<12x8x96xf32>, vector<12x8x96xf32> -> vector<12x16x96xf32>
    %102 = vector.shape_cast %101 : vector<12x16x96xf32> to vector<192x96xf32>
    %103 = vector.extract_strided_slice %102 {offsets = [8, 0], sizes = [184, 96], strides = [1, 1]} : vector<192x96xf32> to vector<184x96xf32>
    %cst_72 = arith.constant 0.000000e+00 : f32
    %104 = vector.broadcast %cst_72 : f32 to vector<8x96xf32>
    %105 = tpu.concatenate %103, %104 in 0 : vector<184x96xf32>, vector<8x96xf32> -> vector<192x96xf32>
    %106 = arith.truncf %102 : vector<192x96xf32> to vector<192x96xbf16>
    %107 = arith.truncf %105 : vector<192x96xf32> to vector<192x96xbf16>
    %c0_73 = arith.constant 0 : index
    %c0_74 = arith.constant 0 : index
    %108 = vector.load %arg9[%c0_73, %c0_74] : memref<1x384xf32, #tpu.memory_space<vmem>>, vector<1x384xf32>
    %c0_75 = arith.constant 0 : index
    %c0_76 = arith.constant 0 : index
    %c0_77 = arith.constant 0 : index
    %109 = vector.load %arg8[%c0_75, %c0_76, %c0_77] : memref<3x96x384xbf16, #tpu.memory_space<vmem>>, vector<1x96x384xbf16>
    %110 = vector.shape_cast %109 : vector<1x96x384xbf16> to vector<96x384xbf16>
    %cst_78 = arith.constant dense<0.000000e+00> : vector<192x384xf32>
    %111 = tpu.matmul %106, %110, %cst_78 {dimension_numbers = #tpu.dot_dimension_numbers<[1], [0], [0], [1], [0, 0, 1, 1], [], []>} : vector<192x96xbf16>, vector<96x384xbf16>, vector<192x384xf32> -> vector<192x384xf32>
    %112 = vector.broadcast %108 : vector<1x384xf32> to vector<192x384xf32>
    %113 = arith.addf %111, %112 : vector<192x384xf32>
    %c1_79 = arith.constant 1 : index
    %c0_80 = arith.constant 0 : index
    %c0_81 = arith.constant 0 : index
    %114 = vector.load %arg8[%c1_79, %c0_80, %c0_81] : memref<3x96x384xbf16, #tpu.memory_space<vmem>>, vector<1x96x384xbf16>
    %115 = vector.shape_cast %114 : vector<1x96x384xbf16> to vector<96x384xbf16>
    %cst_82 = arith.constant dense<0.000000e+00> : vector<192x384xf32>
    %116 = tpu.matmul %106, %115, %cst_82 {dimension_numbers = #tpu.dot_dimension_numbers<[1], [0], [0], [1], [0, 0, 1, 1], [], []>} : vector<192x96xbf16>, vector<96x384xbf16>, vector<192x384xf32> -> vector<192x384xf32>
    %c2_83 = arith.constant 2 : index
    %c0_84 = arith.constant 0 : index
    %c0_85 = arith.constant 0 : index
    %117 = vector.load %arg8[%c2_83, %c0_84, %c0_85] : memref<3x96x384xbf16, #tpu.memory_space<vmem>>, vector<1x96x384xbf16>
    %118 = vector.shape_cast %117 : vector<1x96x384xbf16> to vector<96x384xbf16>
    %cst_86 = arith.constant dense<0.000000e+00> : vector<192x384xf32>
    %119 = tpu.matmul %107, %118, %cst_86 {dimension_numbers = #tpu.dot_dimension_numbers<[1], [0], [0], [1], [0, 0, 1, 1], [], []>} : vector<192x96xbf16>, vector<96x384xbf16>, vector<192x384xf32> -> vector<192x384xf32>
    %120 = arith.addf %116, %119 : vector<192x384xf32>
    %121 = vector.broadcast %108 : vector<1x384xf32> to vector<192x384xf32>
    %122 = arith.addf %120, %121 : vector<192x384xf32>
    %123 = vector.shape_cast %113 : vector<192x384xf32> to vector<24x8x384xf32>
    %124 = vector.shape_cast %122 : vector<192x384xf32> to vector<24x8x384xf32>
    %125 = tpu.concatenate %123, %124 in 1 : vector<24x8x384xf32>, vector<24x8x384xf32> -> vector<24x16x384xf32>
    %126 = vector.shape_cast %125 : vector<24x16x384xf32> to vector<384x384xf32>
    %127 = vector.shape_cast %126 : vector<384x384xf32> to vector<48x8x384xf32>
    %c0_87 = arith.constant 0 : index
    %c0_88 = arith.constant 0 : index
    %c0_89 = arith.constant 0 : index
    %128 = vector.load %arg10[%c0_87, %c0_88, %c0_89] : memref<48x8x384xf32, #tpu.memory_space<vmem>>, vector<48x8x384xf32>
    tpu.vector_store %arg10[%c0_87, %c0_88, %c0_89], %127 {strides = array<i32>} : memref<48x8x384xf32, #tpu.memory_space<vmem>>, vector<48x8x384xf32>,
    return
  }
  func.func @transform_0(%arg0: i32) -> (i32, i32) {
    %c0_i32 = arith.constant 0 : i32
    %c0_i32_0 = arith.constant 0 : i32
    return %arg0, %c0_i32 : i32, i32
  }
  func.func @transform_1(%arg0: i32) -> (i32, i32, i32) {
    %c0_i32 = arith.constant 0 : i32
    %c0_i32_0 = arith.constant 0 : i32
    %c0_i32_1 = arith.constant 0 : i32
    %c0_i32_2 = arith.constant 0 : i32
    return %c0_i32, %c0_i32_0, %c0_i32_1 : i32, i32, i32
  }
  func.func @transform_2(%arg0: i32) -> (i32, i32, i32) {
    %c0_i32 = arith.constant 0 : i32
    %c0_i32_0 = arith.constant 0 : i32
    %c0_i32_1 = arith.constant 0 : i32
    %c0_i32_2 = arith.constant 0 : i32
    return %c0_i32, %c0_i32_0, %c0_i32_1 : i32, i32, i32
  }
  func.func @transform_3(%arg0: i32) -> (i32, i32, i32) {
    %c0_i32 = arith.constant 0 : i32
    %c0_i32_0 = arith.constant 0 : i32
    %c0_i32_1 = arith.constant 0 : i32
    %c0_i32_2 = arith.constant 0 : i32
    return %c0_i32, %c0_i32_0, %c0_i32_1 : i32, i32, i32
  }
  func.func @transform_4(%arg0: i32) -> (i32, i32) {
    %c0_i32 = arith.constant 0 : i32
    %c0_i32_0 = arith.constant 0 : i32
    %c0_i32_1 = arith.constant 0 : i32
    return %c0_i32, %c0_i32_0 : i32, i32
  }
  func.func @transform_5(%arg0: i32) -> (i32, i32, i32) {
    %c0_i32 = arith.constant 0 : i32
    %c0_i32_0 = arith.constant 0 : i32
    %c0_i32_1 = arith.constant 0 : i32
    %c0_i32_2 = arith.constant 0 : i32
    return %c0_i32, %c0_i32_0, %c0_i32_1 : i32, i32, i32
  }
  func.func @transform_6(%arg0: i32) -> (i32, i32) {
    %c0_i32 = arith.constant 0 : i32
    %c0_i32_0 = arith.constant 0 : i32
    %c0_i32_1 = arith.constant 0 : i32
    return %c0_i32, %c0_i32_0 : i32, i32
  }
  func.func @transform_7(%arg0: i32) -> (i32, i32, i32) {
    %c0_i32 = arith.constant 0 : i32
    %c0_i32_0 = arith.constant 0 : i32
    %c0_i32_1 = arith.constant 0 : i32
    %c0_i32_2 = arith.constant 0 : i32
    return %c0_i32, %c0_i32_0, %c0_i32_1 : i32, i32, i32
  }
  func.func @transform_8(%arg0: i32) -> (i32, i32) {
    %c0_i32 = arith.constant 0 : i32
    %c0_i32_0 = arith.constant 0 : i32
    %c0_i32_1 = arith.constant 0 : i32
    return %c0_i32, %c0_i32_0 : i32, i32
  }
  func.func @transform_9(%arg0: i32) -> (i32, i32, i32) {
    %c0_i32 = arith.constant 0 : i32
    %c0_i32_0 = arith.constant 0 : i32
    %c0_i32_1 = arith.constant 0 : i32
    return %c0_i32, %arg0, %c0_i32_0 : i32, i32, i32
  }
}

</mosaic_0001>

<llo_original>
// kernel: decoder_forward.1
$region0: #{decoder_forward.1}
  #allocation0 [shape = 'u32[]', space=smem, size = 0x4, offset = 0x4, fixed_abs, tag = 'smem constant byte address 0x4 - core index']
  #allocation1 [shape = 'u32[144,128]{1,0:T(1,128)}', space=vmem, size = 0x12000, scoped, tag = 'internal scratch']
  %s0 = inlined_call_operand.vmem [shape: f32[8,16], index: 0, kind: input, shape index: {}]
  %s1 = inlined_call_operand.hbm [shape: bf16[6,16,96], index: 1, kind: input, shape index: {}]
  %s2 = inlined_call_operand.hbm [shape: f32[6,1,96], index: 2, kind: input, shape index: {}]
  %s3 = inlined_call_operand.hbm [shape: bf16[3,96,96], index: 3, kind: input, shape index: {}]
  %s4 = inlined_call_operand.hbm [shape: f32[1,96], index: 4, kind: input, shape index: {}]
  %s5 = inlined_call_operand.hbm [shape: bf16[3,96,96], index: 5, kind: input, shape index: {}]
  %s6 = inlined_call_operand.hbm [shape: f32[1,96], index: 6, kind: input, shape index: {}]
  %s7 = inlined_call_operand.hbm [shape: bf16[3,96,384], index: 7, kind: input, shape index: {}]
  %s8 = inlined_call_operand.hbm [shape: f32[1,384], index: 8, kind: input, shape index: {}]
  %s9 = inlined_call_operand.vmem [shape: f32[48,8,384], index: 9, kind: output, shape index: {}]
  %s10 = sld [smem:[#allocation0]]
  $region78: #{decoder_forward.1} parent=0
    _
  %s12 = ssub.s32 1, %s10
  %s13 = scalar_select 0, %s12, %s10
  $region1: #{decoder_forward.1} parent=0
    #allocation2 [shape = 'u8[24576]{0}', space=vmem, size = 0x6000, scoped, tag = 'input window, operand 1, single buffered']
    #allocation3 [shape = 's32[1]{0}', space=sflag, size = 0x4, scoped, tag = 'scoped memory for decoder_forward.1']
    #allocation4 [shape = 'u8[3072]{0}', space=vmem, size = 0xc00, scoped, tag = 'input window, operand 2, single buffered']
    #allocation5 [shape = 's32[1]{0}', space=sflag, size = 0x4, scoped, tag = 'scoped memory for decoder_forward.1']
    #allocation6 [shape = 'u8[73728]{0}', space=vmem, size = 0x12000, scoped, tag = 'input window, operand 3, single buffered']
    #allocation7 [shape = 'u8[512]{0}', space=vmem, size = 0x400, scoped, tag = 'input window, operand 4, single buffered']
    #allocation8 [shape = 's32[1]{0}', space=sflag, size = 0x4, scoped, tag = 'scoped memory for decoder_forward.1']
    #allocation9 [shape = 'u8[73728]{0}', space=vmem, size = 0x12000, scoped, tag = 'input window, operand 5, single buffered']
    #allocation10 [shape = 'u8[512]{0}', space=vmem, size = 0x400, scoped, tag = 'input window, operand 6, single buffered']
    #allocation11 [shape = 's32[1]{0}', space=sflag, size = 0x4, scoped, tag = 'scoped memory for decoder_forward.1']
    #allocation12 [shape = 'u8[221184]{0}', space=vmem, size = 0x36000, scoped, tag = 'input window, operand 7, single buffered']
    #allocation13 [shape = 'u8[1536]{0}', space=vmem, size = 0x800, scoped, tag = 'input window, operand 8, single buffered']
    #allocation14 [shape = 's32[1]{0}', space=sflag, size = 0x4, scoped, tag = 'scoped memory for decoder_forward.1']
    %14 = vsyncpa [#allocation3], 0
    %15 = vsyncpa [#allocation5], 0
    %16 = vsyncpa [#allocation8], 0
    %17 = vsyncpa [#allocation11], 0
    %18 = vsyncpa [#allocation14], 0
    // Predicated region
    $region2: #{decoder_forward.1} parent=1 // pred_check
      _
    $region3: #{decoder_forward.1} parent=1 // pred_check_branch
      %20 = sbr.rel (0) target = $region5
    $region4: #{decoder_forward.1} parent=1 // pred_region
      _
    $region5: #{decoder_forward.1} parent=1 // pred_fallthru
      _
    // Predicated region
    $region6: #{decoder_forward.1} parent=1 // pred_check
      _
    $region7: #{decoder_forward.1} parent=1 // pred_check_branch
      %22 = sbr.rel (0) target = $region9
    $region8: #{decoder_forward.1} parent=1 // pred_region
      %s24 = ssub.s32 768, 768
      %25 = vsyncadd [#allocation3], %s24
      %s26 = sshll.u32 [#allocation2], 4
      %s27 = int_to_ptr.vmem [resolvable:$true] %s26
      %32 = dma.hbm_to_vmem [thread:$0]  %s1, 768, %s27, [#allocation3], 64, 64, 4
    $region9: #{decoder_forward.1} parent=1 // pred_fallthru
      _
    // Predicated region
    $region10: #{decoder_forward.1} parent=1 // pred_check
      _
    $region11: #{decoder_forward.1} parent=1 // pred_check_branch
      %34 = sbr.rel (0) target = $region13
    $region12: #{decoder_forward.1} parent=1 // pred_region
      %s36 = ssub.s32 96, 96
      %37 = vsyncadd [#allocation5], %s36
      %s38 = sshll.u32 [#allocation4], 4
      %s39 = int_to_ptr.vmem [resolvable:$true] %s38
      %44 = dma.hbm_to_vmem [thread:$0]  %s2, 96, %s39, [#allocation5], 16, 16, 1
    $region13: #{decoder_forward.1} parent=1 // pred_fallthru
      _
    // Predicated region
    $region14: #{decoder_forward.1} parent=1 // pred_check
      _
    $region15: #{decoder_forward.1} parent=1 // pred_check_branch
      %46 = sbr.rel (0) target = $region17
    $region16: #{decoder_forward.1} parent=1 // pred_region
      %s48 = ssub.s32 2304, 2304
      %49 = vsyncadd [#allocation5], %s48
      %s50 = sshll.u32 [#allocation6], 4
      %s51 = int_to_ptr.vmem [resolvable:$true] %s50
      %56 = dma.hbm_to_vmem [thread:$0]  %s3, 2304, %s51, [#allocation5], 64, 64, 4
    $region17: #{decoder_forward.1} parent=1 // pred_fallthru
      _
    // Predicated region
    $region18: #{decoder_forward.1} parent=1 // pred_check
      _
    $region19: #{decoder_forward.1} parent=1 // pred_check_branch
      %58 = sbr.rel (0) target = $region21
    $region20: #{decoder_forward.1} parent=1 // pred_region
      %s60 = ssub.s32 16, 16
      %61 = vsyncadd [#allocation8], %s60
      %s63 = sshll.u32 [#allocation7], 4
      %s64 = int_to_ptr.vmem [resolvable:$true] %s63
      %66 = dma.hbm_to_vmem [thread:$0]  %s4, 16, %s64, [#allocation8]
    $region21: #{decoder_forward.1} parent=1 // pred_fallthru
      _
    // Predicated region
    $region22: #{decoder_forward.1} parent=1 // pred_check
      _
    $region23: #{decoder_forward.1} parent=1 // pred_check_branch
      %68 = sbr.rel (0) target = $region25
    $region24: #{decoder_forward.1} parent=1 // pred_region
      %s70 = ssub.s32 2304, 2304
      %71 = vsyncadd [#allocation8], %s70
      %s72 = sshll.u32 [#allocation9], 4
      %s73 = int_to_ptr.vmem [resolvable:$true] %s72
      %78 = dma.hbm_to_vmem [thread:$0]  %s5, 2304, %s73, [#allocation8], 64, 64, 4
    $region25: #{decoder_forward.1} parent=1 // pred_fallthru
      _
    // Predicated region
    $region26: #{decoder_forward.1} parent=1 // pred_check
      _
    $region27: #{decoder_forward.1} parent=1 // pred_check_branch
      %80 = sbr.rel (0) target = $region29
    $region28: #{decoder_forward.1} parent=1 // pred_region
      %s82 = ssub.s32 16, 16
      %83 = vsyncadd [#allocation11], %s82
      %s85 = sshll.u32 [#allocation10], 4
      %s86 = int_to_ptr.vmem [resolvable:$true] %s85
      %88 = dma.hbm_to_vmem [thread:$0]  %s6, 16, %s86, [#allocation11]
    $region29: #{decoder_forward.1} parent=1 // pred_fallthru
      _
    // Predicated region
    $region30: #{decoder_forward.1} parent=1 // pred_check
      _
    $region31: #{decoder_forward.1} parent=1 // pred_check_branch
      %90 = sbr.rel (0) target = $region33
    $region32: #{decoder_forward.1} parent=1 // pred_region
      %s92 = ssub.s32 6912, 6912
      %93 = vsyncadd [#allocation11], %s92
      %s94 = sshll.u32 [#allocation12], 4
      %s95 = int_to_ptr.vmem [resolvable:$true] %s94
      %100 = dma.hbm_to_vmem [thread:$0]  %s7, 6912, %s95, [#allocation11], 192, 192, 12
    $region33: #{decoder_forward.1} parent=1 // pred_fallthru
      _
    // Predicated region
    $region34: #{decoder_forward.1} parent=1 // pred_check
      _
    $region35: #{decoder_forward.1} parent=1 // pred_check_branch
      %102 = sbr.rel (0) target = $region37
    $region36: #{decoder_forward.1} parent=1 // pred_region
      %s104 = ssub.s32 48, 48
      %105 = vsyncadd [#allocation14], %s104
      %s107 = sshll.u32 [#allocation13], 4
      %s108 = int_to_ptr.vmem [resolvable:$true] %s107
      %110 = dma.hbm_to_vmem [thread:$0]  %s8, 48, %s108, [#allocation14]
    $region37: #{decoder_forward.1} parent=1 // pred_fallthru
      _
    // Predicated region
    $region38: #{decoder_forward.1} parent=1 // pred_check
      _
    $region39: #{decoder_forward.1} parent=1 // pred_check_branch
      %112 = sbr.rel (0) target = $region41
    $region40: #{decoder_forward.1} parent=1 // pred_region
      %113 = dma.done [#allocation3], 768
    $region41: #{decoder_forward.1} parent=1 // pred_fallthru
      _
    // Predicated region
    $region42: #{decoder_forward.1} parent=1 // pred_check
      _
    $region43: #{decoder_forward.1} parent=1 // pred_check_branch
      %115 = sbr.rel (0) target = $region45
    $region44: #{decoder_forward.1} parent=1 // pred_region
      %116 = dma.done [#allocation5], 96
    $region45: #{decoder_forward.1} parent=1 // pred_fallthru
      _
    // Predicated region
    $region46: #{decoder_forward.1} parent=1 // pred_check
      _
    $region47: #{decoder_forward.1} parent=1 // pred_check_branch
      %118 = sbr.rel (0) target = $region49
    $region48: #{decoder_forward.1} parent=1 // pred_region
      %119 = dma.done [#allocation5], 2304
    $region49: #{decoder_forward.1} parent=1 // pred_fallthru
      _
    // Predicated region
    $region50: #{decoder_forward.1} parent=1 // pred_check
      _
    $region51: #{decoder_forward.1} parent=1 // pred_check_branch
      %121 = sbr.rel (0) target = $region53
    $region52: #{decoder_forward.1} parent=1 // pred_region
      %122 = dma.done [#allocation8], 16
    $region53: #{decoder_forward.1} parent=1 // pred_fallthru
      _
    // Predicated region
    $region54: #{decoder_forward.1} parent=1 // pred_check
      _
    $region55: #{decoder_forward.1} parent=1 // pred_check_branch
      %124 = sbr.rel (0) target = $region57
    $region56: #{decoder_forward.1} parent=1 // pred_region
      %125 = dma.done [#allocation8], 2304
    $region57: #{decoder_forward.1} parent=1 // pred_fallthru
      _
    // Predicated region
    $region58: #{decoder_forward.1} parent=1 // pred_check
      _
    $region59: #{decoder_forward.1} parent=1 // pred_check_branch
      %127 = sbr.rel (0) target = $region61
    $region60: #{decoder_forward.1} parent=1 // pred_region
      %128 = dma.done [#allocation11], 16
    $region61: #{decoder_forward.1} parent=1 // pred_fallthru
      _
    // Predicated region
    $region62: #{decoder_forward.1} parent=1 // pred_check
      _
    $region63: #{decoder_forward.1} parent=1 // pred_check_branch
      %130 = sbr.rel (0) target = $region65
    $region64: #{decoder_forward.1} parent=1 // pred_region
      %131 = dma.done [#allocation11], 6912
    $region65: #{decoder_forward.1} parent=1 // pred_fallthru
      _
    // Predicated region
    $region66: #{decoder_forward.1} parent=1 // pred_check
      _
    $region67: #{decoder_forward.1} parent=1 // pred_check_branch
      %133 = sbr.rel (0) target = $region69
    $region68: #{decoder_forward.1} parent=1 // pred_region
      %134 = dma.done [#allocation14], 48
    $region69: #{decoder_forward.1} parent=1 // pred_fallthru
      _
    %v136 = vld [vmem:[%s0] sm:$0xff]
    %v137 = vpack.c.bf16 %v136, %v136
    %v138 = vld [vmem:[#allocation2] sm:$0xf]
    %v139 = vld [vmem:[#allocation2 + $0x4] sm:$0xf]
    %v140 = vld [vmem:[#allocation4] sm:$0x1]
    %v142 = vlaneseq
    %v143 = vshrl.u32 %v142, 7
    %v144 = vsub.s32 0, %v143
    %v145 = vrot.slane %v140, %v144
    %v149 = vunpack.c.l.b16 %v138
    %v150 = vunpack.c.l.b16 %v139
    %v151 = vpack.c.b16 %v150, %v149
    %vm153 = vcmask 130048
    %v155 = vsel %vm153, %v137, 0
    %157 = vmatprep.subr.bf16.mxu0 0
    %158 = vmatpush1.bf16.msra.mxu0 %v151
    %159 = vmatprep.subr.bf16.mxu0 0
    %160 = vmatpush1.bf16.msra.mxu0 0
    %161 = vmatprep.subr.bf16.mxu0 0
    %162 = vmatpush1.bf16.msra.mxu0 0
    %163 = vmatprep.subr.bf16.mxu0 0
    %164 = vmatpush1.bf16.msra.mxu0 0
    %165 = vmatprep.subr.bf16.mxu0 0
    %166 = vmatpush1.bf16.msra.mxu0 0
    %167 = vmatprep.subr.bf16.mxu0 0
    %168 = vmatpush1.bf16.msra.mxu0 0
    %169 = vmatprep.subr.bf16.mxu0 0
    %170 = vmatpush1.bf16.msra.mxu0 0
    %171 = vmatprep.subr.bf16.mxu0 0
    %172 = vmatpush1.bf16.msra.mxu0 0
    %173 = vmatprep.subr.bf16.mxu0 0
    %174 = vmatpush1.bf16.msra.mxu0 0
    %175 = vmatprep.subr.bf16.mxu0 0
    %176 = vmatpush1.bf16.msra.mxu0 0
    %177 = vmatprep.subr.bf16.mxu0 0
    %178 = vmatpush1.bf16.msra.mxu0 0
    %179 = vmatprep.subr.bf16.mxu0 0
    %180 = vmatpush1.bf16.msra.mxu0 0
    %181 = vmatprep.subr.bf16.mxu0 0
    %182 = vmatpush1.bf16.msra.mxu0 0
    %183 = vmatprep.subr.bf16.mxu0 0
    %184 = vmatpush1.bf16.msra.mxu0 0
    %185 = vmatprep.subr.bf16.mxu0 0
    %186 = vmatpush1.bf16.msra.mxu0 0
    %187 = vmatprep.subr.bf16.mxu0 0
    %188 = vmatpush1.bf16.msra.mxu0 0
    %189 = vmatprep.mubr.bf16.mxu0 0
    %190 = vmatmul.mubr.bf16.gmra.mrb[0].mxu0 %v155
    %v191 = vpop.f32.mrb[0].mxu0
    %v192 = vadd.f32 %v145, %v191
    %v193 = vpop.f32.mrb[0].mxu0
    %v194 = vpop.f32.mrb[0].mxu0
    %v195 = vpop.f32.mrb[0].mxu0
    %196 = vdwg.mxu0
    %s197 = scalar_lea.vmem [#allocation2], 8
    %v198 = vld [vmem:[%s197] sm:$0xf]
    %v199 = vld [vmem:[%s197 + $0x4] sm:$0xf]
    %s200 = scalar_lea.vmem [#allocation4], 1
    %v201 = vld [vmem:[%s200] sm:$0x1]
    %v203 = vlaneseq
    %v204 = vshrl.u32 %v203, 7
    %v205 = vsub.s32 0, %v204
    %v206 = vrot.slane %v201, %v205
    %v210 = vunpack.c.l.b16 %v198
    %v211 = vunpack.c.l.b16 %v199
    %v212 = vpack.c.b16 %v211, %v210
    %214 = vmatprep.subr.bf16.mxu0 0
    %215 = vmatpush1.bf16.msra.mxu0 %v212
    %216 = vmatprep.subr.bf16.mxu0 0
    %217 = vmatpush1.bf16.msra.mxu0 0
    %218 = vmatprep.subr.bf16.mxu0 0
    %219 = vmatpush1.bf16.msra.mxu0 0
    %220 = vmatprep.subr.bf16.mxu0 0
    %221 = vmatpush1.bf16.msra.mxu0 0
    %222 = vmatprep.subr.bf16.mxu0 0
    %223 = vmatpush1.bf16.msra.mxu0 0
    %224 = vmatprep.subr.bf16.mxu0 0
    %225 = vmatpush1.bf16.msra.mxu0 0
    %226 = vmatprep.subr.bf16.mxu0 0
    %227 = vmatpush1.bf16.msra.mxu0 0
    %228 = vmatprep.subr.bf16.mxu0 0
    %229 = vmatpush1.bf16.msra.mxu0 0
    %230 = vmatprep.subr.bf16.mxu0 0
    %231 = vmatpush1.bf16.msra.mxu0 0
    %232 = vmatprep.subr.bf16.mxu0 0
    %233 = vmatpush1.bf16.msra.mxu0 0
    %234 = vmatprep.subr.bf16.mxu0 0
    %235 = vmatpush1.bf16.msra.mxu0 0
    %236 = vmatprep.subr.bf16.mxu0 0
    %237 = vmatpush1.bf16.msra.mxu0 0
    %238 = vmatprep.subr.bf16.mxu0 0
    %239 = vmatpush1.bf16.msra.mxu0 0
    %240 = vmatprep.subr.bf16.mxu0 0
    %241 = vmatpush1.bf16.msra.mxu0 0
    %242 = vmatprep.subr.bf16.mxu0 0
    %243 = vmatpush1.bf16.msra.mxu0 0
    %244 = vmatprep.subr.bf16.mxu0 0
    %245 = vmatpush1.bf16.msra.mxu0 0
    %246 = vmatprep.mubr.bf16.mxu0 0
    %247 = vmatmul.mubr.bf16.gmra.mrb[0].mxu0 %v155
    %v248 = vpop.f32.mrb[0].mxu0
    %v249 = vadd.f32 %v206, %v248
    %v250 = vpop.f32.mrb[0].mxu0
    %v251 = vpop.f32.mrb[0].mxu0
    %v252 = vpop.f32.mrb[0].mxu0
    %253 = vdwg.mxu0
    %s254 = scalar_lea.vmem [#allocation2], 16
    %v255 = vld [vmem:[%s254] sm:$0xf]
    %v256 = vld [vmem:[%s254 + $0x4] sm:$0xf]
    %s257 = scalar_lea.vmem [#allocation4], 2
    %v258 = vld [vmem:[%s257] sm:$0x1]
    %v260 = vlaneseq
    %v261 = vshrl.u32 %v260, 7
    %v262 = vsub.s32 0, %v261
    %v263 = vrot.slane %v258, %v262
    %v267 = vunpack.c.l.b16 %v255
    %v268 = vunpack.c.l.b16 %v256
    %v269 = vpack.c.b16 %v268, %v267
    %271 = vmatprep.subr.bf16.mxu0 0
    %272 = vmatpush1.bf16.msra.mxu0 %v269
    %273 = vmatprep.subr.bf16.mxu0 0
    %274 = vmatpush1.bf16.msra.mxu0 0
    %275 = vmatprep.subr.bf16.mxu0 0
    %276 = vmatpush1.bf16.msra.mxu0 0
    %277 = vmatprep.subr.bf16.mxu0 0
    %278 = vmatpush1.bf16.msra.mxu0 0
    %279 = vmatprep.subr.bf16.mxu0 0
    %280 = vmatpush1.bf16.msra.mxu0 0
    %281 = vmatprep.subr.bf16.mxu0 0
    %282 = vmatpush1.bf16.msra.mxu0 0
    %283 = vmatprep.subr.bf16.mxu0 0
    %284 = vmatpush1.bf16.msra.mxu0 0
    %285 = vmatprep.subr.bf16.mxu0 0
    %286 = vmatpush1.bf16.msra.mxu0 0
    %287 = vmatprep.subr.bf16.mxu0 0
    %288 = vmatpush1.bf16.msra.mxu0 0
    %289 = vmatprep.subr.bf16.mxu0 0
    %290 = vmatpush1.bf16.msra.mxu0 0
    %291 = vmatprep.subr.bf16.mxu0 0
    %292 = vmatpush1.bf16.msra.mxu0 0
    %293 = vmatprep.subr.bf16.mxu0 0
    %294 = vmatpush1.bf16.msra.mxu0 0
    %295 = vmatprep.subr.bf16.mxu0 0
    %296 = vmatpush1.bf16.msra.mxu0 0
    %297 = vmatprep.subr.bf16.mxu0 0
    %298 = vmatpush1.bf16.msra.mxu0 0
    %299 = vmatprep.subr.bf16.mxu0 0
    %300 = vmatpush1.bf16.msra.mxu0 0
    %301 = vmatprep.subr.bf16.mxu0 0
    %302 = vmatpush1.bf16.msra.mxu0 0
    %303 = vmatprep.mubr.bf16.mxu0 0
    %304 = vmatmul.mubr.bf16.gmra.mrb[0].mxu0 %v155
    %v305 = vpop.f32.mrb[0].mxu0
    %v306 = vadd.f32 %v263, %v305
    %v307 = vpop.f32.mrb[0].mxu0
    %v308 = vpop.f32.mrb[0].mxu0
    %v309 = vpop.f32.mrb[0].mxu0
    %310 = vdwg.mxu0
    %s311 = scalar_lea.vmem [#allocation2], 24
    %v312 = vld [vmem:[%s311] sm:$0xf]
    %v313 = vld [vmem:[%s311 + $0x4] sm:$0xf]
    %s314 = scalar_lea.vmem [#allocation4], 3
    %v315 = vld [vmem:[%s314] sm:$0x1]
    %v317 = vlaneseq
    %v318 = vshrl.u32 %v317, 7
    %v319 = vsub.s32 0, %v318
    %v320 = vrot.slane %v315, %v319
    %v324 = vunpack.c.l.b16 %v312
    %v325 = vunpack.c.l.b16 %v313
    %v326 = vpack.c.b16 %v325, %v324
    %328 = vmatprep.subr.bf16.mxu0 0
    %329 = vmatpush1.bf16.msra.mxu0 %v326
    %330 = vmatprep.subr.bf16.mxu0 0
    %331 = vmatpush1.bf16.msra.mxu0 0
    %332 = vmatprep.subr.bf16.mxu0 0
    %333 = vmatpush1.bf16.msra.mxu0 0
    %334 = vmatprep.subr.bf16.mxu0 0
    %335 = vmatpush1.bf16.msra.mxu0 0
    %336 = vmatprep.subr.bf16.mxu0 0
    %337 = vmatpush1.bf16.msra.mxu0 0
    %338 = vmatprep.subr.bf16.mxu0 0
    %339 = vmatpush1.bf16.msra.mxu0 0
    %340 = vmatprep.subr.bf16.mxu0 0
    %341 = vmatpush1.bf16.msra.mxu0 0
    %342 = vmatprep.subr.bf16.mxu0 0
    %343 = vmatpush1.bf16.msra.mxu0 0
    %344 = vmatprep.subr.bf16.mxu0 0
    %345 = vmatpush1.bf16.msra.mxu0 0
    %346 = vmatprep.subr.bf16.mxu0 0
    %347 = vmatpush1.bf16.msra.mxu0 0
    %348 = vmatprep.subr.bf16.mxu0 0
    %349 = vmatpush1.bf16.msra.mxu0 0
    %350 = vmatprep.subr.bf16.mxu0 0
    %351 = vmatpush1.bf16.msra.mxu0 0
    %352 = vmatprep.subr.bf16.mxu0 0
    %353 = vmatpush1.bf16.msra.mxu0 0
    %354 = vmatprep.subr.bf16.mxu0 0
    %355 = vmatpush1.bf16.msra.mxu0 0
    %356 = vmatprep.subr.bf16.mxu0 0
    %357 = vmatpush1.bf16.msra.mxu0 0
    %358 = vmatprep.subr.bf16.mxu0 0
    %359 = vmatpush1.bf16.msra.mxu0 0
    %360 = vmatprep.mubr.bf16.mxu0 0
    %361 = vmatmul.mubr.bf16.gmra.mrb[0].mxu0 %v155
    %v362 = vpop.f32.mrb[0].mxu0
    %v363 = vadd.f32 %v320, %v362
    %v364 = vpop.f32.mrb[0].mxu0
    %v365 = vpop.f32.mrb[0].mxu0
    %v366 = vpop.f32.mrb[0].mxu0
    %367 = vdwg.mxu0
    %s368 = scalar_lea.vmem [#allocation2], 32
    %v369 = vld [vmem:[%s368] sm:$0xf]
    %v370 = vld [vmem:[%s368 + $0x4] sm:$0xf]
    %s371 = scalar_lea.vmem [#allocation4], 4
    %v372 = vld [vmem:[%s371] sm:$0x1]
    %v374 = vlaneseq
    %v375 = vshrl.u32 %v374, 7
    %v376 = vsub.s32 0, %v375
    %v377 = vrot.slane %v372, %v376
    %v381 = vunpack.c.l.b16 %v369
    %v382 = vunpack.c.l.b16 %v370
    %v383 = vpack.c.b16 %v382, %v381
    %385 = vmatprep.subr.bf16.mxu0 0
    %386 = vmatpush1.bf16.msra.mxu0 %v383
    %387 = vmatprep.subr.bf16.mxu0 0
    %388 = vmatpush1.bf16.msra.mxu0 0
    %389 = vmatprep.subr.bf16.mxu0 0
    %390 = vmatpush1.bf16.msra.mxu0 0
    %391 = vmatprep.subr.bf16.mxu0 0
    %392 = vmatpush1.bf16.msra.mxu0 0
    %393 = vmatprep.subr.bf16.mxu0 0
    %394 = vmatpush1.bf16.msra.mxu0 0
    %395 = vmatprep.subr.bf16.mxu0 0
    %396 = vmatpush1.bf16.msra.mxu0 0
    %397 = vmatprep.subr.bf16.mxu0 0
    %398 = vmatpush1.bf16.msra.mxu0 0
    %399 = vmatprep.subr.bf16.mxu0 0
    %400 = vmatpush1.bf16.msra.mxu0 0
    %401 = vmatprep.subr.bf16.mxu0 0
    %402 = vmatpush1.bf16.msra.mxu0 0
    %403 = vmatprep.subr.bf16.mxu0 0
    %404 = vmatpush1.bf16.msra.mxu0 0
    %405 = vmatprep.subr.bf16.mxu0 0
    %406 = vmatpush1.bf16.msra.mxu0 0
    %407 = vmatprep.subr.bf16.mxu0 0
    %408 = vmatpush1.bf16.msra.mxu0 0
    %409 = vmatprep.subr.bf16.mxu0 0
    %410 = vmatpush1.bf16.msra.mxu0 0
    %411 = vmatprep.subr.bf16.mxu0 0
    %412 = vmatpush1.bf16.msra.mxu0 0
    %413 = vmatprep.subr.bf16.mxu0 0
    %414 = vmatpush1.bf16.msra.mxu0 0
    %415 = vmatprep.subr.bf16.mxu0 0
    %416 = vmatpush1.bf16.msra.mxu0 0
    %417 = vmatprep.mubr.bf16.mxu0 0
    %418 = vmatmul.mubr.bf16.gmra.mrb[0].mxu0 %v155
    %v419 = vpop.f32.mrb[0].mxu0
    %v420 = vadd.f32 %v377, %v419
    %v421 = vpop.f32.mrb[0].mxu0
    %v422 = vpop.f32.mrb[0].mxu0
    %v423 = vpop.f32.mrb[0].mxu0
    %424 = vdwg.mxu0
    %s425 = scalar_lea.vmem [#allocation2], 40
    %v426 = vld [vmem:[%s425] sm:$0xf]
    %v427 = vld [vmem:[%s425 + $0x4] sm:$0xf]
    %s428 = scalar_lea.vmem [#allocation4], 5
    %v429 = vld [vmem:[%s428] sm:$0x1]
    %v431 = vlaneseq
    %v432 = vshrl.u32 %v431, 7
    %v433 = vsub.s32 0, %v432
    %v434 = vrot.slane %v429, %v433
    %v438 = vunpack.c.l.b16 %v426
    %v439 = vunpack.c.l.b16 %v427
    %v440 = vpack.c.b16 %v439, %v438
    %442 = vmatprep.subr.bf16.mxu0 0
    %443 = vmatpush1.bf16.msra.mxu0 %v440
    %444 = vmatprep.subr.bf16.mxu0 0
    %445 = vmatpush1.bf16.msra.mxu0 0
    %446 = vmatprep.subr.bf16.mxu0 0
    %447 = vmatpush1.bf16.msra.mxu0 0
    %448 = vmatprep.subr.bf16.mxu0 0
    %449 = vmatpush1.bf16.msra.mxu0 0
    %450 = vmatprep.subr.bf16.mxu0 0
    %451 = vmatpush1.bf16.msra.mxu0 0
    %452 = vmatprep.subr.bf16.mxu0 0
    %453 = vmatpush1.bf16.msra.mxu0 0
    %454 = vmatprep.subr.bf16.mxu0 0
    %455 = vmatpush1.bf16.msra.mxu0 0
    %456 = vmatprep.subr.bf16.mxu0 0
    %457 = vmatpush1.bf16.msra.mxu0 0
    %458 = vmatprep.subr.bf16.mxu0 0
    %459 = vmatpush1.bf16.msra.mxu0 0
    %460 = vmatprep.subr.bf16.mxu0 0
    %461 = vmatpush1.bf16.msra.mxu0 0
    %462 = vmatprep.subr.bf16.mxu0 0
    %463 = vmatpush1.bf16.msra.mxu0 0
    %464 = vmatprep.subr.bf16.mxu0 0
    %465 = vmatpush1.bf16.msra.mxu0 0
    %466 = vmatprep.subr.bf16.mxu0 0
    %467 = vmatpush1.bf16.msra.mxu0 0
    %468 = vmatprep.subr.bf16.mxu0 0
    %469 = vmatpush1.bf16.msra.mxu0 0
    %470 = vmatprep.subr.bf16.mxu0 0
    %471 = vmatpush1.bf16.msra.mxu0 0
    %472 = vmatprep.subr.bf16.mxu0 0
    %473 = vmatpush1.bf16.msra.mxu0 0
    %474 = vmatprep.mubr.bf16.mxu0 0
    %475 = vmatmul.mubr.bf16.gmra.mrb[0].mxu0 %v155
    %v476 = vpop.f32.mrb[0].mxu0
    %v477 = vadd.f32 %v434, %v476
    %v478 = vpop.f32.mrb[0].mxu0
    %v479 = vpop.f32.mrb[0].mxu0
    %v480 = vpop.f32.mrb[0].mxu0
    %481 = vdwg.mxu0
    %v482 = vmax.f32 %v192, 0.0
    %v483 = vmax.f32 %v249, 0.0
    %v484 = vmax.f32 %v306, 0.0
    %v485 = vmax.f32 %v363, 0.0
    %v486 = vmax.f32 %v420, 0.0
    %v487 = vmax.f32 %v477, 0.0
    %v488 = vpack.c.bf16 %v483, %v482
    %v489 = vpack.c.bf16 %v485, %v484
    %v490 = vpack.c.bf16 %v487, %v486
    %v491 = vpack.c.bf16 %v484, %v483
    %v492 = vpack.c.bf16 %v486, %v485
    %v493 = vpack.c.bf16 0.0, %v487
    %v494 = vld [vmem:[#allocation7] sm:$0x1]
    %v495 = vld [vmem:[#allocation6] sm:$0xf]
    %v496 = vld [vmem:[#allocation6 + $0x4] sm:$0xf]
    %v497 = vld [vmem:[#allocation6 + $0x8] sm:$0xf]
    %v498 = vld [vmem:[#allocation6 + $0xc] sm:$0xf]
    %v499 = vld [vmem:[#allocation6 + $0x10] sm:$0xf]
    %v500 = vld [vmem:[#allocation6 + $0x14] sm:$0xf]
    %v501 = vld [vmem:[#allocation6 + $0x18] sm:$0xf]
    %v502 = vld [vmem:[#allocation6 + $0x1c] sm:$0xf]
    %v503 = vld [vmem:[#allocation6 + $0x20] sm:$0xf]
    %v504 = vld [vmem:[#allocation6 + $0x24] sm:$0xf]
    %v505 = vld [vmem:[#allocation6 + $0x28] sm:$0xf]
    %v506 = vld [vmem:[#allocation6 + $0x2c] sm:$0xf]
    %v508 = vlaneseq
    %v509 = vshrl.u32 %v508, 7
    %v510 = vsub.s32 0, %v509
    %v511 = vrot.slane %v494, %v510
    %v525 = vunpack.c.l.b16 %v495
    %v526 = vunpack.c.l.b16 %v496
    %v527 = vunpack.c.l.b16 %v497
    %v528 = vunpack.c.l.b16 %v498
    %v529 = vunpack.c.l.b16 %v499
    %v530 = vunpack.c.l.b16 %v500
    %v531 = vunpack.c.l.b16 %v501
    %v532 = vunpack.c.l.b16 %v502
    %v533 = vunpack.c.l.b16 %v503
    %v534 = vunpack.c.l.b16 %v504
    %v535 = vunpack.c.l.b16 %v505
    %v536 = vunpack.c.l.b16 %v506
    %v537 = vpack.c.b16 %v526, %v525
    %v538 = vpack.c.b16 %v528, %v527
    %v539 = vpack.c.b16 %v530, %v529
    %v540 = vpack.c.b16 %v532, %v531
    %v541 = vpack.c.b16 %v534, %v533
    %v542 = vpack.c.b16 %v536, %v535
    %vm549 = vcmask 785408
    %v551 = vsel %vm549, %v488, 0
    %v554 = vsel %vm549, %v489, 0
    %v557 = vsel %vm549, %v490, 0
    %559 = vmatprep.subr.bf16.mxu0 0
    %560 = vmatpush1.bf16.msra.mxu0 %v537
    %561 = vmatprep.subr.bf16.mxu0 0
    %562 = vmatpush1.bf16.msra.mxu0 %v538
    %563 = vmatprep.subr.bf16.mxu0 0
    %564 = vmatpush1.bf16.msra.mxu0 %v539
    %565 = vmatprep.subr.bf16.mxu0 0
    %566 = vmatpush1.bf16.msra.mxu0 %v540
    %567 = vmatprep.subr.bf16.mxu0 0
    %568 = vmatpush1.bf16.msra.mxu0 %v541
    %569 = vmatprep.subr.bf16.mxu0 0
    %570 = vmatpush1.bf16.msra.mxu0 %v542
    %571 = vmatprep.subr.bf16.mxu0 0
    %572 = vmatpush1.bf16.msra.mxu0 0
    %573 = vmatprep.subr.bf16.mxu0 0
    %574 = vmatpush1.bf16.msra.mxu0 0
    %575 = vmatprep.subr.bf16.mxu0 0
    %576 = vmatpush1.bf16.msra.mxu0 0
    %577 = vmatprep.subr.bf16.mxu0 0
    %578 = vmatpush1.bf16.msra.mxu0 0
    %579 = vmatprep.subr.bf16.mxu0 0
    %580 = vmatpush1.bf16.msra.mxu0 0
    %581 = vmatprep.subr.bf16.mxu0 0
    %582 = vmatpush1.bf16.msra.mxu0 0
    %583 = vmatprep.subr.bf16.mxu0 0
    %584 = vmatpush1.bf16.msra.mxu0 0
    %585 = vmatprep.subr.bf16.mxu0 0
    %586 = vmatpush1.bf16.msra.mxu0 0
    %587 = vmatprep.subr.bf16.mxu0 0
    %588 = vmatpush1.bf16.msra.mxu0 0
    %589 = vmatprep.subr.bf16.mxu0 0
    %590 = vmatpush1.bf16.msra.mxu0 0
    %591 = vmatprep.mubr.bf16.mxu0 0
    %592 = vmatmul.mubr.bf16.gmra.mrb[0].mxu0 %v551
    %v593 = vpop.f32.mrb[0].mxu0
    %v594 = vadd.f32 %v511, %v593
    %v595 = vpop.f32.mrb[0].mxu0
    %v596 = vpop.f32.mrb[0].mxu0
    %v597 = vadd.f32 %v511, %v596
    %v598 = vpop.f32.mrb[0].mxu0
    %599 = vmatprep.mubr.bf16.mxu0 0
    %600 = vmatmul.mubr.bf16.gmra.mrb[0].mxu0 %v554
    %v601 = vpop.f32.mrb[0].mxu0
    %v602 = vadd.f32 %v511, %v601
    %v603 = vpop.f32.mrb[0].mxu0
    %v604 = vpop.f32.mrb[0].mxu0
    %v605 = vadd.f32 %v511, %v604
    %v606 = vpop.f32.mrb[0].mxu0
    %607 = vmatprep.mubr.bf16.mxu0 0
    %608 = vmatmul.mubr.bf16.gmra.mrb[0].mxu0 %v557
    %v609 = vpop.f32.mrb[0].mxu0
    %v610 = vadd.f32 %v511, %v609
    %v611 = vpop.f32.mrb[0].mxu0
    %v612 = vpop.f32.mrb[0].mxu0
    %v613 = vadd.f32 %v511, %v612
    %v614 = vpop.f32.mrb[0].mxu0
    %615 = vdwg.mxu0
    %s616 = scalar_lea.vmem [#allocation6], 48
    %v617 = vld [vmem:[%s616] sm:$0xf]
    %v618 = vld [vmem:[%s616 + $0x4] sm:$0xf]
    %v619 = vld [vmem:[%s616 + $0x8] sm:$0xf]
    %v620 = vld [vmem:[%s616 + $0xc] sm:$0xf]
    %v621 = vld [vmem:[%s616 + $0x10] sm:$0xf]
    %v622 = vld [vmem:[%s616 + $0x14] sm:$0xf]
    %v623 = vld [vmem:[%s616 + $0x18] sm:$0xf]
    %v624 = vld [vmem:[%s616 + $0x1c] sm:$0xf]
    %v625 = vld [vmem:[%s616 + $0x20] sm:$0xf]
    %v626 = vld [vmem:[%s616 + $0x24] sm:$0xf]
    %v627 = vld [vmem:[%s616 + $0x28] sm:$0xf]
    %v628 = vld [vmem:[%s616 + $0x2c] sm:$0xf]
    %s629 = scalar_lea.vmem [#allocation6], 96
    %v630 = vld [vmem:[%s629] sm:$0xf]
    %v631 = vld [vmem:[%s629 + $0x4] sm:$0xf]
    %v632 = vld [vmem:[%s629 + $0x8] sm:$0xf]
    %v633 = vld [vmem:[%s629 + $0xc] sm:$0xf]
    %v634 = vld [vmem:[%s629 + $0x10] sm:$0xf]
    %v635 = vld [vmem:[%s629 + $0x14] sm:$0xf]
    %v636 = vld [vmem:[%s629 + $0x18] sm:$0xf]
    %v637 = vld [vmem:[%s629 + $0x1c] sm:$0xf]
    %v638 = vld [vmem:[%s629 + $0x20] sm:$0xf]
    %v639 = vld [vmem:[%s629 + $0x24] sm:$0xf]
    %v640 = vld [vmem:[%s629 + $0x28] sm:$0xf]
    %v641 = vld [vmem:[%s629 + $0x2c] sm:$0xf]
    %v654 = vunpack.c.l.b16 %v630
    %v655 = vunpack.c.l.b16 %v631
    %v656 = vunpack.c.l.b16 %v632
    %v657 = vunpack.c.l.b16 %v633
    %v658 = vunpack.c.l.b16 %v634
    %v659 = vunpack.c.l.b16 %v635
    %v660 = vunpack.c.l.b16 %v636
    %v661 = vunpack.c.l.b16 %v637
    %v662 = vunpack.c.l.b16 %v638
    %v663 = vunpack.c.l.b16 %v639
    %v664 = vunpack.c.l.b16 %v640
    %v665 = vunpack.c.l.b16 %v641
    %v666 = vpack.c.b16 %v655, %v654
    %v667 = vpack.c.b16 %v657, %v656
    %v668 = vpack.c.b16 %v659, %v658
    %v669 = vpack.c.b16 %v661, %v660
    %v670 = vpack.c.b16 %v663, %v662
    %v671 = vpack.c.b16 %v665, %v664
    %v679 = vsel %vm549, %v491, 0
    %v682 = vsel %vm549, %v492, 0
    %v685 = vsel %vm549, %v493, 0
    %687 = vmatprep.subr.bf16.mxu0 0
    %688 = vmatpush1.bf16.msra.mxu0 %v666
    %689 = vmatprep.subr.bf16.mxu0 0
    %690 = vmatpush1.bf16.msra.mxu0 %v667
    %691 = vmatprep.subr.bf16.mxu0 0
    %692 = vmatpush1.bf16.msra.mxu0 %v668
    %693 = vmatprep.subr.bf16.mxu0 0
    %694 = vmatpush1.bf16.msra.mxu0 %v669
    %695 = vmatprep.subr.bf16.mxu0 0
    %696 = vmatpush1.bf16.msra.mxu0 %v670
    %697 = vmatprep.subr.bf16.mxu0 0
    %698 = vmatpush1.bf16.msra.mxu0 %v671
    %699 = vmatprep.subr.bf16.mxu0 0
    %700 = vmatpush1.bf16.msra.mxu0 0
    %701 = vmatprep.subr.bf16.mxu0 0
    %702 = vmatpush1.bf16.msra.mxu0 0
    %703 = vmatprep.subr.bf16.mxu0 0
    %704 = vmatpush1.bf16.msra.mxu0 0
    %705 = vmatprep.subr.bf16.mxu0 0
    %706 = vmatpush1.bf16.msra.mxu0 0
    %707 = vmatprep.subr.bf16.mxu0 0
    %708 = vmatpush1.bf16.msra.mxu0 0
    %709 = vmatprep.subr.bf16.mxu0 0
    %710 = vmatpush1.bf16.msra.mxu0 0
    %711 = vmatprep.subr.bf16.mxu0 0
    %712 = vmatpush1.bf16.msra.mxu0 0
    %713 = vmatprep.subr.bf16.mxu0 0
    %714 = vmatpush1.bf16.msra.mxu0 0
    %715 = vmatprep.subr.bf16.mxu0 0
    %716 = vmatpush1.bf16.msra.mxu0 0
    %717 = vmatprep.subr.bf16.mxu0 0
    %718 = vmatpush1.bf16.msra.mxu0 0
    %719 = vmatprep.mubr.bf16.mxu0 0
    %720 = vmatmul.mubr.bf16.gmra.mrb[0].mxu0 %v679
    %v721 = vpop.f32.mrb[0].mxu0
    %v722 = vadd.f32 0.0, %v721
    %v723 = vpop.f32.mrb[0].mxu0
    %v724 = vpop.f32.mrb[0].mxu0
    %v725 = vadd.f32 0.0, %v724
    %v726 = vpop.f32.mrb[0].mxu0
    %727 = vmatprep.mubr.bf16.mxu0 0
    %728 = vmatmul.mubr.bf16.gmra.mrb[0].mxu0 %v682
    %v729 = vpop.f32.mrb[0].mxu0
    %v730 = vadd.f32 0.0, %v729
    %v731 = vpop.f32.mrb[0].mxu0
    %v732 = vpop.f32.mrb[0].mxu0
    %v733 = vadd.f32 0.0, %v732
    %v734 = vpop.f32.mrb[0].mxu0
    %735 = vmatprep.mubr.bf16.mxu0 0
    %736 = vmatmul.mubr.bf16.gmra.mrb[0].mxu0 %v685
    %v737 = vpop.f32.mrb[0].mxu0
    %v738 = vadd.f32 0.0, %v737
    %v739 = vpop.f32.mrb[0].mxu0
    %v740 = vpop.f32.mrb[0].mxu0
    %v741 = vadd.f32 0.0, %v740
    %v742 = vpop.f32.mrb[0].mxu0
    %743 = vdwg.mxu0
    %v756 = vunpack.c.l.b16 %v617
    %v757 = vunpack.c.l.b16 %v618
    %v758 = vunpack.c.l.b16 %v619
    %v759 = vunpack.c.l.b16 %v620
    %v760 = vunpack.c.l.b16 %v621
    %v761 = vunpack.c.l.b16 %v622
    %v762 = vunpack.c.l.b16 %v623
    %v763 = vunpack.c.l.b16 %v624
    %v764 = vunpack.c.l.b16 %v625
    %v765 = vunpack.c.l.b16 %v626
    %v766 = vunpack.c.l.b16 %v627
    %v767 = vunpack.c.l.b16 %v628
    %v768 = vpack.c.b16 %v757, %v756
    %v769 = vpack.c.b16 %v759, %v758
    %v770 = vpack.c.b16 %v761, %v760
    %v771 = vpack.c.b16 %v763, %v762
    %v772 = vpack.c.b16 %v765, %v764
    %v773 = vpack.c.b16 %v767, %v766
    %780 = vmatprep.subr.bf16.mxu0 0
    %781 = vmatpush1.bf16.msra.mxu0 %v768
    %782 = vmatprep.subr.bf16.mxu0 0
    %783 = vmatpush1.bf16.msra.mxu0 %v769
    %784 = vmatprep.subr.bf16.mxu0 0
    %785 = vmatpush1.bf16.msra.mxu0 %v770
    %786 = vmatprep.subr.bf16.mxu0 0
    %787 = vmatpush1.bf16.msra.mxu0 %v771
    %788 = vmatprep.subr.bf16.mxu0 0
    %789 = vmatpush1.bf16.msra.mxu0 %v772
    %790 = vmatprep.subr.bf16.mxu0 0
    %791 = vmatpush1.bf16.msra.mxu0 %v773
    %792 = vmatprep.subr.bf16.mxu0 0
    %793 = vmatpush1.bf16.msra.mxu0 0
    %794 = vmatprep.subr.bf16.mxu0 0
    %795 = vmatpush1.bf16.msra.mxu0 0
    %796 = vmatprep.subr.bf16.mxu0 0
    %797 = vmatpush1.bf16.msra.mxu0 0
    %798 = vmatprep.subr.bf16.mxu0 0
    %799 = vmatpush1.bf16.msra.mxu0 0
    %800 = vmatprep.subr.bf16.mxu0 0
    %801 = vmatpush1.bf16.msra.mxu0 0
    %802 = vmatprep.subr.bf16.mxu0 0
    %803 = vmatpush1.bf16.msra.mxu0 0
    %804 = vmatprep.subr.bf16.mxu0 0
    %805 = vmatpush1.bf16.msra.mxu0 0
    %806 = vmatprep.subr.bf16.mxu0 0
    %807 = vmatpush1.bf16.msra.mxu0 0
    %808 = vmatprep.subr.bf16.mxu0 0
    %809 = vmatpush1.bf16.msra.mxu0 0
    %810 = vmatprep.subr.bf16.mxu0 0
    %811 = vmatpush1.bf16.msra.mxu0 0
    %812 = vmatprep.mubr.bf16.mxu0 0
    %813 = vmatmul.mubr.bf16.gmra.mrb[0].mxu0 %v551
    %v814 = vpop.f32.mrb[0].mxu0
    %v815 = vadd.f32 %v722, %v814
    %v816 = vpop.f32.mrb[0].mxu0
    %v817 = vpop.f32.mrb[0].mxu0
    %v818 = vadd.f32 %v725, %v817
    %v819 = vpop.f32.mrb[0].mxu0
    %820 = vmatprep.mubr.bf16.mxu0 0
    %821 = vmatmul.mubr.bf16.gmra.mrb[0].mxu0 %v554
    %v822 = vpop.f32.mrb[0].mxu0
    %v823 = vadd.f32 %v730, %v822
    %v824 = vpop.f32.mrb[0].mxu0
    %v825 = vpop.f32.mrb[0].mxu0
    %v826 = vadd.f32 %v733, %v825
    %v827 = vpop.f32.mrb[0].mxu0
    %828 = vmatprep.mubr.bf16.mxu0 0
    %829 = vmatmul.mubr.bf16.gmra.mrb[0].mxu0 %v557
    %v830 = vpop.f32.mrb[0].mxu0
    %v831 = vadd.f32 %v738, %v830
    %v832 = vpop.f32.mrb[0].mxu0
    %v833 = vpop.f32.mrb[0].mxu0
    %v834 = vadd.f32 %v741, %v833
    %v835 = vpop.f32.mrb[0].mxu0
    %836 = vdwg.mxu0
    %v837 = vadd.f32 %v815, %v511
    %v838 = vadd.f32 %v818, %v511
    %v839 = vadd.f32 %v823, %v511
    %v840 = vadd.f32 %v826, %v511
    %v841 = vadd.f32 %v831, %v511
    %v842 = vadd.f32 %v834, %v511
    %v843 = vmax.f32 %v594, 0.0
    %v844 = vmax.f32 %v597, 0.0
    %v845 = vmax.f32 %v602, 0.0
    %v846 = vmax.f32 %v605, 0.0
    %v847 = vmax.f32 %v610, 0.0
    %v848 = vmax.f32 %v613, 0.0
    %v849 = vmax.f32 %v837, 0.0
    %v850 = vmax.f32 %v838, 0.0
    %v851 = vmax.f32 %v839, 0.0
    %v852 = vmax.f32 %v840, 0.0
    %v853 = vmax.f32 %v841, 0.0
    %v854 = vmax.f32 %v842, 0.0
    %v855 = vpack.c.bf16 %v849, %v843
    %v856 = vpack.c.bf16 %v850, %v844
    %v857 = vpack.c.bf16 %v851, %v845
    %v858 = vpack.c.bf16 %v852, %v846
    %v859 = vpack.c.bf16 %v853, %v847
    %v860 = vpack.c.bf16 %v854, %v848
    %v861 = vpack.c.bf16 %v844, %v849
    %v862 = vpack.c.bf16 %v845, %v850
    %v863 = vpack.c.bf16 %v846, %v851
    %v864 = vpack.c.bf16 %v847, %v852
    %v865 = vpack.c.bf16 %v848, %v853
    %v866 = vpack.c.bf16 0.0, %v854
    %v867 = vld [vmem:[#allocation10] sm:$0x1]
    %v868 = vld [vmem:[#allocation9] sm:$0xf]
    %v869 = vld [vmem:[#allocation9 + $0x4] sm:$0xf]
    %v870 = vld [vmem:[#allocation9 + $0x8] sm:$0xf]
    %v871 = vld [vmem:[#allocation9 + $0xc] sm:$0xf]
    %v872 = vld [vmem:[#allocation9 + $0x10] sm:$0xf]
    %v873 = vld [vmem:[#allocation9 + $0x14] sm:$0xf]
    %v874 = vld [vmem:[#allocation9 + $0x18] sm:$0xf]
    %v875 = vld [vmem:[#allocation9 + $0x1c] sm:$0xf]
    %v876 = vld [vmem:[#allocation9 + $0x20] sm:$0xf]
    %v877 = vld [vmem:[#allocation9 + $0x24] sm:$0xf]
    %v878 = vld [vmem:[#allocation9 + $0x28] sm:$0xf]
    %v879 = vld [vmem:[#allocation9 + $0x2c] sm:$0xf]
    %v881 = vlaneseq
    %v882 = vshrl.u32 %v881, 7
    %v883 = vsub.s32 0, %v882
    %v884 = vrot.slane %v867, %v883
    %v898 = vunpack.c.l.b16 %v868
    %v899 = vunpack.c.l.b16 %v869
    %v900 = vunpack.c.l.b16 %v870
    %v901 = vunpack.c.l.b16 %v871
    %v902 = vunpack.c.l.b16 %v872
    %v903 = vunpack.c.l.b16 %v873
    %v904 = vunpack.c.l.b16 %v874
    %v905 = vunpack.c.l.b16 %v875
    %v906 = vunpack.c.l.b16 %v876
    %v907 = vunpack.c.l.b16 %v877
    %v908 = vunpack.c.l.b16 %v878
    %v909 = vunpack.c.l.b16 %v879
    %v910 = vpack.c.b16 %v899, %v898
    %v911 = vpack.c.b16 %v901, %v900
    %v912 = vpack.c.b16 %v903, %v902
    %v913 = vpack.c.b16 %v905, %v904
    %v914 = vpack.c.b16 %v907, %v906
    %v915 = vpack.c.b16 %v909, %v908
    %v923 = vsel %vm549, %v855, 0
    %v926 = vsel %vm549, %v856, 0
    %v929 = vsel %vm549, %v857, 0
    %v932 = vsel %vm549, %v858, 0
    %v935 = vsel %vm549, %v859, 0
    %v938 = vsel %vm549, %v860, 0
    %940 = vmatprep.subr.bf16.mxu0 0
    %941 = vmatpush1.bf16.msra.mxu0 %v910
    %942 = vmatprep.subr.bf16.mxu0 0
    %943 = vmatpush1.bf16.msra.mxu0 %v911
    %944 = vmatprep.subr.bf16.mxu0 0
    %945 = vmatpush1.bf16.msra.mxu0 %v912
    %946 = vmatprep.subr.bf16.mxu0 0
    %947 = vmatpush1.bf16.msra.mxu0 %v913
    %948 = vmatprep.subr.bf16.mxu0 0
    %949 = vmatpush1.bf16.msra.mxu0 %v914
    %950 = vmatprep.subr.bf16.mxu0 0
    %951 = vmatpush1.bf16.msra.mxu0 %v915
    %952 = vmatprep.subr.bf16.mxu0 0
    %953 = vmatpush1.bf16.msra.mxu0 0
    %954 = vmatprep.subr.bf16.mxu0 0
    %955 = vmatpush1.bf16.msra.mxu0 0
    %956 = vmatprep.subr.bf16.mxu0 0
    %957 = vmatpush1.bf16.msra.mxu0 0
    %958 = vmatprep.subr.bf16.mxu0 0
    %959 = vmatpush1.bf16.msra.mxu0 0
    %960 = vmatprep.subr.bf16.mxu0 0
    %961 = vmatpush1.bf16.msra.mxu0 0
    %962 = vmatprep.subr.bf16.mxu0 0
    %963 = vmatpush1.bf16.msra.mxu0 0
    %964 = vmatprep.subr.bf16.mxu0 0
    %965 = vmatpush1.bf16.msra.mxu0 0
    %966 = vmatprep.subr.bf16.mxu0 0
    %967 = vmatpush1.bf16.msra.mxu0 0
    %968 = vmatprep.subr.bf16.mxu0 0
    %969 = vmatpush1.bf16.msra.mxu0 0
    %970 = vmatprep.subr.bf16.mxu0 0
    %971 = vmatpush1.bf16.msra.mxu0 0
    %972 = vmatprep.mubr.bf16.mxu0 0
    %973 = vmatmul.mubr.bf16.gmra.mrb[0].mxu0 %v923
    %v974 = vpop.f32.mrb[0].mxu0
    %v975 = vadd.f32 %v884, %v974
    %v976 = vpop.f32.mrb[0].mxu0
    %v977 = vpop.f32.mrb[0].mxu0
    %v978 = vadd.f32 %v884, %v977
    %v979 = vpop.f32.mrb[0].mxu0
    %980 = vmatprep.mubr.bf16.mxu0 0
    %981 = vmatmul.mubr.bf16.gmra.mrb[0].mxu0 %v926
    %v982 = vpop.f32.mrb[0].mxu0
    %v983 = vadd.f32 %v884, %v982
    %v984 = vpop.f32.mrb[0].mxu0
    %v985 = vpop.f32.mrb[0].mxu0
    %v986 = vadd.f32 %v884, %v985
    %v987 = vpop.f32.mrb[0].mxu0
    %988 = vmatprep.mubr.bf16.mxu0 0
    %989 = vmatmul.mubr.bf16.gmra.mrb[0].mxu0 %v929
    %v990 = vpop.f32.mrb[0].mxu0
    %v991 = vadd.f32 %v884, %v990
    %v992 = vpop.f32.mrb[0].mxu0
    %v993 = vpop.f32.mrb[0].mxu0
    %v994 = vadd.f32 %v884, %v993
    %v995 = vpop.f32.mrb[0].mxu0
    %996 = vmatprep.mubr.bf16.mxu0 0
    %997 = vmatmul.mubr.bf16.gmra.mrb[0].mxu0 %v932
    %v998 = vpop.f32.mrb[0].mxu0
    %v999 = vadd.f32 %v884, %v998
    %v1000 = vpop.f32.mrb[0].mxu0
    %v1001 = vpop.f32.mrb[0].mxu0
    %v1002 = vadd.f32 %v884, %v1001
    %v1003 = vpop.f32.mrb[0].mxu0
    %1004 = vmatprep.mubr.bf16.mxu0 0
    %1005 = vmatmul.mubr.bf16.gmra.mrb[0].mxu0 %v935
    %v1006 = vpop.f32.mrb[0].mxu0
    %v1007 = vadd.f32 %v884, %v1006
    %v1008 = vpop.f32.mrb[0].mxu0
    %v1009 = vpop.f32.mrb[0].mxu0
    %v1010 = vadd.f32 %v884, %v1009
    %v1011 = vpop.f32.mrb[0].mxu0
    %1012 = vmatprep.mubr.bf16.mxu0 0
    %1013 = vmatmul.mubr.bf16.gmra.mrb[0].mxu0 %v938
    %v1014 = vpop.f32.mrb[0].mxu0
    %v1015 = vadd.f32 %v884, %v1014
    %v1016 = vpop.f32.mrb[0].mxu0
    %v1017 = vpop.f32.mrb[0].mxu0
    %v1018 = vadd.f32 %v884, %v1017
    %v1019 = vpop.f32.mrb[0].mxu0
    %1020 = vdwg.mxu0
    %s1021 = scalar_lea.vmem [#allocation9], 48
    %v1022 = vld [vmem:[%s1021] sm:$0xf]
    %v1023 = vld [vmem:[%s1021 + $0x4] sm:$0xf]
    %v1024 = vld [vmem:[%s1021 + $0x8] sm:$0xf]
    %v1025 = vld [vmem:[%s1021 + $0xc] sm:$0xf]
    %v1026 = vld [vmem:[%s1021 + $0x10] sm:$0xf]
    %v1027 = vld [vmem:[%s1021 + $0x14] sm:$0xf]
    %v1028 = vld [vmem:[%s1021 + $0x18] sm:$0xf]
    %v1029 = vld [vmem:[%s1021 + $0x1c] sm:$0xf]
    %v1030 = vld [vmem:[%s1021 + $0x20] sm:$0xf]
    %v1031 = vld [vmem:[%s1021 + $0x24] sm:$0xf]
    %v1032 = vld [vmem:[%s1021 + $0x28] sm:$0xf]
    %v1033 = vld [vmem:[%s1021 + $0x2c] sm:$0xf]
    %s1034 = scalar_lea.vmem [#allocation9], 96
    %v1035 = vld [vmem:[%s1034] sm:$0xf]
    %v1036 = vld [vmem:[%s1034 + $0x4] sm:$0xf]
    %v1037 = vld [vmem:[%s1034 + $0x8] sm:$0xf]
    %v1038 = vld [vmem:[%s1034 + $0xc] sm:$0xf]
    %v1039 = vld [vmem:[%s1034 + $0x10] sm:$0xf]
    %v1040 = vld [vmem:[%s1034 + $0x14] sm:$0xf]
    %v1041 = vld [vmem:[%s1034 + $0x18] sm:$0xf]
    %v1042 = vld [vmem:[%s1034 + $0x1c] sm:$0xf]
    %v1043 = vld [vmem:[%s1034 + $0x20] sm:$0xf]
    %v1044 = vld [vmem:[%s1034 + $0x24] sm:$0xf]
    %v1045 = vld [vmem:[%s1034 + $0x28] sm:$0xf]
    %v1046 = vld [vmem:[%s1034 + $0x2c] sm:$0xf]
    %v1059 = vunpack.c.l.b16 %v1035
    %v1060 = vunpack.c.l.b16 %v1036
    %v1061 = vunpack.c.l.b16 %v1037
    %v1062 = vunpack.c.l.b16 %v1038
    %v1063 = vunpack.c.l.b16 %v1039
    %v1064 = vunpack.c.l.b16 %v1040
    %v1065 = vunpack.c.l.b16 %v1041
    %v1066 = vunpack.c.l.b16 %v1042
    %v1067 = vunpack.c.l.b16 %v1043
    %v1068 = vunpack.c.l.b16 %v1044
    %v1069 = vunpack.c.l.b16 %v1045
    %v1070 = vunpack.c.l.b16 %v1046
    %v1071 = vpack.c.b16 %v1060, %v1059
    %v1072 = vpack.c.b16 %v1062, %v1061
    %v1073 = vpack.c.b16 %v1064, %v1063
    %v1074 = vpack.c.b16 %v1066, %v1065
    %v1075 = vpack.c.b16 %v1068, %v1067
    %v1076 = vpack.c.b16 %v1070, %v1069
    %v1084 = vsel %vm549, %v861, 0
    %v1087 = vsel %vm549, %v862, 0
    %v1090 = vsel %vm549, %v863, 0
    %v1093 = vsel %vm549, %v864, 0
    %v1096 = vsel %vm549, %v865, 0
    %v1099 = vsel %vm549, %v866, 0
    %1101 = vmatprep.subr.bf16.mxu0 0
    %1102 = vmatpush1.bf16.msra.mxu0 %v1071
    %1103 = vmatprep.subr.bf16.mxu0 0
    %1104 = vmatpush1.bf16.msra.mxu0 %v1072
    %1105 = vmatprep.subr.bf16.mxu0 0
    %1106 = vmatpush1.bf16.msra.mxu0 %v1073
    %1107 = vmatprep.subr.bf16.mxu0 0
    %1108 = vmatpush1.bf16.msra.mxu0 %v1074
    %1109 = vmatprep.subr.bf16.mxu0 0
    %1110 = vmatpush1.bf16.msra.mxu0 %v1075
    %1111 = vmatprep.subr.bf16.mxu0 0
    %1112 = vmatpush1.bf16.msra.mxu0 %v1076
    %1113 = vmatprep.subr.bf16.mxu0 0
    %1114 = vmatpush1.bf16.msra.mxu0 0
    %1115 = vmatprep.subr.bf16.mxu0 0
    %1116 = vmatpush1.bf16.msra.mxu0 0
    %1117 = vmatprep.subr.bf16.mxu0 0
    %1118 = vmatpush1.bf16.msra.mxu0 0
    %1119 = vmatprep.subr.bf16.mxu0 0
    %1120 = vmatpush1.bf16.msra.mxu0 0
    %1121 = vmatprep.subr.bf16.mxu0 0
    %1122 = vmatpush1.bf16.msra.mxu0 0
    %1123 = vmatprep.subr.bf16.mxu0 0
    %1124 = vmatpush1.bf16.msra.mxu0 0
    %1125 = vmatprep.subr.bf16.mxu0 0
    %1126 = vmatpush1.bf16.msra.mxu0 0
    %1127 = vmatprep.subr.bf16.mxu0 0
    %1128 = vmatpush1.bf16.msra.mxu0 0
    %1129 = vmatprep.subr.bf16.mxu0 0
    %1130 = vmatpush1.bf16.msra.mxu0 0
    %1131 = vmatprep.subr.bf16.mxu0 0
    %1132 = vmatpush1.bf16.msra.mxu0 0
    %1133 = vmatprep.mubr.bf16.mxu0 0
    %1134 = vmatmul.mubr.bf16.gmra.mrb[0].mxu0 %v1084
    %v1135 = vpop.f32.mrb[0].mxu0
    %v1136 = vadd.f32 0.0, %v1135
    %v1137 = vpop.f32.mrb[0].mxu0
    %v1138 = vpop.f32.mrb[0].mxu0
    %v1139 = vadd.f32 0.0, %v1138
    %v1140 = vpop.f32.mrb[0].mxu0
    %1141 = vmatprep.mubr.bf16.mxu0 0
    %1142 = vmatmul.mubr.bf16.gmra.mrb[0].mxu0 %v1087
    %v1143 = vpop.f32.mrb[0].mxu0
    %v1144 = vadd.f32 0.0, %v1143
    %v1145 = vpop.f32.mrb[0].mxu0
    %v1146 = vpop.f32.mrb[0].mxu0
    %v1147 = vadd.f32 0.0, %v1146
    %v1148 = vpop.f32.mrb[0].mxu0
    %1149 = vmatprep.mubr.bf16.mxu0 0
    %1150 = vmatmul.mubr.bf16.gmra.mrb[0].mxu0 %v1090
    %v1151 = vpop.f32.mrb[0].mxu0
    %v1152 = vadd.f32 0.0, %v1151
    %v1153 = vpop.f32.mrb[0].mxu0
    %v1154 = vpop.f32.mrb[0].mxu0
    %v1155 = vadd.f32 0.0, %v1154
    %v1156 = vpop.f32.mrb[0].mxu0
    %1157 = vmatprep.mubr.bf16.mxu0 0
    %1158 = vmatmul.mubr.bf16.gmra.mrb[0].mxu0 %v1093
    %v1159 = vpop.f32.mrb[0].mxu0
    %v1160 = vadd.f32 0.0, %v1159
    %v1161 = vpop.f32.mrb[0].mxu0
    %v1162 = vpop.f32.mrb[0].mxu0
    %v1163 = vadd.f32 0.0, %v1162
    %v1164 = vpop.f32.mrb[0].mxu0
    %1165 = vmatprep.mubr.bf16.mxu0 0
    %1166 = vmatmul.mubr.bf16.gmra.mrb[0].mxu0 %v1096
    %v1167 = vpop.f32.mrb[0].mxu0
    %v1168 = vadd.f32 0.0, %v1167
    %v1169 = vpop.f32.mrb[0].mxu0
    %v1170 = vpop.f32.mrb[0].mxu0
    %v1171 = vadd.f32 0.0, %v1170
    %v1172 = vpop.f32.mrb[0].mxu0
    %1173 = vmatprep.mubr.bf16.mxu0 0
    %1174 = vmatmul.mubr.bf16.gmra.mrb[0].mxu0 %v1099
    %v1175 = vpop.f32.mrb[0].mxu0
    %v1176 = vadd.f32 0.0, %v1175
    %v1177 = vpop.f32.mrb[0].mxu0
    %v1178 = vpop.f32.mrb[0].mxu0
    %v1179 = vadd.f32 0.0, %v1178
    %v1180 = vpop.f32.mrb[0].mxu0
    %1181 = vdwg.mxu0
    %v1194 = vunpack.c.l.b16 %v1022
    %v1195 = vunpack.c.l.b16 %v1023
    %v1196 = vunpack.c.l.b16 %v1024
    %v1197 = vunpack.c.l.b16 %v1025
    %v1198 = vunpack.c.l.b16 %v1026
    %v1199 = vunpack.c.l.b16 %v1027
    %v1200 = vunpack.c.l.b16 %v1028
    %v1201 = vunpack.c.l.b16 %v1029
    %v1202 = vunpack.c.l.b16 %v1030
    %v1203 = vunpack.c.l.b16 %v1031
    %v1204 = vunpack.c.l.b16 %v1032
    %v1205 = vunpack.c.l.b16 %v1033
    %v1206 = vpack.c.b16 %v1195, %v1194
    %v1207 = vpack.c.b16 %v1197, %v1196
    %v1208 = vpack.c.b16 %v1199, %v1198
    %v1209 = vpack.c.b16 %v1201, %v1200
    %v1210 = vpack.c.b16 %v1203, %v1202
    %v1211 = vpack.c.b16 %v1205, %v1204
    %1218 = vmatprep.subr.bf16.mxu0 0
    %1219 = vmatpush1.bf16.msra.mxu0 %v1206
    %1220 = vmatprep.subr.bf16.mxu0 0
    %1221 = vmatpush1.bf16.msra.mxu0 %v1207
    %1222 = vmatprep.subr.bf16.mxu0 0
    %1223 = vmatpush1.bf16.msra.mxu0 %v1208
    %1224 = vmatprep.subr.bf16.mxu0 0
    %1225 = vmatpush1.bf16.msra.mxu0 %v1209
    %1226 = vmatprep.subr.bf16.mxu0 0
    %1227 = vmatpush1.bf16.msra.mxu0 %v1210
    %1228 = vmatprep.subr.bf16.mxu0 0
    %1229 = vmatpush1.bf16.msra.mxu0 %v1211
    %1230 = vmatprep.subr.bf16.mxu0 0
    %1231 = vmatpush1.bf16.msra.mxu0 0
    %1232 = vmatprep.subr.bf16.mxu0 0
    %1233 = vmatpush1.bf16.msra.mxu0 0
    %1234 = vmatprep.subr.bf16.mxu0 0
    %1235 = vmatpush1.bf16.msra.mxu0 0
    %1236 = vmatprep.subr.bf16.mxu0 0
    %1237 = vmatpush1.bf16.msra.mxu0 0
    %1238 = vmatprep.subr.bf16.mxu0 0
    %1239 = vmatpush1.bf16.msra.mxu0 0
    %1240 = vmatprep.subr.bf16.mxu0 0
    %1241 = vmatpush1.bf16.msra.mxu0 0
    %1242 = vmatprep.subr.bf16.mxu0 0
    %1243 = vmatpush1.bf16.msra.mxu0 0
    %1244 = vmatprep.subr.bf16.mxu0 0
    %1245 = vmatpush1.bf16.msra.mxu0 0
    %1246 = vmatprep.subr.bf16.mxu0 0
    %1247 = vmatpush1.bf16.msra.mxu0 0
    %1248 = vmatprep.subr.bf16.mxu0 0
    %1249 = vmatpush1.bf16.msra.mxu0 0
    %1250 = vmatprep.mubr.bf16.mxu0 0
    %1251 = vmatmul.mubr.bf16.gmra.mrb[0].mxu0 %v923
    %v1252 = vpop.f32.mrb[0].mxu0
    %v1253 = vadd.f32 %v1136, %v1252
    %v1254 = vpop.f32.mrb[0].mxu0
    %v1255 = vpop.f32.mrb[0].mxu0
    %v1256 = vadd.f32 %v1139, %v1255
    %v1257 = vpop.f32.mrb[0].mxu0
    %1258 = vmatprep.mubr.bf16.mxu0 0
    %1259 = vmatmul.mubr.bf16.gmra.mrb[0].mxu0 %v926
    %v1260 = vpop.f32.mrb[0].mxu0
    %v1261 = vadd.f32 %v1144, %v1260
    %v1262 = vpop.f32.mrb[0].mxu0
    %v1263 = vpop.f32.mrb[0].mxu0
    %v1264 = vadd.f32 %v1147, %v1263
    %v1265 = vpop.f32.mrb[0].mxu0
    %1266 = vmatprep.mubr.bf16.mxu0 0
    %1267 = vmatmul.mubr.bf16.gmra.mrb[0].mxu0 %v929
    %v1268 = vpop.f32.mrb[0].mxu0
    %v1269 = vadd.f32 %v1152, %v1268
    %v1270 = vpop.f32.mrb[0].mxu0
    %v1271 = vpop.f32.mrb[0].mxu0
    %v1272 = vadd.f32 %v1155, %v1271
    %v1273 = vpop.f32.mrb[0].mxu0
    %1274 = vmatprep.mubr.bf16.mxu0 0
    %1275 = vmatmul.mubr.bf16.gmra.mrb[0].mxu0 %v932
    %v1276 = vpop.f32.mrb[0].mxu0
    %v1277 = vadd.f32 %v1160, %v1276
    %v1278 = vpop.f32.mrb[0].mxu0
    %v1279 = vpop.f32.mrb[0].mxu0
    %v1280 = vadd.f32 %v1163, %v1279
    %v1281 = vpop.f32.mrb[0].mxu0
    %1282 = vmatprep.mubr.bf16.mxu0 0
    %1283 = vmatmul.mubr.bf16.gmra.mrb[0].mxu0 %v935
    %v1284 = vpop.f32.mrb[0].mxu0
    %v1285 = vadd.f32 %v1168, %v1284
    %v1286 = vpop.f32.mrb[0].mxu0
    %v1287 = vpop.f32.mrb[0].mxu0
    %v1288 = vadd.f32 %v1171, %v1287
    %v1289 = vpop.f32.mrb[0].mxu0
    %1290 = vmatprep.mubr.bf16.mxu0 0
    %1291 = vmatmul.mubr.bf16.gmra.mrb[0].mxu0 %v938
    %v1292 = vpop.f32.mrb[0].mxu0
    %v1293 = vadd.f32 %v1176, %v1292
    %v1294 = vpop.f32.mrb[0].mxu0
    %v1295 = vpop.f32.mrb[0].mxu0
    %v1296 = vadd.f32 %v1179, %v1295
    %v1297 = vpop.f32.mrb[0].mxu0
    %1298 = vdwg.mxu0
    %v1299 = vadd.f32 %v1253, %v884
    %v1300 = vadd.f32 %v1256, %v884
    %v1301 = vadd.f32 %v1261, %v884
    %v1302 = vadd.f32 %v1264, %v884
    %v1303 = vadd.f32 %v1269, %v884
    %v1304 = vadd.f32 %v1272, %v884
    %v1305 = vadd.f32 %v1277, %v884
    %v1306 = vadd.f32 %v1280, %v884
    %v1307 = vadd.f32 %v1285, %v884
    %v1308 = vadd.f32 %v1288, %v884
    %v1309 = vadd.f32 %v1293, %v884
    %v1310 = vadd.f32 %v1296, %v884
    %v1311 = vmax.f32 %v975, 0.0
    %v1312 = vmax.f32 %v978, 0.0
    %v1313 = vmax.f32 %v983, 0.0
    %v1314 = vmax.f32 %v986, 0.0
    %v1315 = vmax.f32 %v991, 0.0
    %v1316 = vmax.f32 %v994, 0.0
    %v1317 = vmax.f32 %v999, 0.0
    %v1318 = vmax.f32 %v1002, 0.0
    %v1319 = vmax.f32 %v1007, 0.0
    %v1320 = vmax.f32 %v1010, 0.0
    %v1321 = vmax.f32 %v1015, 0.0
    %v1322 = vmax.f32 %v1018, 0.0
    %v1323 = vmax.f32 %v1299, 0.0
    %v1324 = vmax.f32 %v1300, 0.0
    %v1325 = vmax.f32 %v1301, 0.0
    %v1326 = vmax.f32 %v1302, 0.0
    %v1327 = vmax.f32 %v1303, 0.0
    %v1328 = vmax.f32 %v1304, 0.0
    %v1329 = vmax.f32 %v1305, 0.0
    %v1330 = vmax.f32 %v1306, 0.0
    %v1331 = vmax.f32 %v1307, 0.0
    %v1332 = vmax.f32 %v1308, 0.0
    %v1333 = vmax.f32 %v1309, 0.0
    %v1334 = vmax.f32 %v1310, 0.0
    %v1335 = vpack.c.bf16 %v1323, %v1311
    %v1336 = vpack.c.bf16 %v1324, %v1312
    %v1337 = vpack.c.bf16 %v1325, %v1313
    %v1338 = vpack.c.bf16 %v1326, %v1314
    %v1339 = vpack.c.bf16 %v1327, %v1315
    %v1340 = vpack.c.bf16 %v1328, %v1316
    %v1341 = vpack.c.bf16 %v1329, %v1317
    %v1342 = vpack.c.bf16 %v1330, %v1318
    %v1343 = vpack.c.bf16 %v1331, %v1319
    %v1344 = vpack.c.bf16 %v1332, %v1320
    %v1345 = vpack.c.bf16 %v1333, %v1321
    %v1346 = vpack.c.bf16 %v1334, %v1322
    %v1347 = vpack.c.bf16 %v1312, %v1323
    %v1348 = vpack.c.bf16 %v1313, %v1324
    %v1349 = vpack.c.bf16 %v1314, %v1325
    %v1350 = vpack.c.bf16 %v1315, %v1326
    %v1351 = vpack.c.bf16 %v1316, %v1327
    %v1352 = vpack.c.bf16 %v1317, %v1328
    %v1353 = vpack.c.bf16 %v1318, %v1329
    %v1354 = vpack.c.bf16 %v1319, %v1330
    %v1355 = vpack.c.bf16 %v1320, %v1331
    %v1356 = vpack.c.bf16 %v1321, %v1332
    %v1357 = vpack.c.bf16 %v1322, %v1333
    %v1358 = vpack.c.bf16 0.0, %v1334
    %v1359 = vld [vmem:[#allocation13] sm:$0x7]
    %v1360 = vld [vmem:[#allocation12] sm:$0xff]
    %v1361 = vld [vmem:[#allocation12 + $0x8] sm:$0xf]
    %v1362 = vld [vmem:[#allocation12 + $0xc] sm:$0xff]
    %v1363 = vld [vmem:[#allocation12 + $0x14] sm:$0xf]
    %v1364 = vld [vmem:[#allocation12 + $0x18] sm:$0xff]
    %v1365 = vld [vmem:[#allocation12 + $0x20] sm:$0xf]
    %v1366 = vld [vmem:[#allocation12 + $0x24] sm:$0xff]
    %v1367 = vld [vmem:[#allocation12 + $0x2c] sm:$0xf]
    %v1368 = vld [vmem:[#allocation12 + $0x30] sm:$0xff]
    %v1369 = vld [vmem:[#allocation12 + $0x38] sm:$0xf]
    %v1370 = vld [vmem:[#allocation12 + $0x3c] sm:$0xff]
    %v1371 = vld [vmem:[#allocation12 + $0x44] sm:$0xf]
    %v1372 = vld [vmem:[#allocation12 + $0x48] sm:$0xff]
    %v1373 = vld [vmem:[#allocation12 + $0x50] sm:$0xf]
    %v1374 = vld [vmem:[#allocation12 + $0x54] sm:$0xff]
    %v1375 = vld [vmem:[#allocation12 + $0x5c] sm:$0xf]
    %v1376 = vld [vmem:[#allocation12 + $0x60] sm:$0xff]
    %v1377 = vld [vmem:[#allocation12 + $0x68] sm:$0xf]
    %v1378 = vld [vmem:[#allocation12 + $0x6c] sm:$0xff]
    %v1379 = vld [vmem:[#allocation12 + $0x74] sm:$0xf]
    %v1380 = vld [vmem:[#allocation12 + $0x78] sm:$0xff]
    %v1381 = vld [vmem:[#allocation12 + $0x80] sm:$0xf]
    %v1382 = vld [vmem:[#allocation12 + $0x84] sm:$0xff]
    %v1383 = vld [vmem:[#allocation12 + $0x8c] sm:$0xf]
    %v1385 = vlaneseq
    %v1386 = vshrl.u32 %v1385, 7
    %v1387 = vsub.s32 0, %v1386
    %v1388 = vrot.slane %v1359, %v1387
    %v1389 = vlaneseq
    %v1390 = vshrl.u32 %v1389, 7
    %v1391 = vsub.s32 1, %v1390
    %v1392 = vrot.slane %v1359, %v1391
    %v1393 = vlaneseq
    %v1394 = vshrl.u32 %v1393, 7
    %v1395 = vsub.s32 2, %v1394
    %v1396 = vrot.slane %v1359, %v1395
    %v1424 = vunpack.c.l.b16 %v1360
    %v1425 = vunpack.c.h.b16 %v1360
    %v1426 = vunpack.c.l.b16 %v1361
    %v1427 = vunpack.c.l.b16 %v1362
    %v1428 = vunpack.c.h.b16 %v1362
    %v1429 = vunpack.c.l.b16 %v1363
    %v1430 = vunpack.c.l.b16 %v1364
    %v1431 = vunpack.c.h.b16 %v1364
    %v1432 = vunpack.c.l.b16 %v1365
    %v1433 = vunpack.c.l.b16 %v1366
    %v1434 = vunpack.c.h.b16 %v1366
    %v1435 = vunpack.c.l.b16 %v1367
    %v1436 = vunpack.c.l.b16 %v1368
    %v1437 = vunpack.c.h.b16 %v1368
    %v1438 = vunpack.c.l.b16 %v1369
    %v1439 = vunpack.c.l.b16 %v1370
    %v1440 = vunpack.c.h.b16 %v1370
    %v1441 = vunpack.c.l.b16 %v1371
    %v1442 = vunpack.c.l.b16 %v1372
    %v1443 = vunpack.c.h.b16 %v1372
    %v1444 = vunpack.c.l.b16 %v1373
    %v1445 = vunpack.c.l.b16 %v1374
    %v1446 = vunpack.c.h.b16 %v1374
    %v1447 = vunpack.c.l.b16 %v1375
    %v1448 = vunpack.c.l.b16 %v1376
    %v1449 = vunpack.c.h.b16 %v1376
    %v1450 = vunpack.c.l.b16 %v1377
    %v1451 = vunpack.c.l.b16 %v1378
    %v1452 = vunpack.c.h.b16 %v1378
    %v1453 = vunpack.c.l.b16 %v1379
    %v1454 = vunpack.c.l.b16 %v1380
    %v1455 = vunpack.c.h.b16 %v1380
    %v1456 = vunpack.c.l.b16 %v1381
    %v1457 = vunpack.c.l.b16 %v1382
    %v1458 = vunpack.c.h.b16 %v1382
    %v1459 = vunpack.c.l.b16 %v1383
    %v1460 = vpack.c.b16 %v1427, %v1424
    %v1461 = vpack.c.b16 %v1428, %v1425
    %v1462 = vpack.c.b16 %v1429, %v1426
    %v1463 = vpack.c.b16 %v1433, %v1430
    %v1464 = vpack.c.b16 %v1434, %v1431
    %v1465 = vpack.c.b16 %v1435, %v1432
    %v1466 = vpack.c.b16 %v1439, %v1436
    %v1467 = vpack.c.b16 %v1440, %v1437
    %v1468 = vpack.c.b16 %v1441, %v1438
    %v1469 = vpack.c.b16 %v1445, %v1442
    %v1470 = vpack.c.b16 %v1446, %v1443
    %v1471 = vpack.c.b16 %v1447, %v1444
    %v1472 = vpack.c.b16 %v1451, %v1448
    %v1473 = vpack.c.b16 %v1452, %v1449
    %v1474 = vpack.c.b16 %v1453, %v1450
    %v1475 = vpack.c.b16 %v1457, %v1454
    %v1476 = vpack.c.b16 %v1458, %v1455
    %v1477 = vpack.c.b16 %v1459, %v1456
    %v1497 = vsel %vm549, %v1335, 0
    %v1500 = vsel %vm549, %v1336, 0
    %v1503 = vsel %vm549, %v1337, 0
    %v1506 = vsel %vm549, %v1338, 0
    %v1509 = vsel %vm549, %v1339, 0
    %v1512 = vsel %vm549, %v1340, 0
    %v1515 = vsel %vm549, %v1341, 0
    %v1518 = vsel %vm549, %v1342, 0
    %v1521 = vsel %vm549, %v1343, 0
    %v1524 = vsel %vm549, %v1344, 0
    %v1527 = vsel %vm549, %v1345, 0
    %v1530 = vsel %vm549, %v1346, 0
    %1532 = vmatprep.subr.bf16.mxu0 %v1461
    %1533 = vmatpush1.bf16.msra.mxu0 %v1460
    %1534 = vmatprep.subr.bf16.mxu0 %v1464
    %1535 = vmatpush1.bf16.msra.mxu0 %v1463
    %1536 = vmatprep.subr.bf16.mxu0 %v1467
    %1537 = vmatpush1.bf16.msra.mxu0 %v1466
    %1538 = vmatprep.subr.bf16.mxu0 %v1470
    %1539 = vmatpush1.bf16.msra.mxu0 %v1469
    %1540 = vmatprep.subr.bf16.mxu0 %v1473
    %1541 = vmatpush1.bf16.msra.mxu0 %v1472
    %1542 = vmatprep.subr.bf16.mxu0 %v1476
    %1543 = vmatpush1.bf16.msra.mxu0 %v1475
    %1544 = vmatprep.subr.bf16.mxu0 0
    %1545 = vmatpush1.bf16.msra.mxu0 0
    %1546 = vmatprep.subr.bf16.mxu0 0
    %1547 = vmatpush1.bf16.msra.mxu0 0
    %1548 = vmatprep.subr.bf16.mxu0 0
    %1549 = vmatpush1.bf16.msra.mxu0 0
    %1550 = vmatprep.subr.bf16.mxu0 0
    %1551 = vmatpush1.bf16.msra.mxu0 0
    %1552 = vmatprep.subr.bf16.mxu0 0
    %1553 = vmatpush1.bf16.msra.mxu0 0
    %1554 = vmatprep.subr.bf16.mxu0 0
    %1555 = vmatpush1.bf16.msra.mxu0 0
    %1556 = vmatprep.subr.bf16.mxu0 0
    %1557 = vmatpush1.bf16.msra.mxu0 0
    %1558 = vmatprep.subr.bf16.mxu0 0
    %1559 = vmatpush1.bf16.msra.mxu0 0
    %1560 = vmatprep.subr.bf16.mxu0 0
    %1561 = vmatpush1.bf16.msra.mxu0 0
    %1562 = vmatprep.subr.bf16.mxu0 0
    %1563 = vmatpush1.bf16.msra.mxu0 0
    %1564 = vmatprep.mubr.bf16.mxu0 0
    %1565 = vmatmul.mubr.bf16.gmra.mrb[0].mxu0 %v1497
    %v1566 = vpop.f32.mrb[0].mxu0
    %v1567 = vadd.f32 %v1388, %v1566
    %v1568 = vpop.f32.mrb[0].mxu0
    %v1569 = vadd.f32 %v1392, %v1568
    %v1570 = vpop.f32.mrb[0].mxu0
    %v1571 = vadd.f32 %v1388, %v1570
    %v1572 = vpop.f32.mrb[0].mxu0
    %v1573 = vadd.f32 %v1392, %v1572
    %1574 = vmatprep.mubr.bf16.mxu0 0
    %1575 = vmatmul.mubr.bf16.gmra.mrb[0].mxu0 %v1500
    %v1576 = vpop.f32.mrb[0].mxu0
    %v1577 = vadd.f32 %v1388, %v1576
    %v1578 = vpop.f32.mrb[0].mxu0
    %v1579 = vadd.f32 %v1392, %v1578
    %v1580 = vpop.f32.mrb[0].mxu0
    %v1581 = vadd.f32 %v1388, %v1580
    %v1582 = vpop.f32.mrb[0].mxu0
    %v1583 = vadd.f32 %v1392, %v1582
    %1584 = vmatprep.mubr.bf16.mxu0 0
    %1585 = vmatmul.mubr.bf16.gmra.mrb[0].mxu0 %v1503
    %v1586 = vpop.f32.mrb[0].mxu0
    %v1587 = vadd.f32 %v1388, %v1586
    %v1588 = vpop.f32.mrb[0].mxu0
    %v1589 = vadd.f32 %v1392, %v1588
    %v1590 = vpop.f32.mrb[0].mxu0
    %v1591 = vadd.f32 %v1388, %v1590
    %v1592 = vpop.f32.mrb[0].mxu0
    %v1593 = vadd.f32 %v1392, %v1592
    %1594 = vmatprep.mubr.bf16.mxu0 0
    %1595 = vmatmul.mubr.bf16.gmra.mrb[0].mxu0 %v1506
    %v1596 = vpop.f32.mrb[0].mxu0
    %v1597 = vadd.f32 %v1388, %v1596
    %v1598 = vpop.f32.mrb[0].mxu0
    %v1599 = vadd.f32 %v1392, %v1598
    %v1600 = vpop.f32.mrb[0].mxu0
    %v1601 = vadd.f32 %v1388, %v1600
    %v1602 = vpop.f32.mrb[0].mxu0
    %v1603 = vadd.f32 %v1392, %v1602
    %1604 = vmatprep.mubr.bf16.mxu0 0
    %1605 = vmatmul.mubr.bf16.gmra.mrb[0].mxu0 %v1509
    %v1606 = vpop.f32.mrb[0].mxu0
    %v1607 = vadd.f32 %v1388, %v1606
    %v1608 = vpop.f32.mrb[0].mxu0
    %v1609 = vadd.f32 %v1392, %v1608
    %v1610 = vpop.f32.mrb[0].mxu0
    %v1611 = vadd.f32 %v1388, %v1610
    %v1612 = vpop.f32.mrb[0].mxu0
    %v1613 = vadd.f32 %v1392, %v1612
    %1614 = vmatprep.mubr.bf16.mxu0 0
    %1615 = vmatmul.mubr.bf16.gmra.mrb[0].mxu0 %v1512
    %v1616 = vpop.f32.mrb[0].mxu0
    %v1617 = vadd.f32 %v1388, %v1616
    %v1618 = vpop.f32.mrb[0].mxu0
    %v1619 = vadd.f32 %v1392, %v1618
    %v1620 = vpop.f32.mrb[0].mxu0
    %v1621 = vadd.f32 %v1388, %v1620
    %v1622 = vpop.f32.mrb[0].mxu0
    %v1623 = vadd.f32 %v1392, %v1622
    %1624 = vmatprep.mubr.bf16.mxu0 0
    %1625 = vmatmul.mubr.bf16.gmra.mrb[0].mxu0 %v1515
    %v1626 = vpop.f32.mrb[0].mxu0
    %v1627 = vadd.f32 %v1388, %v1626
    %v1628 = vpop.f32.mrb[0].mxu0
    %v1629 = vadd.f32 %v1392, %v1628
    %v1630 = vpop.f32.mrb[0].mxu0
    %v1631 = vadd.f32 %v1388, %v1630
    %v1632 = vpop.f32.mrb[0].mxu0
    %v1633 = vadd.f32 %v1392, %v1632
    %1634 = vmatprep.mubr.bf16.mxu0 0
    %1635 = vmatmul.mubr.bf16.gmra.mrb[0].mxu0 %v1518
    %v1636 = vpop.f32.mrb[0].mxu0
    %v1637 = vadd.f32 %v1388, %v1636
    %v1638 = vpop.f32.mrb[0].mxu0
    %v1639 = vadd.f32 %v1392, %v1638
    %v1640 = vpop.f32.mrb[0].mxu0
    %v1641 = vadd.f32 %v1388, %v1640
    %v1642 = vpop.f32.mrb[0].mxu0
    %v1643 = vadd.f32 %v1392, %v1642
    %1644 = vmatprep.mubr.bf16.mxu0 0
    %1645 = vmatmul.mubr.bf16.gmra.mrb[0].mxu0 %v1521
    %v1646 = vpop.f32.mrb[0].mxu0
    %v1647 = vadd.f32 %v1388, %v1646
    %v1648 = vpop.f32.mrb[0].mxu0
    %v1649 = vadd.f32 %v1392, %v1648
    %v1650 = vpop.f32.mrb[0].mxu0
    %v1651 = vadd.f32 %v1388, %v1650
    %v1652 = vpop.f32.mrb[0].mxu0
    %v1653 = vadd.f32 %v1392, %v1652
    %1654 = vmatprep.mubr.bf16.mxu0 0
    %1655 = vmatmul.mubr.bf16.gmra.mrb[0].mxu0 %v1524
    %v1656 = vpop.f32.mrb[0].mxu0
    %v1657 = vadd.f32 %v1388, %v1656
    %v1658 = vpop.f32.mrb[0].mxu0
    %v1659 = vadd.f32 %v1392, %v1658
    %v1660 = vpop.f32.mrb[0].mxu0
    %v1661 = vadd.f32 %v1388, %v1660
    %v1662 = vpop.f32.mrb[0].mxu0
    %v1663 = vadd.f32 %v1392, %v1662
    %1664 = vmatprep.mubr.bf16.mxu0 0
    %1665 = vmatmul.mubr.bf16.gmra.mrb[0].mxu0 %v1527
    %v1666 = vpop.f32.mrb[0].mxu0
    %v1667 = vadd.f32 %v1388, %v1666
    %v1668 = vpop.f32.mrb[0].mxu0
    %v1669 = vadd.f32 %v1392, %v1668
    %v1670 = vpop.f32.mrb[0].mxu0
    %v1671 = vadd.f32 %v1388, %v1670
    %v1672 = vpop.f32.mrb[0].mxu0
    %v1673 = vadd.f32 %v1392, %v1672
    %1674 = vmatprep.mubr.bf16.mxu0 0
    %1675 = vmatmul.mubr.bf16.gmra.mrb[0].mxu0 %v1530
    %v1676 = vpop.f32.mrb[0].mxu0
    %v1677 = vadd.f32 %v1388, %v1676
    %v1678 = vpop.f32.mrb[0].mxu0
    %v1679 = vadd.f32 %v1392, %v1678
    %v1680 = vpop.f32.mrb[0].mxu0
    %v1681 = vadd.f32 %v1388, %v1680
    %v1682 = vpop.f32.mrb[0].mxu0
    %v1683 = vadd.f32 %v1392, %v1682
    %1684 = vdwg.mxu0
    %1685 = vmatprep.subr.bf16.mxu0 0
    %1686 = vmatpush1.bf16.msra.mxu0 %v1462
    %1687 = vmatprep.subr.bf16.mxu0 0
    %1688 = vmatpush1.bf16.msra.mxu0 %v1465
    %1689 = vmatprep.subr.bf16.mxu0 0
    %1690 = vmatpush1.bf16.msra.mxu0 %v1468
    %1691 = vmatprep.subr.bf16.mxu0 0
    %1692 = vmatpush1.bf16.msra.mxu0 %v1471
    %1693 = vmatprep.subr.bf16.mxu0 0
    %1694 = vmatpush1.bf16.msra.mxu0 %v1474
    %1695 = vmatprep.subr.bf16.mxu0 0
    %1696 = vmatpush1.bf16.msra.mxu0 %v1477
    %1697 = vmatprep.subr.bf16.mxu0 0
    %1698 = vmatpush1.bf16.msra.mxu0 0
    %1699 = vmatprep.subr.bf16.mxu0 0
    %1700 = vmatpush1.bf16.msra.mxu0 0
    %1701 = vmatprep.subr.bf16.mxu0 0
    %1702 = vmatpush1.bf16.msra.mxu0 0
    %1703 = vmatprep.subr.bf16.mxu0 0
    %1704 = vmatpush1.bf16.msra.mxu0 0
    %1705 = vmatprep.subr.bf16.mxu0 0
    %1706 = vmatpush1.bf16.msra.mxu0 0
    %1707 = vmatprep.subr.bf16.mxu0 0
    %1708 = vmatpush1.bf16.msra.mxu0 0
    %1709 = vmatprep.subr.bf16.mxu0 0
    %1710 = vmatpush1.bf16.msra.mxu0 0
    %1711 = vmatprep.subr.bf16.mxu0 0
    %1712 = vmatpush1.bf16.msra.mxu0 0
    %1713 = vmatprep.subr.bf16.mxu0 0
    %1714 = vmatpush1.bf16.msra.mxu0 0
    %1715 = vmatprep.subr.bf16.mxu0 0
    %1716 = vmatpush1.bf16.msra.mxu0 0
    %1717 = vmatprep.mubr.bf16.mxu0 0
    %1718 = vmatmul.mubr.bf16.gmra.mrb[0].mxu0 %v1497
    %v1719 = vpop.f32.mrb[0].mxu0
    %v1720 = vadd.f32 %v1396, %v1719
    %v1721 = vpop.f32.mrb[0].mxu0
    %v1722 = vpop.f32.mrb[0].mxu0
    %v1723 = vadd.f32 %v1396, %v1722
    %v1724 = vpop.f32.mrb[0].mxu0
    %1725 = vmatprep.mubr.bf16.mxu0 0
    %1726 = vmatmul.mubr.bf16.gmra.mrb[0].mxu0 %v1500
    %v1727 = vpop.f32.mrb[0].mxu0
    %v1728 = vadd.f32 %v1396, %v1727
    %v1729 = vpop.f32.mrb[0].mxu0
    %v1730 = vpop.f32.mrb[0].mxu0
    %v1731 = vadd.f32 %v1396, %v1730
    %v1732 = vpop.f32.mrb[0].mxu0
    %1733 = vmatprep.mubr.bf16.mxu0 0
    %1734 = vmatmul.mubr.bf16.gmra.mrb[0].mxu0 %v1503
    %v1735 = vpop.f32.mrb[0].mxu0
    %v1736 = vadd.f32 %v1396, %v1735
    %v1737 = vpop.f32.mrb[0].mxu0
    %v1738 = vpop.f32.mrb[0].mxu0
    %v1739 = vadd.f32 %v1396, %v1738
    %v1740 = vpop.f32.mrb[0].mxu0
    %1741 = vmatprep.mubr.bf16.mxu0 0
    %1742 = vmatmul.mubr.bf16.gmra.mrb[0].mxu0 %v1506
    %v1743 = vpop.f32.mrb[0].mxu0
    %v1744 = vadd.f32 %v1396, %v1743
    %v1745 = vpop.f32.mrb[0].mxu0
    %v1746 = vpop.f32.mrb[0].mxu0
    %v1747 = vadd.f32 %v1396, %v1746
    %v1748 = vpop.f32.mrb[0].mxu0
    %1749 = vmatprep.mubr.bf16.mxu0 0
    %1750 = vmatmul.mubr.bf16.gmra.mrb[0].mxu0 %v1509
    %v1751 = vpop.f32.mrb[0].mxu0
    %v1752 = vadd.f32 %v1396, %v1751
    %v1753 = vpop.f32.mrb[0].mxu0
    %v1754 = vpop.f32.mrb[0].mxu0
    %v1755 = vadd.f32 %v1396, %v1754
    %v1756 = vpop.f32.mrb[0].mxu0
    %1757 = vmatprep.mubr.bf16.mxu0 0
    %1758 = vmatmul.mubr.bf16.gmra.mrb[0].mxu0 %v1512
    %v1759 = vpop.f32.mrb[0].mxu0
    %v1760 = vadd.f32 %v1396, %v1759
    %v1761 = vpop.f32.mrb[0].mxu0
    %v1762 = vpop.f32.mrb[0].mxu0
    %v1763 = vadd.f32 %v1396, %v1762
    %v1764 = vpop.f32.mrb[0].mxu0
    %1765 = vmatprep.mubr.bf16.mxu0 0
    %1766 = vmatmul.mubr.bf16.gmra.mrb[0].mxu0 %v1515
    %v1767 = vpop.f32.mrb[0].mxu0
    %v1768 = vadd.f32 %v1396, %v1767
    %v1769 = vpop.f32.mrb[0].mxu0
    %v1770 = vpop.f32.mrb[0].mxu0
    %v1771 = vadd.f32 %v1396, %v1770
    %v1772 = vpop.f32.mrb[0].mxu0
    %1773 = vmatprep.mubr.bf16.mxu0 0
    %1774 = vmatmul.mubr.bf16.gmra.mrb[0].mxu0 %v1518
    %v1775 = vpop.f32.mrb[0].mxu0
    %v1776 = vadd.f32 %v1396, %v1775
    %v1777 = vpop.f32.mrb[0].mxu0
    %v1778 = vpop.f32.mrb[0].mxu0
    %v1779 = vadd.f32 %v1396, %v1778
    %v1780 = vpop.f32.mrb[0].mxu0
    %1781 = vmatprep.mubr.bf16.mxu0 0
    %1782 = vmatmul.mubr.bf16.gmra.mrb[0].mxu0 %v1521
    %v1783 = vpop.f32.mrb[0].mxu0
    %v1784 = vadd.f32 %v1396, %v1783
    %v1785 = vpop.f32.mrb[0].mxu0
    %v1786 = vpop.f32.mrb[0].mxu0
    %v1787 = vadd.f32 %v1396, %v1786
    %v1788 = vpop.f32.mrb[0].mxu0
    %1789 = vmatprep.mubr.bf16.mxu0 0
    %1790 = vmatmul.mubr.bf16.gmra.mrb[0].mxu0 %v1524
    %v1791 = vpop.f32.mrb[0].mxu0
    %v1792 = vadd.f32 %v1396, %v1791
    %v1793 = vpop.f32.mrb[0].mxu0
    %v1794 = vpop.f32.mrb[0].mxu0
    %v1795 = vadd.f32 %v1396, %v1794
    %v1796 = vpop.f32.mrb[0].mxu0
    %1797 = vmatprep.mubr.bf16.mxu0 0
    %1798 = vmatmul.mubr.bf16.gmra.mrb[0].mxu0 %v1527
    %v1799 = vpop.f32.mrb[0].mxu0
    %v1800 = vadd.f32 %v1396, %v1799
    %v1801 = vpop.f32.mrb[0].mxu0
    %v1802 = vpop.f32.mrb[0].mxu0
    %v1803 = vadd.f32 %v1396, %v1802
    %v1804 = vpop.f32.mrb[0].mxu0
    %1805 = vmatprep.mubr.bf16.mxu0 0
    %1806 = vmatmul.mubr.bf16.gmra.mrb[0].mxu0 %v1530
    %v1807 = vpop.f32.mrb[0].mxu0
    %v1808 = vadd.f32 %v1396, %v1807
    %v1809 = vpop.f32.mrb[0].mxu0
    %v1810 = vpop.f32.mrb[0].mxu0
    %v1811 = vadd.f32 %v1396, %v1810
    %v1812 = vpop.f32.mrb[0].mxu0
    %1813 = vdwg.mxu0
    %s1814 = scalar_lea.vmem [#allocation12], 144
    %v1815 = vld [vmem:[%s1814] sm:$0xff]
    %v1816 = vld [vmem:[%s1814 + $0x8] sm:$0xf]
    %v1817 = vld [vmem:[%s1814 + $0xc] sm:$0xff]
    %v1818 = vld [vmem:[%s1814 + $0x14] sm:$0xf]
    %v1819 = vld [vmem:[%s1814 + $0x18] sm:$0xff]
    %v1820 = vld [vmem:[%s1814 + $0x20] sm:$0xf]
    %v1821 = vld [vmem:[%s1814 + $0x24] sm:$0xff]
    %v1822 = vld [vmem:[%s1814 + $0x2c] sm:$0xf]
    %v1823 = vld [vmem:[%s1814 + $0x30] sm:$0xff]
    %v1824 = vld [vmem:[%s1814 + $0x38] sm:$0xf]
    %v1825 = vld [vmem:[%s1814 + $0x3c] sm:$0xff]
    %v1826 = vld [vmem:[%s1814 + $0x44] sm:$0xf]
    %v1827 = vld [vmem:[%s1814 + $0x48] sm:$0xff]
    %v1828 = vld [vmem:[%s1814 + $0x50] sm:$0xf]
    %v1829 = vld [vmem:[%s1814 + $0x54] sm:$0xff]
    %v1830 = vld [vmem:[%s1814 + $0x5c] sm:$0xf]
    %v1831 = vld [vmem:[%s1814 + $0x60] sm:$0xff]
    %v1832 = vld [vmem:[%s1814 + $0x68] sm:$0xf]
    %v1833 = vld [vmem:[%s1814 + $0x6c] sm:$0xff]
    %v1834 = vld [vmem:[%s1814 + $0x74] sm:$0xf]
    %v1835 = vld [vmem:[%s1814 + $0x78] sm:$0xff]
    %v1836 = vld [vmem:[%s1814 + $0x80] sm:$0xf]
    %v1837 = vld [vmem:[%s1814 + $0x84] sm:$0xff]
    %v1838 = vld [vmem:[%s1814 + $0x8c] sm:$0xf]
    %s1839 = scalar_lea.vmem [#allocation12], 288
    %v1840 = vld [vmem:[%s1839] sm:$0xff]
    %v1841 = vld [vmem:[%s1839 + $0x8] sm:$0xf]
    %v1842 = vld [vmem:[%s1839 + $0xc] sm:$0xff]
    %v1843 = vld [vmem:[%s1839 + $0x14] sm:$0xf]
    %v1844 = vld [vmem:[%s1839 + $0x18] sm:$0xff]
    %v1845 = vld [vmem:[%s1839 + $0x20] sm:$0xf]
    %v1846 = vld [vmem:[%s1839 + $0x24] sm:$0xff]
    %v1847 = vld [vmem:[%s1839 + $0x2c] sm:$0xf]
    %v1848 = vld [vmem:[%s1839 + $0x30] sm:$0xff]
    %v1849 = vld [vmem:[%s1839 + $0x38] sm:$0xf]
    %v1850 = vld [vmem:[%s1839 + $0x3c] sm:$0xff]
    %v1851 = vld [vmem:[%s1839 + $0x44] sm:$0xf]
    %v1852 = vld [vmem:[%s1839 + $0x48] sm:$0xff]
    %v1853 = vld [vmem:[%s1839 + $0x50] sm:$0xf]
    %v1854 = vld [vmem:[%s1839 + $0x54] sm:$0xff]
    %v1855 = vld [vmem:[%s1839 + $0x5c] sm:$0xf]
    %v1856 = vld [vmem:[%s1839 + $0x60] sm:$0xff]
    %v1857 = vld [vmem:[%s1839 + $0x68] sm:$0xf]
    %v1858 = vld [vmem:[%s1839 + $0x6c] sm:$0xff]
    %v1859 = vld [vmem:[%s1839 + $0x74] sm:$0xf]
    %v1860 = vld [vmem:[%s1839 + $0x78] sm:$0xff]
    %v1861 = vld [vmem:[%s1839 + $0x80] sm:$0xf]
    %v1862 = vld [vmem:[%s1839 + $0x84] sm:$0xff]
    %v1863 = vld [vmem:[%s1839 + $0x8c] sm:$0xf]
    %v1888 = vunpack.c.l.b16 %v1840
    %v1889 = vunpack.c.h.b16 %v1840
    %v1890 = vunpack.c.l.b16 %v1841
    %v1891 = vunpack.c.l.b16 %v1842
    %v1892 = vunpack.c.h.b16 %v1842
    %v1893 = vunpack.c.l.b16 %v1843
    %v1894 = vunpack.c.l.b16 %v1844
    %v1895 = vunpack.c.h.b16 %v1844
    %v1896 = vunpack.c.l.b16 %v1845
    %v1897 = vunpack.c.l.b16 %v1846
    %v1898 = vunpack.c.h.b16 %v1846
    %v1899 = vunpack.c.l.b16 %v1847
    %v1900 = vunpack.c.l.b16 %v1848
    %v1901 = vunpack.c.h.b16 %v1848
    %v1902 = vunpack.c.l.b16 %v1849
    %v1903 = vunpack.c.l.b16 %v1850
    %v1904 = vunpack.c.h.b16 %v1850
    %v1905 = vunpack.c.l.b16 %v1851
    %v1906 = vunpack.c.l.b16 %v1852
    %v1907 = vunpack.c.h.b16 %v1852
    %v1908 = vunpack.c.l.b16 %v1853
    %v1909 = vunpack.c.l.b16 %v1854
    %v1910 = vunpack.c.h.b16 %v1854
    %v1911 = vunpack.c.l.b16 %v1855
    %v1912 = vunpack.c.l.b16 %v1856
    %v1913 = vunpack.c.h.b16 %v1856
    %v1914 = vunpack.c.l.b16 %v1857
    %v1915 = vunpack.c.l.b16 %v1858
    %v1916 = vunpack.c.h.b16 %v1858
    %v1917 = vunpack.c.l.b16 %v1859
    %v1918 = vunpack.c.l.b16 %v1860
    %v1919 = vunpack.c.h.b16 %v1860
    %v1920 = vunpack.c.l.b16 %v1861
    %v1921 = vunpack.c.l.b16 %v1862
    %v1922 = vunpack.c.h.b16 %v1862
    %v1923 = vunpack.c.l.b16 %v1863
    %v1924 = vpack.c.b16 %v1891, %v1888
    %v1925 = vpack.c.b16 %v1892, %v1889
    %v1926 = vpack.c.b16 %v1893, %v1890
    %v1927 = vpack.c.b16 %v1897, %v1894
    %v1928 = vpack.c.b16 %v1898, %v1895
    %v1929 = vpack.c.b16 %v1899, %v1896
    %v1930 = vpack.c.b16 %v1903, %v1900
    %v1931 = vpack.c.b16 %v1904, %v1901
    %v1932 = vpack.c.b16 %v1905, %v1902
    %v1933 = vpack.c.b16 %v1909, %v1906
    %v1934 = vpack.c.b16 %v1910, %v1907
    %v1935 = vpack.c.b16 %v1911, %v1908
    %v1936 = vpack.c.b16 %v1915, %v1912
    %v1937 = vpack.c.b16 %v1916, %v1913
    %v1938 = vpack.c.b16 %v1917, %v1914
    %v1939 = vpack.c.b16 %v1921, %v1918
    %v1940 = vpack.c.b16 %v1922, %v1919
    %v1941 = vpack.c.b16 %v1923, %v1920
    %v1961 = vsel %vm549, %v1347, 0
    %v1964 = vsel %vm549, %v1348, 0
    %v1967 = vsel %vm549, %v1349, 0
    %v1970 = vsel %vm549, %v1350, 0
    %v1973 = vsel %vm549, %v1351, 0
    %v1976 = vsel %vm549, %v1352, 0
    %v1979 = vsel %vm549, %v1353, 0
    %v1982 = vsel %vm549, %v1354, 0
    %v1985 = vsel %vm549, %v1355, 0
    %v1988 = vsel %vm549, %v1356, 0
    %v1991 = vsel %vm549, %v1357, 0
    %v1994 = vsel %vm549, %v1358, 0
    %1996 = vmatprep.subr.bf16.mxu0 %v1925
    %1997 = vmatpush1.bf16.msra.mxu0 %v1924
    %1998 = vmatprep.subr.bf16.mxu0 %v1928
    %1999 = vmatpush1.bf16.msra.mxu0 %v1927
    %2000 = vmatprep.subr.bf16.mxu0 %v1931
    %2001 = vmatpush1.bf16.msra.mxu0 %v1930
    %2002 = vmatprep.subr.bf16.mxu0 %v1934
    %2003 = vmatpush1.bf16.msra.mxu0 %v1933
    %2004 = vmatprep.subr.bf16.mxu0 %v1937
    %2005 = vmatpush1.bf16.msra.mxu0 %v1936
    %2006 = vmatprep.subr.bf16.mxu0 %v1940
    %2007 = vmatpush1.bf16.msra.mxu0 %v1939
    %2008 = vmatprep.subr.bf16.mxu0 0
    %2009 = vmatpush1.bf16.msra.mxu0 0
    %2010 = vmatprep.subr.bf16.mxu0 0
    %2011 = vmatpush1.bf16.msra.mxu0 0
    %2012 = vmatprep.subr.bf16.mxu0 0
    %2013 = vmatpush1.bf16.msra.mxu0 0
    %2014 = vmatprep.subr.bf16.mxu0 0
    %2015 = vmatpush1.bf16.msra.mxu0 0
    %2016 = vmatprep.subr.bf16.mxu0 0
    %2017 = vmatpush1.bf16.msra.mxu0 0
    %2018 = vmatprep.subr.bf16.mxu0 0
    %2019 = vmatpush1.bf16.msra.mxu0 0
    %2020 = vmatprep.subr.bf16.mxu0 0
    %2021 = vmatpush1.bf16.msra.mxu0 0
    %2022 = vmatprep.subr.bf16.mxu0 0
    %2023 = vmatpush1.bf16.msra.mxu0 0
    %2024 = vmatprep.subr.bf16.mxu0 0
    %2025 = vmatpush1.bf16.msra.mxu0 0
    %2026 = vmatprep.subr.bf16.mxu0 0
    %2027 = vmatpush1.bf16.msra.mxu0 0
    %2028 = vmatprep.mubr.bf16.mxu0 0
    %2029 = vmatmul.mubr.bf16.gmra.mrb[0].mxu0 %v1961
    %v2030 = vpop.f32.mrb[0].mxu0
    %v2031 = vadd.f32 0.0, %v2030
    %v2032 = vpop.f32.mrb[0].mxu0
    %v2033 = vadd.f32 0.0, %v2032
    %v2034 = vpop.f32.mrb[0].mxu0
    %v2035 = vadd.f32 0.0, %v2034
    %v2036 = vpop.f32.mrb[0].mxu0
    %v2037 = vadd.f32 0.0, %v2036
    %2038 = vmatprep.mubr.bf16.mxu0 0
    %2039 = vmatmul.mubr.bf16.gmra.mrb[0].mxu0 %v1964
    %v2040 = vpop.f32.mrb[0].mxu0
    %v2041 = vadd.f32 0.0, %v2040
    %v2042 = vpop.f32.mrb[0].mxu0
    %v2043 = vadd.f32 0.0, %v2042
    %v2044 = vpop.f32.mrb[0].mxu0
    %v2045 = vadd.f32 0.0, %v2044
    %v2046 = vpop.f32.mrb[0].mxu0
    %v2047 = vadd.f32 0.0, %v2046
    %2048 = vmatprep.mubr.bf16.mxu0 0
    %2049 = vmatmul.mubr.bf16.gmra.mrb[0].mxu0 %v1967
    %v2050 = vpop.f32.mrb[0].mxu0
    %v2051 = vadd.f32 0.0, %v2050
    %v2052 = vpop.f32.mrb[0].mxu0
    %v2053 = vadd.f32 0.0, %v2052
    %v2054 = vpop.f32.mrb[0].mxu0
    %v2055 = vadd.f32 0.0, %v2054
    %v2056 = vpop.f32.mrb[0].mxu0
    %v2057 = vadd.f32 0.0, %v2056
    %2058 = vmatprep.mubr.bf16.mxu0 0
    %2059 = vmatmul.mubr.bf16.gmra.mrb[0].mxu0 %v1970
    %v2060 = vpop.f32.mrb[0].mxu0
    %v2061 = vadd.f32 0.0, %v2060
    %v2062 = vpop.f32.mrb[0].mxu0
    %v2063 = vadd.f32 0.0, %v2062
    %v2064 = vpop.f32.mrb[0].mxu0
    %v2065 = vadd.f32 0.0, %v2064
    %v2066 = vpop.f32.mrb[0].mxu0
    %v2067 = vadd.f32 0.0, %v2066
    %2068 = vmatprep.mubr.bf16.mxu0 0
    %2069 = vmatmul.mubr.bf16.gmra.mrb[0].mxu0 %v1973
    %v2070 = vpop.f32.mrb[0].mxu0
    %v2071 = vadd.f32 0.0, %v2070
    %v2072 = vpop.f32.mrb[0].mxu0
    %v2073 = vadd.f32 0.0, %v2072
    %v2074 = vpop.f32.mrb[0].mxu0
    %v2075 = vadd.f32 0.0, %v2074
    %v2076 = vpop.f32.mrb[0].mxu0
    %v2077 = vadd.f32 0.0, %v2076
    %2078 = vmatprep.mubr.bf16.mxu0 0
    %2079 = vmatmul.mubr.bf16.gmra.mrb[0].mxu0 %v1976
    %v2080 = vpop.f32.mrb[0].mxu0
    %v2081 = vadd.f32 0.0, %v2080
    %v2082 = vpop.f32.mrb[0].mxu0
    %v2083 = vadd.f32 0.0, %v2082
    %v2084 = vpop.f32.mrb[0].mxu0
    %v2085 = vadd.f32 0.0, %v2084
    %v2086 = vpop.f32.mrb[0].mxu0
    %v2087 = vadd.f32 0.0, %v2086
    %2088 = vmatprep.mubr.bf16.mxu0 0
    %2089 = vmatmul.mubr.bf16.gmra.mrb[0].mxu0 %v1979
    %v2090 = vpop.f32.mrb[0].mxu0
    %v2091 = vadd.f32 0.0, %v2090
    %v2092 = vpop.f32.mrb[0].mxu0
    %v2093 = vadd.f32 0.0, %v2092
    %v2094 = vpop.f32.mrb[0].mxu0
    %v2095 = vadd.f32 0.0, %v2094
    %v2096 = vpop.f32.mrb[0].mxu0
    %v2097 = vadd.f32 0.0, %v2096
    %2098 = vmatprep.mubr.bf16.mxu0 0
    %2099 = vmatmul.mubr.bf16.gmra.mrb[0].mxu0 %v1982
    %v2100 = vpop.f32.mrb[0].mxu0
    %v2101 = vadd.f32 0.0, %v2100
    %v2102 = vpop.f32.mrb[0].mxu0
    %v2103 = vadd.f32 0.0, %v2102
    %v2104 = vpop.f32.mrb[0].mxu0
    %v2105 = vadd.f32 0.0, %v2104
    %v2106 = vpop.f32.mrb[0].mxu0
    %v2107 = vadd.f32 0.0, %v2106
    %2108 = vmatprep.mubr.bf16.mxu0 0
    %2109 = vmatmul.mubr.bf16.gmra.mrb[0].mxu0 %v1985
    %v2110 = vpop.f32.mrb[0].mxu0
    %v2111 = vadd.f32 0.0, %v2110
    %v2112 = vpop.f32.mrb[0].mxu0
    %v2113 = vadd.f32 0.0, %v2112
    %v2114 = vpop.f32.mrb[0].mxu0
    %v2115 = vadd.f32 0.0, %v2114
    %v2116 = vpop.f32.mrb[0].mxu0
    %v2117 = vadd.f32 0.0, %v2116
    %2118 = vmatprep.mubr.bf16.mxu0 0
    %2119 = vmatmul.mubr.bf16.gmra.mrb[0].mxu0 %v1988
    %v2120 = vpop.f32.mrb[0].mxu0
    %v2121 = vadd.f32 0.0, %v2120
    %v2122 = vpop.f32.mrb[0].mxu0
    %v2123 = vadd.f32 0.0, %v2122
    %v2124 = vpop.f32.mrb[0].mxu0
    %v2125 = vadd.f32 0.0, %v2124
    %v2126 = vpop.f32.mrb[0].mxu0
    %v2127 = vadd.f32 0.0, %v2126
    %2128 = vmatprep.mubr.bf16.mxu0 0
    %2129 = vmatmul.mubr.bf16.gmra.mrb[0].mxu0 %v1991
    %v2130 = vpop.f32.mrb[0].mxu0
    %v2131 = vadd.f32 0.0, %v2130
    %v2132 = vpop.f32.mrb[0].mxu0
    %v2133 = vadd.f32 0.0, %v2132
    %v2134 = vpop.f32.mrb[0].mxu0
    %v2135 = vadd.f32 0.0, %v2134
    %v2136 = vpop.f32.mrb[0].mxu0
    %v2137 = vadd.f32 0.0, %v2136
    %2138 = vmatprep.mubr.bf16.mxu0 0
    %2139 = vmatmul.mubr.bf16.gmra.mrb[0].mxu0 %v1994
    %v2140 = vpop.f32.mrb[0].mxu0
    %v2141 = vadd.f32 0.0, %v2140
    %v2142 = vpop.f32.mrb[0].mxu0
    %v2143 = vadd.f32 0.0, %v2142
    %v2144 = vpop.f32.mrb[0].mxu0
    %v2145 = vadd.f32 0.0, %v2144
    %v2146 = vpop.f32.mrb[0].mxu0
    %v2147 = vadd.f32 0.0, %v2146
    %2148 = vdwg.mxu0
    %2149 = vmatprep.subr.bf16.mxu0 0
    %2150 = vmatpush1.bf16.msra.mxu0 %v1926
    %2151 = vmatprep.subr.bf16.mxu0 0
    %2152 = vmatpush1.bf16.msra.mxu0 %v1929
    %2153 = vmatprep.subr.bf16.mxu0 0
    %2154 = vmatpush1.bf16.msra.mxu0 %v1932
    %2155 = vmatprep.subr.bf16.mxu0 0
    %2156 = vmatpush1.bf16.msra.mxu0 %v1935
    %2157 = vmatprep.subr.bf16.mxu0 0
    %2158 = vmatpush1.bf16.msra.mxu0 %v1938
    %2159 = vmatprep.subr.bf16.mxu0 0
    %2160 = vmatpush1.bf16.msra.mxu0 %v1941
    %2161 = vmatprep.subr.bf16.mxu0 0
    %2162 = vmatpush1.bf16.msra.mxu0 0
    %2163 = vmatprep.subr.bf16.mxu0 0
    %2164 = vmatpush1.bf16.msra.mxu0 0
    %2165 = vmatprep.subr.bf16.mxu0 0
    %2166 = vmatpush1.bf16.msra.mxu0 0
    %2167 = vmatprep.subr.bf16.mxu0 0
    %2168 = vmatpush1.bf16.msra.mxu0 0
    %2169 = vmatprep.subr.bf16.mxu0 0
    %2170 = vmatpush1.bf16.msra.mxu0 0
    %2171 = vmatprep.subr.bf16.mxu0 0
    %2172 = vmatpush1.bf16.msra.mxu0 0
    %2173 = vmatprep.subr.bf16.mxu0 0
    %2174 = vmatpush1.bf16.msra.mxu0 0
    %2175 = vmatprep.subr.bf16.mxu0 0
    %2176 = vmatpush1.bf16.msra.mxu0 0
    %2177 = vmatprep.subr.bf16.mxu0 0
    %2178 = vmatpush1.bf16.msra.mxu0 0
    %2179 = vmatprep.subr.bf16.mxu0 0
    %2180 = vmatpush1.bf16.msra.mxu0 0
    %2181 = vmatprep.mubr.bf16.mxu0 0
    %2182 = vmatmul.mubr.bf16.gmra.mrb[0].mxu0 %v1961
    %v2183 = vpop.f32.mrb[0].mxu0
    %v2184 = vadd.f32 0.0, %v2183
    %v2185 = vpop.f32.mrb[0].mxu0
    %v2186 = vpop.f32.mrb[0].mxu0
    %v2187 = vadd.f32 0.0, %v2186
    %v2188 = vpop.f32.mrb[0].mxu0
    %2189 = vmatprep.mubr.bf16.mxu0 0
    %2190 = vmatmul.mubr.bf16.gmra.mrb[0].mxu0 %v1964
    %v2191 = vpop.f32.mrb[0].mxu0
    %v2192 = vadd.f32 0.0, %v2191
    %v2193 = vpop.f32.mrb[0].mxu0
    %v2194 = vpop.f32.mrb[0].mxu0
    %v2195 = vadd.f32 0.0, %v2194
    %v2196 = vpop.f32.mrb[0].mxu0
    %2197 = vmatprep.mubr.bf16.mxu0 0
    %2198 = vmatmul.mubr.bf16.gmra.mrb[0].mxu0 %v1967
    %v2199 = vpop.f32.mrb[0].mxu0
    %v2200 = vadd.f32 0.0, %v2199
    %v2201 = vpop.f32.mrb[0].mxu0
    %v2202 = vpop.f32.mrb[0].mxu0
    %v2203 = vadd.f32 0.0, %v2202
    %v2204 = vpop.f32.mrb[0].mxu0
    %2205 = vmatprep.mubr.bf16.mxu0 0
    %2206 = vmatmul.mubr.bf16.gmra.mrb[0].mxu0 %v1970
    %v2207 = vpop.f32.mrb[0].mxu0
    %v2208 = vadd.f32 0.0, %v2207
    %v2209 = vpop.f32.mrb[0].mxu0
    %v2210 = vpop.f32.mrb[0].mxu0
    %v2211 = vadd.f32 0.0, %v2210
    %v2212 = vpop.f32.mrb[0].mxu0
    %2213 = vmatprep.mubr.bf16.mxu0 0
    %2214 = vmatmul.mubr.bf16.gmra.mrb[0].mxu0 %v1973
    %v2215 = vpop.f32.mrb[0].mxu0
    %v2216 = vadd.f32 0.0, %v2215
    %v2217 = vpop.f32.mrb[0].mxu0
    %v2218 = vpop.f32.mrb[0].mxu0
    %v2219 = vadd.f32 0.0, %v2218
    %v2220 = vpop.f32.mrb[0].mxu0
    %2221 = vmatprep.mubr.bf16.mxu0 0
    %2222 = vmatmul.mubr.bf16.gmra.mrb[0].mxu0 %v1976
    %v2223 = vpop.f32.mrb[0].mxu0
    %v2224 = vadd.f32 0.0, %v2223
    %v2225 = vpop.f32.mrb[0].mxu0
    %v2226 = vpop.f32.mrb[0].mxu0
    %v2227 = vadd.f32 0.0, %v2226
    %v2228 = vpop.f32.mrb[0].mxu0
    %2229 = vmatprep.mubr.bf16.mxu0 0
    %2230 = vmatmul.mubr.bf16.gmra.mrb[0].mxu0 %v1979
    %v2231 = vpop.f32.mrb[0].mxu0
    %v2232 = vadd.f32 0.0, %v2231
    %v2233 = vpop.f32.mrb[0].mxu0
    %v2234 = vpop.f32.mrb[0].mxu0
    %v2235 = vadd.f32 0.0, %v2234
    %v2236 = vpop.f32.mrb[0].mxu0
    %2237 = vmatprep.mubr.bf16.mxu0 0
    %2238 = vmatmul.mubr.bf16.gmra.mrb[0].mxu0 %v1982
    %v2239 = vpop.f32.mrb[0].mxu0
    %v2240 = vadd.f32 0.0, %v2239
    %v2241 = vpop.f32.mrb[0].mxu0
    %v2242 = vpop.f32.mrb[0].mxu0
    %v2243 = vadd.f32 0.0, %v2242
    %v2244 = vpop.f32.mrb[0].mxu0
    %2245 = vmatprep.mubr.bf16.mxu0 0
    %2246 = vmatmul.mubr.bf16.gmra.mrb[0].mxu0 %v1985
    %v2247 = vpop.f32.mrb[0].mxu0
    %v2248 = vadd.f32 0.0, %v2247
    %v2249 = vpop.f32.mrb[0].mxu0
    %v2250 = vpop.f32.mrb[0].mxu0
    %v2251 = vadd.f32 0.0, %v2250
    %v2252 = vpop.f32.mrb[0].mxu0
    %2253 = vmatprep.mubr.bf16.mxu0 0
    %2254 = vmatmul.mubr.bf16.gmra.mrb[0].mxu0 %v1988
    %v2255 = vpop.f32.mrb[0].mxu0
    %v2256 = vadd.f32 0.0, %v2255
    %v2257 = vpop.f32.mrb[0].mxu0
    %v2258 = vpop.f32.mrb[0].mxu0
    %v2259 = vadd.f32 0.0, %v2258
    %v2260 = vpop.f32.mrb[0].mxu0
    %2261 = vmatprep.mubr.bf16.mxu0 0
    %2262 = vmatmul.mubr.bf16.gmra.mrb[0].mxu0 %v1991
    %v2263 = vpop.f32.mrb[0].mxu0
    %v2264 = vadd.f32 0.0, %v2263
    %v2265 = vpop.f32.mrb[0].mxu0
    %v2266 = vpop.f32.mrb[0].mxu0
    %v2267 = vadd.f32 0.0, %v2266
    %v2268 = vpop.f32.mrb[0].mxu0
    %2269 = vmatprep.mubr.bf16.mxu0 0
    %2270 = vmatmul.mubr.bf16.gmra.mrb[0].mxu0 %v1994
    %v2271 = vpop.f32.mrb[0].mxu0
    %v2272 = vadd.f32 0.0, %v2271
    %v2273 = vpop.f32.mrb[0].mxu0
    %v2274 = vpop.f32.mrb[0].mxu0
    %v2275 = vadd.f32 0.0, %v2274
    %v2276 = vpop.f32.mrb[0].mxu0
    %2277 = vdwg.mxu0
    %v2302 = vunpack.c.l.b16 %v1815
    %v2303 = vunpack.c.h.b16 %v1815
    %v2304 = vunpack.c.l.b16 %v1816
    %v2305 = vunpack.c.l.b16 %v1817
    %v2306 = vunpack.c.h.b16 %v1817
    %v2307 = vunpack.c.l.b16 %v1818
    %v2308 = vunpack.c.l.b16 %v1819
    %v2309 = vunpack.c.h.b16 %v1819
    %v2310 = vunpack.c.l.b16 %v1820
    %v2311 = vunpack.c.l.b16 %v1821
    %v2312 = vunpack.c.h.b16 %v1821
    %v2313 = vunpack.c.l.b16 %v1822
    %v2314 = vunpack.c.l.b16 %v1823
    %v2315 = vunpack.c.h.b16 %v1823
    %v2316 = vunpack.c.l.b16 %v1824
    %v2317 = vunpack.c.l.b16 %v1825
    %v2318 = vunpack.c.h.b16 %v1825
    %v2319 = vunpack.c.l.b16 %v1826
    %v2320 = vunpack.c.l.b16 %v1827
    %v2321 = vunpack.c.h.b16 %v1827
    %v2322 = vunpack.c.l.b16 %v1828
    %v2323 = vunpack.c.l.b16 %v1829
    %v2324 = vunpack.c.h.b16 %v1829
    %v2325 = vunpack.c.l.b16 %v1830
    %v2326 = vunpack.c.l.b16 %v1831
    %v2327 = vunpack.c.h.b16 %v1831
    %v2328 = vunpack.c.l.b16 %v1832
    %v2329 = vunpack.c.l.b16 %v1833
    %v2330 = vunpack.c.h.b16 %v1833
    %v2331 = vunpack.c.l.b16 %v1834
    %v2332 = vunpack.c.l.b16 %v1835
    %v2333 = vunpack.c.h.b16 %v1835
    %v2334 = vunpack.c.l.b16 %v1836
    %v2335 = vunpack.c.l.b16 %v1837
    %v2336 = vunpack.c.h.b16 %v1837
    %v2337 = vunpack.c.l.b16 %v1838
    %v2338 = vpack.c.b16 %v2305, %v2302
    %v2339 = vpack.c.b16 %v2306, %v2303
    %v2340 = vpack.c.b16 %v2307, %v2304
    %v2341 = vpack.c.b16 %v2311, %v2308
    %v2342 = vpack.c.b16 %v2312, %v2309
    %v2343 = vpack.c.b16 %v2313, %v2310
    %v2344 = vpack.c.b16 %v2317, %v2314
    %v2345 = vpack.c.b16 %v2318, %v2315
    %v2346 = vpack.c.b16 %v2319, %v2316
    %v2347 = vpack.c.b16 %v2323, %v2320
    %v2348 = vpack.c.b16 %v2324, %v2321
    %v2349 = vpack.c.b16 %v2325, %v2322
    %v2350 = vpack.c.b16 %v2329, %v2326
    %v2351 = vpack.c.b16 %v2330, %v2327
    %v2352 = vpack.c.b16 %v2331, %v2328
    %v2353 = vpack.c.b16 %v2335, %v2332
    %v2354 = vpack.c.b16 %v2336, %v2333
    %v2355 = vpack.c.b16 %v2337, %v2334
    %2374 = vmatprep.subr.bf16.mxu0 %v2339
    %2375 = vmatpush1.bf16.msra.mxu0 %v2338
    %2376 = vmatprep.subr.bf16.mxu0 %v2342
    %2377 = vmatpush1.bf16.msra.mxu0 %v2341
    %2378 = vmatprep.subr.bf16.mxu0 %v2345
    %2379 = vmatpush1.bf16.msra.mxu0 %v2344
    %2380 = vmatprep.subr.bf16.mxu0 %v2348
    %2381 = vmatpush1.bf16.msra.mxu0 %v2347
    %2382 = vmatprep.subr.bf16.mxu0 %v2351
    %2383 = vmatpush1.bf16.msra.mxu0 %v2350
    %2384 = vmatprep.subr.bf16.mxu0 %v2354
    %2385 = vmatpush1.bf16.msra.mxu0 %v2353
    %2386 = vmatprep.subr.bf16.mxu0 0
    %2387 = vmatpush1.bf16.msra.mxu0 0
    %2388 = vmatprep.subr.bf16.mxu0 0
    %2389 = vmatpush1.bf16.msra.mxu0 0
    %2390 = vmatprep.subr.bf16.mxu0 0
    %2391 = vmatpush1.bf16.msra.mxu0 0
    %2392 = vmatprep.subr.bf16.mxu0 0
    %2393 = vmatpush1.bf16.msra.mxu0 0
    %2394 = vmatprep.subr.bf16.mxu0 0
    %2395 = vmatpush1.bf16.msra.mxu0 0
    %2396 = vmatprep.subr.bf16.mxu0 0
    %2397 = vmatpush1.bf16.msra.mxu0 0
    %2398 = vmatprep.subr.bf16.mxu0 0
    %2399 = vmatpush1.bf16.msra.mxu0 0
    %2400 = vmatprep.subr.bf16.mxu0 0
    %2401 = vmatpush1.bf16.msra.mxu0 0
    %2402 = vmatprep.subr.bf16.mxu0 0
    %2403 = vmatpush1.bf16.msra.mxu0 0
    %2404 = vmatprep.subr.bf16.mxu0 0
    %2405 = vmatpush1.bf16.msra.mxu0 0
    %2406 = vmatprep.mubr.bf16.mxu0 0
    %2407 = vmatmul.mubr.bf16.gmra.mrb[0].mxu0 %v1497
    %v2408 = vpop.f32.mrb[0].mxu0
    %v2409 = vadd.f32 %v2031, %v2408
    %v2410 = vpop.f32.mrb[0].mxu0
    %v2411 = vadd.f32 %v2033, %v2410
    %v2412 = vpop.f32.mrb[0].mxu0
    %v2413 = vadd.f32 %v2035, %v2412
    %v2414 = vpop.f32.mrb[0].mxu0
    %v2415 = vadd.f32 %v2037, %v2414
    %2416 = vmatprep.mubr.bf16.mxu0 0
    %2417 = vmatmul.mubr.bf16.gmra.mrb[0].mxu0 %v1500
    %v2418 = vpop.f32.mrb[0].mxu0
    %v2419 = vadd.f32 %v2041, %v2418
    %v2420 = vpop.f32.mrb[0].mxu0
    %v2421 = vadd.f32 %v2043, %v2420
    %v2422 = vpop.f32.mrb[0].mxu0
    %v2423 = vadd.f32 %v2045, %v2422
    %v2424 = vpop.f32.mrb[0].mxu0
    %v2425 = vadd.f32 %v2047, %v2424
    %2426 = vmatprep.mubr.bf16.mxu0 0
    %2427 = vmatmul.mubr.bf16.gmra.mrb[0].mxu0 %v1503
    %v2428 = vpop.f32.mrb[0].mxu0
    %v2429 = vadd.f32 %v2051, %v2428
    %v2430 = vpop.f32.mrb[0].mxu0
    %v2431 = vadd.f32 %v2053, %v2430
    %v2432 = vpop.f32.mrb[0].mxu0
    %v2433 = vadd.f32 %v2055, %v2432
    %v2434 = vpop.f32.mrb[0].mxu0
    %v2435 = vadd.f32 %v2057, %v2434
    %2436 = vmatprep.mubr.bf16.mxu0 0
    %2437 = vmatmul.mubr.bf16.gmra.mrb[0].mxu0 %v1506
    %v2438 = vpop.f32.mrb[0].mxu0
    %v2439 = vadd.f32 %v2061, %v2438
    %v2440 = vpop.f32.mrb[0].mxu0
    %v2441 = vadd.f32 %v2063, %v2440
    %v2442 = vpop.f32.mrb[0].mxu0
    %v2443 = vadd.f32 %v2065, %v2442
    %v2444 = vpop.f32.mrb[0].mxu0
    %v2445 = vadd.f32 %v2067, %v2444
    %2446 = vmatprep.mubr.bf16.mxu0 0
    %2447 = vmatmul.mubr.bf16.gmra.mrb[0].mxu0 %v1509
    %v2448 = vpop.f32.mrb[0].mxu0
    %v2449 = vadd.f32 %v2071, %v2448
    %v2450 = vpop.f32.mrb[0].mxu0
    %v2451 = vadd.f32 %v2073, %v2450
    %v2452 = vpop.f32.mrb[0].mxu0
    %v2453 = vadd.f32 %v2075, %v2452
    %v2454 = vpop.f32.mrb[0].mxu0
    %v2455 = vadd.f32 %v2077, %v2454
    %2456 = vmatprep.mubr.bf16.mxu0 0
    %2457 = vmatmul.mubr.bf16.gmra.mrb[0].mxu0 %v1512
    %v2458 = vpop.f32.mrb[0].mxu0
    %v2459 = vadd.f32 %v2081, %v2458
    %v2460 = vpop.f32.mrb[0].mxu0
    %v2461 = vadd.f32 %v2083, %v2460
    %v2462 = vpop.f32.mrb[0].mxu0
    %v2463 = vadd.f32 %v2085, %v2462
    %v2464 = vpop.f32.mrb[0].mxu0
    %v2465 = vadd.f32 %v2087, %v2464
    %2466 = vmatprep.mubr.bf16.mxu0 0
    %2467 = vmatmul.mubr.bf16.gmra.mrb[0].mxu0 %v1515
    %v2468 = vpop.f32.mrb[0].mxu0
    %v2469 = vadd.f32 %v2091, %v2468
    %v2470 = vpop.f32.mrb[0].mxu0
    %v2471 = vadd.f32 %v2093, %v2470
    %v2472 = vpop.f32.mrb[0].mxu0
    %v2473 = vadd.f32 %v2095, %v2472
    %v2474 = vpop.f32.mrb[0].mxu0
    %v2475 = vadd.f32 %v2097, %v2474
    %2476 = vmatprep.mubr.bf16.mxu0 0
    %2477 = vmatmul.mubr.bf16.gmra.mrb[0].mxu0 %v1518
    %v2478 = vpop.f32.mrb[0].mxu0
    %v2479 = vadd.f32 %v2101, %v2478
    %v2480 = vpop.f32.mrb[0].mxu0
    %v2481 = vadd.f32 %v2103, %v2480
    %v2482 = vpop.f32.mrb[0].mxu0
    %v2483 = vadd.f32 %v2105, %v2482
    %v2484 = vpop.f32.mrb[0].mxu0
    %v2485 = vadd.f32 %v2107, %v2484
    %2486 = vmatprep.mubr.bf16.mxu0 0
    %2487 = vmatmul.mubr.bf16.gmra.mrb[0].mxu0 %v1521
    %v2488 = vpop.f32.mrb[0].mxu0
    %v2489 = vadd.f32 %v2111, %v2488
    %v2490 = vpop.f32.mrb[0].mxu0
    %v2491 = vadd.f32 %v2113, %v2490
    %v2492 = vpop.f32.mrb[0].mxu0
    %v2493 = vadd.f32 %v2115, %v2492
    %v2494 = vpop.f32.mrb[0].mxu0
    %v2495 = vadd.f32 %v2117, %v2494
    %2496 = vmatprep.mubr.bf16.mxu0 0
    %2497 = vmatmul.mubr.bf16.gmra.mrb[0].mxu0 %v1524
    %v2498 = vpop.f32.mrb[0].mxu0
    %v2499 = vadd.f32 %v2121, %v2498
    %v2500 = vpop.f32.mrb[0].mxu0
    %v2501 = vadd.f32 %v2123, %v2500
    %v2502 = vpop.f32.mrb[0].mxu0
    %v2503 = vadd.f32 %v2125, %v2502
    %v2504 = vpop.f32.mrb[0].mxu0
    %v2505 = vadd.f32 %v2127, %v2504
    %2506 = vmatprep.mubr.bf16.mxu0 0
    %2507 = vmatmul.mubr.bf16.gmra.mrb[0].mxu0 %v1527
    %v2508 = vpop.f32.mrb[0].mxu0
    %v2509 = vadd.f32 %v2131, %v2508
    %v2510 = vpop.f32.mrb[0].mxu0
    %v2511 = vadd.f32 %v2133, %v2510
    %v2512 = vpop.f32.mrb[0].mxu0
    %v2513 = vadd.f32 %v2135, %v2512
    %v2514 = vpop.f32.mrb[0].mxu0
    %v2515 = vadd.f32 %v2137, %v2514
    %2516 = vmatprep.mubr.bf16.mxu0 0
    %2517 = vmatmul.mubr.bf16.gmra.mrb[0].mxu0 %v1530
    %v2518 = vpop.f32.mrb[0].mxu0
    %v2519 = vadd.f32 %v2141, %v2518
    %v2520 = vpop.f32.mrb[0].mxu0
    %v2521 = vadd.f32 %v2143, %v2520
    %v2522 = vpop.f32.mrb[0].mxu0
    %v2523 = vadd.f32 %v2145, %v2522
    %v2524 = vpop.f32.mrb[0].mxu0
    %v2525 = vadd.f32 %v2147, %v2524
    %2526 = vdwg.mxu0
    %2527 = vmatprep.subr.bf16.mxu0 0
    %2528 = vmatpush1.bf16.msra.mxu0 %v2340
    %2529 = vmatprep.subr.bf16.mxu0 0
    %2530 = vmatpush1.bf16.msra.mxu0 %v2343
    %2531 = vmatprep.subr.bf16.mxu0 0
    %2532 = vmatpush1.bf16.msra.mxu0 %v2346
    %2533 = vmatprep.subr.bf16.mxu0 0
    %2534 = vmatpush1.bf16.msra.mxu0 %v2349
    %2535 = vmatprep.subr.bf16.mxu0 0
    %2536 = vmatpush1.bf16.msra.mxu0 %v2352
    %2537 = vmatprep.subr.bf16.mxu0 0
    %2538 = vmatpush1.bf16.msra.mxu0 %v2355
    %2539 = vmatprep.subr.bf16.mxu0 0
    %2540 = vmatpush1.bf16.msra.mxu0 0
    %2541 = vmatprep.subr.bf16.mxu0 0
    %2542 = vmatpush1.bf16.msra.mxu0 0
    %2543 = vmatprep.subr.bf16.mxu0 0
    %2544 = vmatpush1.bf16.msra.mxu0 0
    %2545 = vmatprep.subr.bf16.mxu0 0
    %2546 = vmatpush1.bf16.msra.mxu0 0
    %2547 = vmatprep.subr.bf16.mxu0 0
    %2548 = vmatpush1.bf16.msra.mxu0 0
    %2549 = vmatprep.subr.bf16.mxu0 0
    %2550 = vmatpush1.bf16.msra.mxu0 0
    %2551 = vmatprep.subr.bf16.mxu0 0
    %2552 = vmatpush1.bf16.msra.mxu0 0
    %2553 = vmatprep.subr.bf16.mxu0 0
    %2554 = vmatpush1.bf16.msra.mxu0 0
    %2555 = vmatprep.subr.bf16.mxu0 0
    %2556 = vmatpush1.bf16.msra.mxu0 0
    %2557 = vmatprep.subr.bf16.mxu0 0
    %2558 = vmatpush1.bf16.msra.mxu0 0
    %2559 = vmatprep.mubr.bf16.mxu0 0
    %2560 = vmatmul.mubr.bf16.gmra.mrb[0].mxu0 %v1497
    %v2561 = vpop.f32.mrb[0].mxu0
    %v2562 = vadd.f32 %v2184, %v2561
    %v2563 = vpop.f32.mrb[0].mxu0
    %v2564 = vpop.f32.mrb[0].mxu0
    %v2565 = vadd.f32 %v2187, %v2564
    %v2566 = vpop.f32.mrb[0].mxu0
    %2567 = vmatprep.mubr.bf16.mxu0 0
    %2568 = vmatmul.mubr.bf16.gmra.mrb[0].mxu0 %v1500
    %v2569 = vpop.f32.mrb[0].mxu0
    %v2570 = vadd.f32 %v2192, %v2569
    %v2571 = vpop.f32.mrb[0].mxu0
    %v2572 = vpop.f32.mrb[0].mxu0
    %v2573 = vadd.f32 %v2195, %v2572
    %v2574 = vpop.f32.mrb[0].mxu0
    %2575 = vmatprep.mubr.bf16.mxu0 0
    %2576 = vmatmul.mubr.bf16.gmra.mrb[0].mxu0 %v1503
    %v2577 = vpop.f32.mrb[0].mxu0
    %v2578 = vadd.f32 %v2200, %v2577
    %v2579 = vpop.f32.mrb[0].mxu0
    %v2580 = vpop.f32.mrb[0].mxu0
    %v2581 = vadd.f32 %v2203, %v2580
    %v2582 = vpop.f32.mrb[0].mxu0
    %2583 = vmatprep.mubr.bf16.mxu0 0
    %2584 = vmatmul.mubr.bf16.gmra.mrb[0].mxu0 %v1506
    %v2585 = vpop.f32.mrb[0].mxu0
    %v2586 = vadd.f32 %v2208, %v2585
    %v2587 = vpop.f32.mrb[0].mxu0
    %v2588 = vpop.f32.mrb[0].mxu0
    %v2589 = vadd.f32 %v2211, %v2588
    %v2590 = vpop.f32.mrb[0].mxu0
    %2591 = vmatprep.mubr.bf16.mxu0 0
    %2592 = vmatmul.mubr.bf16.gmra.mrb[0].mxu0 %v1509
    %v2593 = vpop.f32.mrb[0].mxu0
    %v2594 = vadd.f32 %v2216, %v2593
    %v2595 = vpop.f32.mrb[0].mxu0
    %v2596 = vpop.f32.mrb[0].mxu0
    %v2597 = vadd.f32 %v2219, %v2596
    %v2598 = vpop.f32.mrb[0].mxu0
    %2599 = vmatprep.mubr.bf16.mxu0 0
    %2600 = vmatmul.mubr.bf16.gmra.mrb[0].mxu0 %v1512
    %v2601 = vpop.f32.mrb[0].mxu0
    %v2602 = vadd.f32 %v2224, %v2601
    %v2603 = vpop.f32.mrb[0].mxu0
    %v2604 = vpop.f32.mrb[0].mxu0
    %v2605 = vadd.f32 %v2227, %v2604
    %v2606 = vpop.f32.mrb[0].mxu0
    %2607 = vmatprep.mubr.bf16.mxu0 0
    %2608 = vmatmul.mubr.bf16.gmra.mrb[0].mxu0 %v1515
    %v2609 = vpop.f32.mrb[0].mxu0
    %v2610 = vadd.f32 %v2232, %v2609
    %v2611 = vpop.f32.mrb[0].mxu0
    %v2612 = vpop.f32.mrb[0].mxu0
    %v2613 = vadd.f32 %v2235, %v2612
    %v2614 = vpop.f32.mrb[0].mxu0
    %2615 = vmatprep.mubr.bf16.mxu0 0
    %2616 = vmatmul.mubr.bf16.gmra.mrb[0].mxu0 %v1518
    %v2617 = vpop.f32.mrb[0].mxu0
    %v2618 = vadd.f32 %v2240, %v2617
    %v2619 = vpop.f32.mrb[0].mxu0
    %v2620 = vpop.f32.mrb[0].mxu0
    %v2621 = vadd.f32 %v2243, %v2620
    %v2622 = vpop.f32.mrb[0].mxu0
    %2623 = vmatprep.mubr.bf16.mxu0 0
    %2624 = vmatmul.mubr.bf16.gmra.mrb[0].mxu0 %v1521
    %v2625 = vpop.f32.mrb[0].mxu0
    %v2626 = vadd.f32 %v2248, %v2625
    %v2627 = vpop.f32.mrb[0].mxu0
    %v2628 = vpop.f32.mrb[0].mxu0
    %v2629 = vadd.f32 %v2251, %v2628
    %v2630 = vpop.f32.mrb[0].mxu0
    %2631 = vmatprep.mubr.bf16.mxu0 0
    %2632 = vmatmul.mubr.bf16.gmra.mrb[0].mxu0 %v1524
    %v2633 = vpop.f32.mrb[0].mxu0
    %v2634 = vadd.f32 %v2256, %v2633
    %v2635 = vpop.f32.mrb[0].mxu0
    %v2636 = vpop.f32.mrb[0].mxu0
    %v2637 = vadd.f32 %v2259, %v2636
    %v2638 = vpop.f32.mrb[0].mxu0
    %2639 = vmatprep.mubr.bf16.mxu0 0
    %2640 = vmatmul.mubr.bf16.gmra.mrb[0].mxu0 %v1527
    %v2641 = vpop.f32.mrb[0].mxu0
    %v2642 = vadd.f32 %v2264, %v2641
    %v2643 = vpop.f32.mrb[0].mxu0
    %v2644 = vpop.f32.mrb[0].mxu0
    %v2645 = vadd.f32 %v2267, %v2644
    %v2646 = vpop.f32.mrb[0].mxu0
    %2647 = vmatprep.mubr.bf16.mxu0 0
    %2648 = vmatmul.mubr.bf16.gmra.mrb[0].mxu0 %v1530
    %v2649 = vpop.f32.mrb[0].mxu0
    %v2650 = vadd.f32 %v2272, %v2649
    %v2651 = vpop.f32.mrb[0].mxu0
    %v2652 = vpop.f32.mrb[0].mxu0
    %v2653 = vadd.f32 %v2275, %v2652
    %v2654 = vpop.f32.mrb[0].mxu0
    %2655 = vdwg.mxu0
    %v2656 = vadd.f32 %v2409, %v1388
    %v2657 = vadd.f32 %v2411, %v1392
    %v2658 = vadd.f32 %v2562, %v1396
    %v2659 = vadd.f32 %v2413, %v1388
    %v2660 = vadd.f32 %v2415, %v1392
    %v2661 = vadd.f32 %v2565, %v1396
    %v2662 = vadd.f32 %v2419, %v1388
    %v2663 = vadd.f32 %v2421, %v1392
    %v2664 = vadd.f32 %v2570, %v1396
    %v2665 = vadd.f32 %v2423, %v1388
    %v2666 = vadd.f32 %v2425, %v1392
    %v2667 = vadd.f32 %v2573, %v1396
    %v2668 = vadd.f32 %v2429, %v1388
    %v2669 = vadd.f32 %v2431, %v1392
    %v2670 = vadd.f32 %v2578, %v1396
    %v2671 = vadd.f32 %v2433, %v1388
    %v2672 = vadd.f32 %v2435, %v1392
    %v2673 = vadd.f32 %v2581, %v1396
    %v2674 = vadd.f32 %v2439, %v1388
    %v2675 = vadd.f32 %v2441, %v1392
    %v2676 = vadd.f32 %v2586, %v1396
    %v2677 = vadd.f32 %v2443, %v1388
    %v2678 = vadd.f32 %v2445, %v1392
    %v2679 = vadd.f32 %v2589, %v1396
    %v2680 = vadd.f32 %v2449, %v1388
    %v2681 = vadd.f32 %v2451, %v1392
    %v2682 = vadd.f32 %v2594, %v1396
    %v2683 = vadd.f32 %v2453, %v1388
    %v2684 = vadd.f32 %v2455, %v1392
    %v2685 = vadd.f32 %v2597, %v1396
    %v2686 = vadd.f32 %v2459, %v1388
    %v2687 = vadd.f32 %v2461, %v1392
    %v2688 = vadd.f32 %v2602, %v1396
    %v2689 = vadd.f32 %v2463, %v1388
    %v2690 = vadd.f32 %v2465, %v1392
    %v2691 = vadd.f32 %v2605, %v1396
    %v2692 = vadd.f32 %v2469, %v1388
    %v2693 = vadd.f32 %v2471, %v1392
    %v2694 = vadd.f32 %v2610, %v1396
    %v2695 = vadd.f32 %v2473, %v1388
    %v2696 = vadd.f32 %v2475, %v1392
    %v2697 = vadd.f32 %v2613, %v1396
    %v2698 = vadd.f32 %v2479, %v1388
    %v2699 = vadd.f32 %v2481, %v1392
    %v2700 = vadd.f32 %v2618, %v1396
    %v2701 = vadd.f32 %v2483, %v1388
    %v2702 = vadd.f32 %v2485, %v1392
    %v2703 = vadd.f32 %v2621, %v1396
    %v2704 = vadd.f32 %v2489, %v1388
    %v2705 = vadd.f32 %v2491, %v1392
    %v2706 = vadd.f32 %v2626, %v1396
    %v2707 = vadd.f32 %v2493, %v1388
    %v2708 = vadd.f32 %v2495, %v1392
    %v2709 = vadd.f32 %v2629, %v1396
    %v2710 = vadd.f32 %v2499, %v1388
    %v2711 = vadd.f32 %v2501, %v1392
    %v2712 = vadd.f32 %v2634, %v1396
    %v2713 = vadd.f32 %v2503, %v1388
    %v2714 = vadd.f32 %v2505, %v1392
    %v2715 = vadd.f32 %v2637, %v1396
    %v2716 = vadd.f32 %v2509, %v1388
    %v2717 = vadd.f32 %v2511, %v1392
    %v2718 = vadd.f32 %v2642, %v1396
    %v2719 = vadd.f32 %v2513, %v1388
    %v2720 = vadd.f32 %v2515, %v1392
    %v2721 = vadd.f32 %v2645, %v1396
    %v2722 = vadd.f32 %v2519, %v1388
    %v2723 = vadd.f32 %v2521, %v1392
    %v2724 = vadd.f32 %v2650, %v1396
    %v2725 = vadd.f32 %v2523, %v1388
    %v2726 = vadd.f32 %v2525, %v1392
    %v2727 = vadd.f32 %v2653, %v1396
    %2728 = vst [vmem:[%s9] sm:$0xff] %v1567
    %2729 = vst [vmem:[%s9 + $0x8] sm:$0xff] %v1569
    %2730 = vst [vmem:[%s9 + $0x10] sm:$0xff] %v1720
    %2731 = vst [vmem:[%s9 + $0x18] sm:$0xff] %v2656
    %2732 = vst [vmem:[%s9 + $0x20] sm:$0xff] %v2657
    %2733 = vst [vmem:[%s9 + $0x28] sm:$0xff] %v2658
    %2734 = vst [vmem:[%s9 + $0x30] sm:$0xff] %v1571
    %2735 = vst [vmem:[%s9 + $0x38] sm:$0xff] %v1573
    %2736 = vst [vmem:[%s9 + $0x40] sm:$0xff] %v1723
    %2737 = vst [vmem:[%s9 + $0x48] sm:$0xff] %v2659
    %2738 = vst [vmem:[%s9 + $0x50] sm:$0xff] %v2660
    %2739 = vst [vmem:[%s9 + $0x58] sm:$0xff] %v2661
    %2740 = vst [vmem:[%s9 + $0x60] sm:$0xff] %v1577
    %2741 = vst [vmem:[%s9 + $0x68] sm:$0xff] %v1579
    %2742 = vst [vmem:[%s9 + $0x70] sm:$0xff] %v1728
    %2743 = vst [vmem:[%s9 + $0x78] sm:$0xff] %v2662
    %2744 = vst [vmem:[%s9 + $0x80] sm:$0xff] %v2663
    %2745 = vst [vmem:[%s9 + $0x88] sm:$0xff] %v2664
    %2746 = vst [vmem:[%s9 + $0x90] sm:$0xff] %v1581
    %2747 = vst [vmem:[%s9 + $0x98] sm:$0xff] %v1583
    %2748 = vst [vmem:[%s9 + $0xa0] sm:$0xff] %v1731
    %2749 = vst [vmem:[%s9 + $0xa8] sm:$0xff] %v2665
    %2750 = vst [vmem:[%s9 + $0xb0] sm:$0xff] %v2666
    %2751 = vst [vmem:[%s9 + $0xb8] sm:$0xff] %v2667
    %2752 = vst [vmem:[%s9 + $0xc0] sm:$0xff] %v1587
    %2753 = vst [vmem:[%s9 + $0xc8] sm:$0xff] %v1589
    %2754 = vst [vmem:[%s9 + $0xd0] sm:$0xff] %v1736
    %2755 = vst [vmem:[%s9 + $0xd8] sm:$0xff] %v2668
    %2756 = vst [vmem:[%s9 + $0xe0] sm:$0xff] %v2669
    %2757 = vst [vmem:[%s9 + $0xe8] sm:$0xff] %v2670
    %2758 = vst [vmem:[%s9 + $0xf0] sm:$0xff] %v1591
    %2759 = vst [vmem:[%s9 + $0xf8] sm:$0xff] %v1593
    %2760 = vst [vmem:[%s9 + $0x100] sm:$0xff] %v1739
    %2761 = vst [vmem:[%s9 + $0x108] sm:$0xff] %v2671
    %2762 = vst [vmem:[%s9 + $0x110] sm:$0xff] %v2672
    %2763 = vst [vmem:[%s9 + $0x118] sm:$0xff] %v2673
    %2764 = vst [vmem:[%s9 + $0x120] sm:$0xff] %v1597
    %2765 = vst [vmem:[%s9 + $0x128] sm:$0xff] %v1599
    %2766 = vst [vmem:[%s9 + $0x130] sm:$0xff] %v1744
    %2767 = vst [vmem:[%s9 + $0x138] sm:$0xff] %v2674
    %2768 = vst [vmem:[%s9 + $0x140] sm:$0xff] %v2675
    %2769 = vst [vmem:[%s9 + $0x148] sm:$0xff] %v2676
    %2770 = vst [vmem:[%s9 + $0x150] sm:$0xff] %v1601
    %2771 = vst [vmem:[%s9 + $0x158] sm:$0xff] %v1603
    %2772 = vst [vmem:[%s9 + $0x160] sm:$0xff] %v1747
    %2773 = vst [vmem:[%s9 + $0x168] sm:$0xff] %v2677
    %2774 = vst [vmem:[%s9 + $0x170] sm:$0xff] %v2678
    %2775 = vst [vmem:[%s9 + $0x178] sm:$0xff] %v2679
    %2776 = vst [vmem:[%s9 + $0x180] sm:$0xff] %v1607
    %2777 = vst [vmem:[%s9 + $0x188] sm:$0xff] %v1609
    %2778 = vst [vmem:[%s9 + $0x190] sm:$0xff] %v1752
    %2779 = vst [vmem:[%s9 + $0x198] sm:$0xff] %v2680
    %2780 = vst [vmem:[%s9 + $0x1a0] sm:$0xff] %v2681
    %2781 = vst [vmem:[%s9 + $0x1a8] sm:$0xff] %v2682
    %2782 = vst [vmem:[%s9 + $0x1b0] sm:$0xff] %v1611
    %2783 = vst [vmem:[%s9 + $0x1b8] sm:$0xff] %v1613
    %2784 = vst [vmem:[%s9 + $0x1c0] sm:$0xff] %v1755
    %2785 = vst [vmem:[%s9 + $0x1c8] sm:$0xff] %v2683
    %2786 = vst [vmem:[%s9 + $0x1d0] sm:$0xff] %v2684
    %2787 = vst [vmem:[%s9 + $0x1d8] sm:$0xff] %v2685
    %2788 = vst [vmem:[%s9 + $0x1e0] sm:$0xff] %v1617
    %2789 = vst [vmem:[%s9 + $0x1e8] sm:$0xff] %v1619
    %2790 = vst [vmem:[%s9 + $0x1f0] sm:$0xff] %v1760
    %2791 = vst [vmem:[%s9 + $0x1f8] sm:$0xff] %v2686
    %2792 = vst [vmem:[%s9 + $0x200] sm:$0xff] %v2687
    %2793 = vst [vmem:[%s9 + $0x208] sm:$0xff] %v2688
    %2794 = vst [vmem:[%s9 + $0x210] sm:$0xff] %v1621
    %2795 = vst [vmem:[%s9 + $0x218] sm:$0xff] %v1623
    %2796 = vst [vmem:[%s9 + $0x220] sm:$0xff] %v1763
    %2797 = vst [vmem:[%s9 + $0x228] sm:$0xff] %v2689
    %2798 = vst [vmem:[%s9 + $0x230] sm:$0xff] %v2690
    %2799 = vst [vmem:[%s9 + $0x238] sm:$0xff] %v2691
    %2800 = vst [vmem:[%s9 + $0x240] sm:$0xff] %v1627
    %2801 = vst [vmem:[%s9 + $0x248] sm:$0xff] %v1629
    %2802 = vst [vmem:[%s9 + $0x250] sm:$0xff] %v1768
    %2803 = vst [vmem:[%s9 + $0x258] sm:$0xff] %v2692
    %2804 = vst [vmem:[%s9 + $0x260] sm:$0xff] %v2693
    %2805 = vst [vmem:[%s9 + $0x268] sm:$0xff] %v2694
    %2806 = vst [vmem:[%s9 + $0x270] sm:$0xff] %v1631
    %2807 = vst [vmem:[%s9 + $0x278] sm:$0xff] %v1633
    %2808 = vst [vmem:[%s9 + $0x280] sm:$0xff] %v1771
    %2809 = vst [vmem:[%s9 + $0x288] sm:$0xff] %v2695
    %2810 = vst [vmem:[%s9 + $0x290] sm:$0xff] %v2696
    %2811 = vst [vmem:[%s9 + $0x298] sm:$0xff] %v2697
    %2812 = vst [vmem:[%s9 + $0x2a0] sm:$0xff] %v1637
    %2813 = vst [vmem:[%s9 + $0x2a8] sm:$0xff] %v1639
    %2814 = vst [vmem:[%s9 + $0x2b0] sm:$0xff] %v1776
    %2815 = vst [vmem:[%s9 + $0x2b8] sm:$0xff] %v2698
    %2816 = vst [vmem:[%s9 + $0x2c0] sm:$0xff] %v2699
    %2817 = vst [vmem:[%s9 + $0x2c8] sm:$0xff] %v2700
    %2818 = vst [vmem:[%s9 + $0x2d0] sm:$0xff] %v1641
    %2819 = vst [vmem:[%s9 + $0x2d8] sm:$0xff] %v1643
    %2820 = vst [vmem:[%s9 + $0x2e0] sm:$0xff] %v1779
    %2821 = vst [vmem:[%s9 + $0x2e8] sm:$0xff] %v2701
    %2822 = vst [vmem:[%s9 + $0x2f0] sm:$0xff] %v2702
    %2823 = vst [vmem:[%s9 + $0x2f8] sm:$0xff] %v2703
    %2824 = vst [vmem:[%s9 + $0x300] sm:$0xff] %v1647
    %2825 = vst [vmem:[%s9 + $0x308] sm:$0xff] %v1649
    %2826 = vst [vmem:[%s9 + $0x310] sm:$0xff] %v1784
    %2827 = vst [vmem:[%s9 + $0x318] sm:$0xff] %v2704
    %2828 = vst [vmem:[%s9 + $0x320] sm:$0xff] %v2705
    %2829 = vst [vmem:[%s9 + $0x328] sm:$0xff] %v2706
    %2830 = vst [vmem:[%s9 + $0x330] sm:$0xff] %v1651
    %2831 = vst [vmem:[%s9 + $0x338] sm:$0xff] %v1653
    %2832 = vst [vmem:[%s9 + $0x340] sm:$0xff] %v1787
    %2833 = vst [vmem:[%s9 + $0x348] sm:$0xff] %v2707
    %2834 = vst [vmem:[%s9 + $0x350] sm:$0xff] %v2708
    %2835 = vst [vmem:[%s9 + $0x358] sm:$0xff] %v2709
    %2836 = vst [vmem:[%s9 + $0x360] sm:$0xff] %v1657
    %2837 = vst [vmem:[%s9 + $0x368] sm:$0xff] %v1659
    %2838 = vst [vmem:[%s9 + $0x370] sm:$0xff] %v1792
    %2839 = vst [vmem:[%s9 + $0x378] sm:$0xff] %v2710
    %2840 = vst [vmem:[%s9 + $0x380] sm:$0xff] %v2711
    %2841 = vst [vmem:[%s9 + $0x388] sm:$0xff] %v2712
    %2842 = vst [vmem:[%s9 + $0x390] sm:$0xff] %v1661
    %2843 = vst [vmem:[%s9 + $0x398] sm:$0xff] %v1663
    %2844 = vst [vmem:[%s9 + $0x3a0] sm:$0xff] %v1795
    %2845 = vst [vmem:[%s9 + $0x3a8] sm:$0xff] %v2713
    %2846 = vst [vmem:[%s9 + $0x3b0] sm:$0xff] %v2714
    %2847 = vst [vmem:[%s9 + $0x3b8] sm:$0xff] %v2715
    %2848 = vst [vmem:[%s9 + $0x3c0] sm:$0xff] %v1667
    %2849 = vst [vmem:[%s9 + $0x3c8] sm:$0xff] %v1669
    %2850 = vst [vmem:[%s9 + $0x3d0] sm:$0xff] %v1800
    %2851 = vst [vmem:[%s9 + $0x3d8] sm:$0xff] %v2716
    %2852 = vst [vmem:[%s9 + $0x3e0] sm:$0xff] %v2717
    %2853 = vst [vmem:[%s9 + $0x3e8] sm:$0xff] %v2718
    %2854 = vst [vmem:[%s9 + $0x3f0] sm:$0xff] %v1671
    %2855 = vst [vmem:[%s9 + $0x3f8] sm:$0xff] %v1673
    %2856 = vst [vmem:[%s9 + $0x400] sm:$0xff] %v1803
    %2857 = vst [vmem:[%s9 + $0x408] sm:$0xff] %v2719
    %2858 = vst [vmem:[%s9 + $0x410] sm:$0xff] %v2720
    %2859 = vst [vmem:[%s9 + $0x418] sm:$0xff] %v2721
    %2860 = vst [vmem:[%s9 + $0x420] sm:$0xff] %v1677
    %2861 = vst [vmem:[%s9 + $0x428] sm:$0xff] %v1679
    %2862 = vst [vmem:[%s9 + $0x430] sm:$0xff] %v1808
    %2863 = vst [vmem:[%s9 + $0x438] sm:$0xff] %v2722
    %2864 = vst [vmem:[%s9 + $0x440] sm:$0xff] %v2723
    %2865 = vst [vmem:[%s9 + $0x448] sm:$0xff] %v2724
    %2866 = vst [vmem:[%s9 + $0x450] sm:$0xff] %v1681
    %2867 = vst [vmem:[%s9 + $0x458] sm:$0xff] %v1683
    %2868 = vst [vmem:[%s9 + $0x460] sm:$0xff] %v1811
    %2869 = vst [vmem:[%s9 + $0x468] sm:$0xff] %v2725
    %2870 = vst [vmem:[%s9 + $0x470] sm:$0xff] %v2726
    %2871 = vst [vmem:[%s9 + $0x478] sm:$0xff] %v2727
    // Predicated region
    $region70: #{decoder_forward.1} parent=1 // pred_check
      _
    $region71: #{decoder_forward.1} parent=1 // pred_check_branch
      %2873 = sbr.rel (0) target = $region73
    $region72: #{decoder_forward.1} parent=1 // pred_region
      _
    $region73: #{decoder_forward.1} parent=1 // pred_fallthru
      _
    // Predicated region
    $region74: #{decoder_forward.1} parent=1 // pred_check
      _
    $region75: #{decoder_forward.1} parent=1 // pred_check_branch
      %2875 = sbr.rel (0) target = $region77
    $region76: #{decoder_forward.1} parent=1 // pred_region
      _
    $region77: #{decoder_forward.1} parent=1 // pred_fallthru
      _
    %2876 = vsyncpa [#allocation3], 1
    %2877 = vsyncpa [#allocation5], 1
    %2878 = vsyncpa [#allocation8], 1
    %2879 = vsyncpa [#allocation11], 1
    %2880 = vsyncpa [#allocation14], 1

</llo_original>
